<compile_context>
chip_gen: v7x
topology: tpu7x:2x2x1
jax: 0.10.0
libtpu: 0.0.40
codegen_flags: <defaults>
</compile_context>

<pallas_src>
import functools
import math

import jax
import jax.numpy as jnp
import numpy as np
from jax import lax
from jax.experimental import pallas as pl
from jax.experimental.pallas import tpu as pltpu


def _cdiv(a, b):
    return (a + b - 1) // b


def _ln(z, g, b, eps=1e-5):
    mu = jnp.mean(z, axis=-1, keepdims=True)
    var = jnp.mean((z - mu) ** 2, axis=-1, keepdims=True)
    return (z - mu) * lax.rsqrt(var + eps) * g + b


# ----------------------------- Pallas kernel ------------------------------ #

def resampler_kernel(x_ref, lat_ref,
                     g1_ref, b1_ref, g2_ref, b2_ref, gff_ref, bff_ref,
                     wq_ref, bq_ref, wk_ref, bk_ref, wv_ref, bv_ref,
                     wo_ref, bo_ref, wfc_ref, bfc_ref, wpj_ref, bpj_ref,
                     out_ref, *, n_heads, params_resident):
    bt, S, D = x_ref.shape
    L = out_ref.shape[1]
    H = n_heads
    dh = D // H
    T = L + S
    cd = wq_ref.dtype                      # compute (MXU) dtype, usually bf16

    # Layer index into the resident parameter stacks (or 0 for per-layer blocks).
    li = pl.program_id(1) if params_resident else 0

    # Layer 0: load the (broadcast) initial latents into the resident output
    # block; it stays in VMEM across all layer iterations of this batch tile.
    @pl.when(pl.program_id(1) == 0)
    def _():
        out_ref[...] = lat_ref[...]

    # NOTE: (bt, L, D) <-> (bt*L, D) reshapes are layout-free when L, S are
    # multiples of 8 (f32 sublane); otherwise they are small VMEM copies.
    lat = out_ref[...].reshape(bt * L, D)                       # f32, resident
    x32 = x_ref[...].astype(jnp.float32).reshape(bt * S, D)

    q_in = _ln(lat, g1_ref[li], b1_ref[li])                     # ln_1(latents)
    x_ln = _ln(x32, g2_ref[li], b2_ref[li])                     # ln_2(x)

    # kv = concat([ln_1(latents), ln_2(x)]) along each batch element's seq axis.
    kv = jnp.concatenate([q_in.reshape(bt, L, D),
                          x_ln.reshape(bt, S, D)], axis=1).reshape(bt * T, D)

    # ---- full-width projections (softmax scale pre-folded into Wq / bq) ----
    q = jnp.dot(q_in.astype(cd), wq_ref[li],
                preferred_element_type=jnp.float32) + bq_ref[li]
    k = jnp.dot(kv.astype(cd), wk_ref[li],
                preferred_element_type=jnp.float32) + bk_ref[li]
    v = jnp.dot(kv.astype(cd), wv_ref[li],
                preferred_element_type=jnp.float32) + bv_ref[li]
    q = q.astype(cd)
    k = k.astype(cd)
    v = v.astype(cd)

    # ---- per-head attention core (scores / softmax / PV are inherently dh-wide)
    heads = []
    for h in range(H):                                          # static unroll
        sl = slice(h * dh, (h + 1) * dh)
        q_h = q[:, sl].reshape(bt, L, dh)
        k_h = k[:, sl].reshape(bt, T, dh)
        v_h = v[:, sl].reshape(bt, T, dh)

        s = jnp.einsum('blk,btk->blt', q_h, k_h,
                       preferred_element_type=jnp.float32)      # (bt, L, T)
        m = jnp.max(s, axis=-1, keepdims=True)
        e = jnp.exp(s - m)
        inv = pl.reciprocal(jnp.sum(e, axis=-1, keepdims=True), approx=True)
        p = (e * inv).astype(cd)
        o_h = jnp.einsum('blt,btk->blk', p, v_h,
                         preferred_element_type=jnp.float32)    # (bt, L, dh)
        heads.append(o_h.reshape(bt * L, dh))

    # ---- single full-width head-merge / output projection ----
    o_cat = jnp.concatenate(heads, axis=-1).astype(cd)          # (bt*L, D)
    attn = jnp.dot(o_cat, wo_ref[li],
                   preferred_element_type=jnp.float32) + bo_ref[li]
    lat = lat + attn                                            # residual 1

    # ---- MLP: c_fc -> squared ReLU -> c_proj ----
    ff = _ln(lat, gff_ref[li], bff_ref[li]).astype(cd)
    h1 = jnp.dot(ff, wfc_ref[li],
                 preferred_element_type=jnp.float32) + bfc_ref[li]
    h1 = jnp.maximum(h1, 0.0)
    h1 = (h1 * h1).astype(cd)
    mlp = jnp.dot(h1, wpj_ref[li],
                  preferred_element_type=jnp.float32) + bpj_ref[li]

    out_ref[...] = (lat + mlp).reshape(bt, L, D)                # residual 2


# --------------------- host-side parameter packing ------------------------ #

def pack_params(raw_layers, n_heads, compute_dtype=jnp.bfloat16):
    """Stack per-layer PyTorch-style params along a leading layer axis.
    Matmul weights are pre-transposed (x @ W) and cast to the compute dtype;
    the 1/sqrt(dh) softmax scale is folded into Wq / bq. Biases and LN params
    stay f32 (they feed f32 VPU work)."""
    D = raw_layers[0]["out_w"].shape[0]
    dh = D // n_heads
    scale = 1.0 / math.sqrt(dh)

    def one(p):
        wq = p["in_w"][:D].T * scale
        wk = p["in_w"][D:2 * D].T
        wv = p["in_w"][2 * D:].T
        return dict(
            g1=p["g1"].reshape(1, D), b1=p["b1"].reshape(1, D),
            g2=p["g2"].reshape(1, D), b2=p["b2"].reshape(1, D),
            gff=p["gff"].reshape(1, D), bff=p["bff"].reshape(1, D),
            wq=wq.astype(compute_dtype),
            bq=(p["in_b"][:D] * scale).reshape(1, D),
            wk=wk.astype(compute_dtype), bk=p["in_b"][D:2 * D].reshape(1, D),
            wv=wv.astype(compute_dtype), bv=p["in_b"][2 * D:].reshape(1, D),
            wo=p["out_w"].T.astype(compute_dtype), bo=p["out_b"].reshape(1, D),
            wfc=p["fc_w"].T.astype(compute_dtype), bfc=p["fc_b"].reshape(1, 4 * D),
            wpj=p["pj_w"].T.astype(compute_dtype), bpj=p["pj_b"].reshape(1, D),
        )

    per_layer = [one(p) for p in raw_layers]
    return {k: jnp.stack([lp[k] for lp in per_layer], axis=0)
            for k in per_layer[0]}


_PARAM_ORDER = ["g1", "b1", "g2", "b2", "gff", "bff",
                "wq", "bq", "wk", "bk", "wv", "bv",
                "wo", "bo", "wfc", "bfc", "wpj", "bpj"]


# ------------------------------- wrapper ----------------------------------- #

def perceiver_resampler(x_f_sbd, latents_ld, raw_layer_params, n_heads,
                        compute_dtype=jnp.bfloat16):
    """x_f_sbd: (S, B, D) seq-first (PyTorch convention); returns (L, B, D)."""
    S, B, D = x_f_sbd.shape
    L = latents_ld.shape[0]
    NL = len(raw_layer_params)
    assert D % n_heads == 0

    packed = pack_params(raw_layer_params, n_heads, compute_dtype)
    param_arrays = [packed[k] for k in _PARAM_ORDER]

    # Batch tile: target bt*L ~ 256 matmul rows (256-wide MXU on v6e/v7x,
    # harmless on v5e), capped by the actual batch. No 2-TC halving here.
    bt = max(1, min(B, 256 // max(L, 1)))
    b_pad = _cdiv(B, bt) * bt
    nb = b_pad // bt

    x_bsd = jnp.transpose(x_f_sbd, (1, 0, 2)).astype(compute_dtype)   # (B, S, D)
    if b_pad != B:
        x_bsd = jnp.pad(x_bsd, ((0, b_pad - B), (0, 0), (0, 0)))
    lat_b = jnp.broadcast_to(latents_ld[None].astype(jnp.float32), (b_pad, L, D))

    def batch_map(b, l):
        return (b, 0, 0)

    # Weight residency: if all packed params fit comfortably in VMEM, give them
    # full-array BlockSpecs with a constant index_map -> DMA'd once for the
    # whole kernel (no per-(b, l) re-fetch). Otherwise fall back to per-layer
    # blocks (re-fetched per grid step, still correct).
    param_bytes = sum(int(np.prod(a.shape)) * a.dtype.itemsize
                      for a in param_arrays)
    params_resident = param_bytes <= 12 * 1024 * 1024

    def param_spec(arr):
        if params_resident:
            return pl.BlockSpec(arr.shape,
                                lambda b, l, _nd=arr.ndim: (0,) * _nd)
        blk = (1,) + arr.shape[1:]
        zeros = (0,) * (arr.ndim - 1)
        return pl.BlockSpec(blk, lambda b, l, _z=zeros: (l,) + _z)

    in_specs = [pl.BlockSpec((bt, S, D), batch_map),
                pl.BlockSpec((bt, L, D), batch_map)]
    in_specs += [param_spec(a) for a in param_arrays]

    # Advisory cost estimate so XLA schedules the surrounding transpose/pad well.
    T = L + S
    flops = 2 * NL * b_pad * (L * D * D            # Q
                              + 2 * T * D * D      # K, V
                              + 2 * L * T * D      # scores + PV (all heads)
                              + L * D * D          # out proj
                              + 8 * L * D * D)     # MLP (D -> 4D -> D)
    ce = pl.CostEstimate(
        flops=int(flops),
        transcendentals=int(NL * b_pad * n_heads * L * T),
        bytes_accessed=int(param_bytes + x_bsd.nbytes + lat_b.nbytes
                           + b_pad * L * D * 4))

    out = pl.pallas_call(
        functools.partial(resampler_kernel, n_heads=n_heads,
                          params_resident=params_resident),
        grid=(nb, NL),
        in_specs=in_specs,
        out_specs=pl.BlockSpec((bt, L, D), batch_map),
        out_shape=jax.ShapeDtypeStruct((b_pad, L, D), jnp.float32),
        compiler_params=pltpu.CompilerParams(
            dimension_semantics=("parallel", "arbitrary"),
            vmem_limit_bytes=48 * 1024 * 1024),
        cost_estimate=ce,
    )(x_bsd, lat_b, *param_arrays)

    return jnp.transpose(out[:B], (1, 0, 2))                    # (L, B, D)


# --------------------------- parameter creation ---------------------------- #

def init_block_params(key, D):
    ks = jax.random.split(key, 11)
    s = 0.02
    p = dict(
        in_w=s * jax.random.normal(ks[0], (3 * D, D), jnp.float32),
        in_b=s * jax.random.normal(ks[1], (3 * D,), jnp.float32),
        out_w=s * jax.random.normal(ks[2], (D, D), jnp.float32),
        out_b=s * jax.random.normal(ks[3], (D,), jnp.float32),
        fc_w=s * jax.random.normal(ks[4], (4 * D, D), jnp.float32),
        fc_b=s * jax.random.normal(ks[5], (4 * D,), jnp.float32),
        pj_w=s * jax.random.normal(ks[6], (D, 4 * D), jnp.float32),
        pj_b=s * jax.random.normal(ks[7], (D,), jnp.float32),
    )

    def ln(k):
        k1, k2 = jax.random.split(k)
        return (1.0 + 0.1 * jax.random.normal(k1, (D,), jnp.float32),
                0.1 * jax.random.normal(k2, (D,), jnp.float32))

    p["g1"], p["b1"] = ln(ks[8])
    p["g2"], p["b2"] = ln(ks[9])
    p["gff"], p["bff"] = ln(ks[10])
    return p


# --------------------------- pure-JAX reference ----------------------------- #

def _ref_block(x_sd, lat_ld, p, n_heads):
    D = lat_ld.shape[-1]
    dh = D // n_heads
    q_in = _ln(lat_ld, p["g1"], p["b1"])
    x_ln = _ln(x_sd, p["g2"], p["b2"])
    kv = jnp.concatenate([q_in, x_ln], axis=0)
    q = q_in @ p["in_w"][:D].T + p["in_b"][:D]
    k = kv @ p["in_w"][D:2 * D].T + p["in_b"][D:2 * D]
    v = kv @ p["in_w"][2 * D:].T + p["in_b"][2 * D:]
    outs = []
    for h in range(n_heads):
        sl = slice(h * dh, (h + 1) * dh)
        s = (q[:, sl] / math.sqrt(dh)) @ k[:, sl].T
        outs.append(jax.nn.softmax(s, axis=-1) @ v[:, sl])
    attn = jnp.concatenate(outs, axis=-1) @ p["out_w"].T + p["out_b"]
    lat = lat_ld + attn
    ff = _ln(lat, p["gff"], p["bff"])
    h1 = jnp.maximum(ff @ p["fc_w"].T + p["fc_b"], 0.0) ** 2
    return lat + h1 @ p["pj_w"].T + p["pj_b"]


def perceiver_resampler_ref(x_f_sbd, latents_ld, raw_layers, n_heads):
    B = x_f_sbd.shape[1]
    x_bsd = jnp.transpose(x_f_sbd, (1, 0, 2))
    lat = jnp.broadcast_to(latents_ld[None], (B,) + latents_ld.shape)
    for p in raw_layers:
        lat = jax.vmap(lambda xb, lb: _ref_block(xb, lb, p, n_heads))(x_bsd, lat)
    return jnp.transpose(lat, (1, 0, 2))


# ---------------------------------- main ----------------------------------- #

if __name__ == "__main__":
    width, layers, heads, num_latents = 32, 2, 4, 8
    seq, batch = 8, 4

    root = jax.random.PRNGKey(0)
    k_lat, k_x, k_layers = jax.random.split(root, 3)

    latents = (width ** -0.5) * jax.random.normal(k_lat, (num_latents, width), jnp.float32)
    x_f = jax.random.normal(k_x, (seq, batch, width), jnp.float32)   # (S, B, D)

    raw_layers = [init_block_params(k, width)
                  for k in jax.random.split(k_layers, layers)]

    out = jax.block_until_ready(perceiver_resampler(x_f, latents, raw_layers, heads))
    ref = jax.block_until_ready(perceiver_resampler_ref(x_f, latents, raw_layers, heads))

    assert out.shape == (num_latents, batch, width)
    # tolerance absorbs bf16 matmul inputs + approx-reciprocal softmax
    np.testing.assert_allclose(np.asarray(out), np.asarray(ref),
                               rtol=2e-2, atol=2e-3)
    print("KERNEL_OK")
</pallas_src>

<mosaic_0001>
module attributes {stable_mosaic.version = 11 : i64} {
  func.func @resampler_kernel(%arg0: i32, %arg1: i32, %arg2: memref<4x8x32xbf16, #tpu.memory_space<vmem>>, %arg3: memref<4x8x32xf32, #tpu.memory_space<vmem>>, %arg4: memref<2x1x32xf32, #tpu.memory_space<vmem>>, %arg5: memref<2x1x32xf32, #tpu.memory_space<vmem>>, %arg6: memref<2x1x32xf32, #tpu.memory_space<vmem>>, %arg7: memref<2x1x32xf32, #tpu.memory_space<vmem>>, %arg8: memref<2x1x32xf32, #tpu.memory_space<vmem>>, %arg9: memref<2x1x32xf32, #tpu.memory_space<vmem>>, %arg10: memref<2x32x32xbf16, #tpu.memory_space<vmem>>, %arg11: memref<2x1x32xf32, #tpu.memory_space<vmem>>, %arg12: memref<2x32x32xbf16, #tpu.memory_space<vmem>>, %arg13: memref<2x1x32xf32, #tpu.memory_space<vmem>>, %arg14: memref<2x32x32xbf16, #tpu.memory_space<vmem>>, %arg15: memref<2x1x32xf32, #tpu.memory_space<vmem>>, %arg16: memref<2x32x32xbf16, #tpu.memory_space<vmem>>, %arg17: memref<2x1x32xf32, #tpu.memory_space<vmem>>, %arg18: memref<2x32x128xbf16, #tpu.memory_space<vmem>>, %arg19: memref<2x1x128xf32, #tpu.memory_space<vmem>>, %arg20: memref<2x128x32xbf16, #tpu.memory_space<vmem>>, %arg21: memref<2x1x32xf32, #tpu.memory_space<vmem>>, %arg22: memref<4x8x32xf32, #tpu.memory_space<vmem>>) attributes {dimension_semantics = [#tpu.dimension_semantics<parallel>, #tpu.dimension_semantics<arbitrary>], iteration_bounds = array<i64: 1, 2>, scalar_prefetch = 0 : i64, scratch_operands = 0 : i64, tpu.core_type = #tpu.core_type<tc>, window_params = [{transform_indices = @transform_0, window_bounds = array<i64: 4, 8, 32>}, {transform_indices = @transform_1, window_bounds = array<i64: 4, 8, 32>}, {pipeline_mode = #tpu.pipeline_mode<synchronous>, transform_indices = @transform_2, window_bounds = array<i64: 2, 1, 32>}, {pipeline_mode = #tpu.pipeline_mode<synchronous>, transform_indices = @transform_3, window_bounds = array<i64: 2, 1, 32>}, {pipeline_mode = #tpu.pipeline_mode<synchronous>, transform_indices = @transform_4, window_bounds = array<i64: 2, 1, 32>}, {pipeline_mode = #tpu.pipeline_mode<synchronous>, transform_indices = @transform_5, window_bounds = array<i64: 2, 1, 32>}, {pipeline_mode = #tpu.pipeline_mode<synchronous>, transform_indices = @transform_6, window_bounds = array<i64: 2, 1, 32>}, {pipeline_mode = #tpu.pipeline_mode<synchronous>, transform_indices = @transform_7, window_bounds = array<i64: 2, 1, 32>}, {pipeline_mode = #tpu.pipeline_mode<synchronous>, transform_indices = @transform_8, window_bounds = array<i64: 2, 32, 32>}, {pipeline_mode = #tpu.pipeline_mode<synchronous>, transform_indices = @transform_9, window_bounds = array<i64: 2, 1, 32>}, {pipeline_mode = #tpu.pipeline_mode<synchronous>, transform_indices = @transform_10, window_bounds = array<i64: 2, 32, 32>}, {pipeline_mode = #tpu.pipeline_mode<synchronous>, transform_indices = @transform_11, window_bounds = array<i64: 2, 1, 32>}, {pipeline_mode = #tpu.pipeline_mode<synchronous>, transform_indices = @transform_12, window_bounds = array<i64: 2, 32, 32>}, {pipeline_mode = #tpu.pipeline_mode<synchronous>, transform_indices = @transform_13, window_bounds = array<i64: 2, 1, 32>}, {pipeline_mode = #tpu.pipeline_mode<synchronous>, transform_indices = @transform_14, window_bounds = array<i64: 2, 32, 32>}, {pipeline_mode = #tpu.pipeline_mode<synchronous>, transform_indices = @transform_15, window_bounds = array<i64: 2, 1, 32>}, {pipeline_mode = #tpu.pipeline_mode<synchronous>, transform_indices = @transform_16, window_bounds = array<i64: 2, 32, 128>}, {pipeline_mode = #tpu.pipeline_mode<synchronous>, transform_indices = @transform_17, window_bounds = array<i64: 2, 1, 128>}, {pipeline_mode = #tpu.pipeline_mode<synchronous>, transform_indices = @transform_18, window_bounds = array<i64: 2, 128, 32>}, {pipeline_mode = #tpu.pipeline_mode<synchronous>, transform_indices = @transform_19, window_bounds = array<i64: 2, 1, 32>}, {transform_indices = @transform_20, window_bounds = array<i64: 4, 8, 32>}]} {
    %c0_i32 = arith.constant 0 : i32
    %0 = arith.cmpi eq, %arg1, %c0_i32 : i32
    %1 = arith.extui %0 : i1 to i32
    %c0_i32_0 = arith.constant 0 : i32
    %2 = arith.cmpi ne, %1, %c0_i32_0 : i32
    scf.if %2 {
      %c0_82 = arith.constant 0 : index
      %c0_83 = arith.constant 0 : index
      %c0_84 = arith.constant 0 : index
      %247 = vector.load %arg3[%c0_82, %c0_83, %c0_84] : memref<4x8x32xf32, #tpu.memory_space<vmem>>, vector<4x8x32xf32>
      %c0_85 = arith.constant 0 : index
      %c0_86 = arith.constant 0 : index
      %c0_87 = arith.constant 0 : index
      %248 = vector.load %arg22[%c0_85, %c0_86, %c0_87] : memref<4x8x32xf32, #tpu.memory_space<vmem>>, vector<4x8x32xf32>
      tpu.vector_store %arg22[%c0_85, %c0_86, %c0_87], %247 {strides = array<i32>} : memref<4x8x32xf32, #tpu.memory_space<vmem>>, vector<4x8x32xf32>,
    } else {
    }
    %c0 = arith.constant 0 : index
    %c0_1 = arith.constant 0 : index
    %c0_2 = arith.constant 0 : index
    %3 = vector.load %arg22[%c0, %c0_1, %c0_2] : memref<4x8x32xf32, #tpu.memory_space<vmem>>, vector<4x8x32xf32>
    %4 = vector.shape_cast %3 : vector<4x8x32xf32> to vector<32x32xf32>
    %c0_3 = arith.constant 0 : index
    %c0_4 = arith.constant 0 : index
    %c0_5 = arith.constant 0 : index
    %5 = vector.load %arg2[%c0_3, %c0_4, %c0_5] : memref<4x8x32xbf16, #tpu.memory_space<vmem>>, vector<4x8x32xbf16>
    %6 = arith.extf %5 : vector<4x8x32xbf16> to vector<4x8x32xf32>
    %7 = vector.shape_cast %6 : vector<4x8x32xf32> to vector<32x32xf32>
    %8 = arith.index_cast %arg1 : i32 to index
    %c0_6 = arith.constant 0 : index
    %c0_7 = arith.constant 0 : index
    %9 = vector.load %arg4[%8, %c0_6, %c0_7] : memref<2x1x32xf32, #tpu.memory_space<vmem>>, vector<1x1x32xf32>
    %10 = vector.shape_cast %9 : vector<1x1x32xf32> to vector<1x32xf32>
    %11 = arith.index_cast %arg1 : i32 to index
    %c0_8 = arith.constant 0 : index
    %c0_9 = arith.constant 0 : index
    %12 = vector.load %arg5[%11, %c0_8, %c0_9] : memref<2x1x32xf32, #tpu.memory_space<vmem>>, vector<1x1x32xf32>
    %13 = vector.shape_cast %12 : vector<1x1x32xf32> to vector<1x32xf32>
    %cst = arith.constant dense<0.000000e+00> : vector<32xf32>
    %14 = vector.multi_reduction <add>, %4, %cst [1] : vector<32x32xf32> to vector<32xf32>
    %15 = vector.shape_cast %14 : vector<32xf32> to vector<32x1xf32>
    %cst_10 = arith.constant 3.200000e+01 : f32
    %16 = vector.broadcast %cst_10 : f32 to vector<32x1xf32>
    %17 = arith.divf %15, %16 : vector<32x1xf32>
    %18 = vector.broadcast %17 : vector<32x1xf32> to vector<32x32xf32>
    %19 = arith.subf %4, %18 : vector<32x32xf32>
    %20 = arith.mulf %19, %19 : vector<32x32xf32>
    %cst_11 = arith.constant dense<0.000000e+00> : vector<32xf32>
    %21 = vector.multi_reduction <add>, %20, %cst_11 [1] : vector<32x32xf32> to vector<32xf32>
    %22 = vector.shape_cast %21 : vector<32xf32> to vector<32x1xf32>
    %cst_12 = arith.constant 3.200000e+01 : f32
    %23 = vector.broadcast %cst_12 : f32 to vector<32x1xf32>
    %24 = arith.divf %22, %23 : vector<32x1xf32>
    %25 = vector.broadcast %17 : vector<32x1xf32> to vector<32x32xf32>
    %26 = arith.subf %4, %25 : vector<32x32xf32>
    %cst_13 = arith.constant 9.99999974E-6 : f32
    %27 = vector.broadcast %cst_13 : f32 to vector<32x1xf32>
    %28 = arith.addf %24, %27 : vector<32x1xf32>
    %29 = math.rsqrt %28 : vector<32x1xf32>
    %30 = vector.broadcast %29 : vector<32x1xf32> to vector<32x32xf32>
    %31 = arith.mulf %26, %30 : vector<32x32xf32>
    %32 = vector.broadcast %10 : vector<1x32xf32> to vector<32x32xf32>
    %33 = arith.mulf %31, %32 : vector<32x32xf32>
    %34 = vector.broadcast %13 : vector<1x32xf32> to vector<32x32xf32>
    %35 = arith.addf %33, %34 : vector<32x32xf32>
    %36 = arith.index_cast %arg1 : i32 to index
    %c0_14 = arith.constant 0 : index
    %c0_15 = arith.constant 0 : index
    %37 = vector.load %arg6[%36, %c0_14, %c0_15] : memref<2x1x32xf32, #tpu.memory_space<vmem>>, vector<1x1x32xf32>
    %38 = vector.shape_cast %37 : vector<1x1x32xf32> to vector<1x32xf32>
    %39 = arith.index_cast %arg1 : i32 to index
    %c0_16 = arith.constant 0 : index
    %c0_17 = arith.constant 0 : index
    %40 = vector.load %arg7[%39, %c0_16, %c0_17] : memref<2x1x32xf32, #tpu.memory_space<vmem>>, vector<1x1x32xf32>
    %41 = vector.shape_cast %40 : vector<1x1x32xf32> to vector<1x32xf32>
    %cst_18 = arith.constant dense<0.000000e+00> : vector<32xf32>
    %42 = vector.multi_reduction <add>, %7, %cst_18 [1] : vector<32x32xf32> to vector<32xf32>
    %43 = vector.shape_cast %42 : vector<32xf32> to vector<32x1xf32>
    %cst_19 = arith.constant 3.200000e+01 : f32
    %44 = vector.broadcast %cst_19 : f32 to vector<32x1xf32>
    %45 = arith.divf %43, %44 : vector<32x1xf32>
    %46 = vector.broadcast %45 : vector<32x1xf32> to vector<32x32xf32>
    %47 = arith.subf %7, %46 : vector<32x32xf32>
    %48 = arith.mulf %47, %47 : vector<32x32xf32>
    %cst_20 = arith.constant dense<0.000000e+00> : vector<32xf32>
    %49 = vector.multi_reduction <add>, %48, %cst_20 [1] : vector<32x32xf32> to vector<32xf32>
    %50 = vector.shape_cast %49 : vector<32xf32> to vector<32x1xf32>
    %cst_21 = arith.constant 3.200000e+01 : f32
    %51 = vector.broadcast %cst_21 : f32 to vector<32x1xf32>
    %52 = arith.divf %50, %51 : vector<32x1xf32>
    %53 = vector.broadcast %45 : vector<32x1xf32> to vector<32x32xf32>
    %54 = arith.subf %7, %53 : vector<32x32xf32>
    %cst_22 = arith.constant 9.99999974E-6 : f32
    %55 = vector.broadcast %cst_22 : f32 to vector<32x1xf32>
    %56 = arith.addf %52, %55 : vector<32x1xf32>
    %57 = math.rsqrt %56 : vector<32x1xf32>
    %58 = vector.broadcast %57 : vector<32x1xf32> to vector<32x32xf32>
    %59 = arith.mulf %54, %58 : vector<32x32xf32>
    %60 = vector.broadcast %38 : vector<1x32xf32> to vector<32x32xf32>
    %61 = arith.mulf %59, %60 : vector<32x32xf32>
    %62 = vector.broadcast %41 : vector<1x32xf32> to vector<32x32xf32>
    %63 = arith.addf %61, %62 : vector<32x32xf32>
    %64 = vector.shape_cast %35 : vector<32x32xf32> to vector<4x8x32xf32>
    %65 = vector.shape_cast %63 : vector<32x32xf32> to vector<4x8x32xf32>
    %66 = tpu.concatenate %64, %65 in 1 : vector<4x8x32xf32>, vector<4x8x32xf32> -> vector<4x16x32xf32>
    %67 = vector.shape_cast %66 : vector<4x16x32xf32> to vector<64x32xf32>
    %68 = arith.truncf %35 : vector<32x32xf32> to vector<32x32xbf16>
    %69 = arith.index_cast %arg1 : i32 to index
    %c0_23 = arith.constant 0 : index
    %c0_24 = arith.constant 0 : index
    %70 = vector.load %arg10[%69, %c0_23, %c0_24] : memref<2x32x32xbf16, #tpu.memory_space<vmem>>, vector<1x32x32xbf16>
    %71 = vector.shape_cast %70 : vector<1x32x32xbf16> to vector<32x32xbf16>
    %cst_25 = arith.constant dense<0.000000e+00> : vector<32x32xf32>
    %72 = tpu.matmul %68, %71, %cst_25 {dimension_numbers = #tpu.dot_dimension_numbers<[1], [0], [0], [1], [0, 0, 1, 1], [], []>} : vector<32x32xbf16>, vector<32x32xbf16>, vector<32x32xf32> -> vector<32x32xf32>
    %73 = arith.index_cast %arg1 : i32 to index
    %c0_26 = arith.constant 0 : index
    %c0_27 = arith.constant 0 : index
    %74 = vector.load %arg11[%73, %c0_26, %c0_27] : memref<2x1x32xf32, #tpu.memory_space<vmem>>, vector<1x1x32xf32>
    %75 = vector.shape_cast %74 : vector<1x1x32xf32> to vector<1x32xf32>
    %76 = vector.broadcast %75 : vector<1x32xf32> to vector<32x32xf32>
    %77 = arith.addf %72, %76 : vector<32x32xf32>
    %78 = arith.truncf %67 : vector<64x32xf32> to vector<64x32xbf16>
    %79 = arith.index_cast %arg1 : i32 to index
    %c0_28 = arith.constant 0 : index
    %c0_29 = arith.constant 0 : index
    %80 = vector.load %arg12[%79, %c0_28, %c0_29] : memref<2x32x32xbf16, #tpu.memory_space<vmem>>, vector<1x32x32xbf16>
    %81 = vector.shape_cast %80 : vector<1x32x32xbf16> to vector<32x32xbf16>
    %cst_30 = arith.constant dense<0.000000e+00> : vector<64x32xf32>
    %82 = tpu.matmul %78, %81, %cst_30 {dimension_numbers = #tpu.dot_dimension_numbers<[1], [0], [0], [1], [0, 0, 1, 1], [], []>} : vector<64x32xbf16>, vector<32x32xbf16>, vector<64x32xf32> -> vector<64x32xf32>
    %83 = arith.index_cast %arg1 : i32 to index
    %c0_31 = arith.constant 0 : index
    %c0_32 = arith.constant 0 : index
    %84 = vector.load %arg13[%83, %c0_31, %c0_32] : memref<2x1x32xf32, #tpu.memory_space<vmem>>, vector<1x1x32xf32>
    %85 = vector.shape_cast %84 : vector<1x1x32xf32> to vector<1x32xf32>
    %86 = vector.broadcast %85 : vector<1x32xf32> to vector<64x32xf32>
    %87 = arith.addf %82, %86 : vector<64x32xf32>
    %88 = arith.truncf %67 : vector<64x32xf32> to vector<64x32xbf16>
    %89 = arith.index_cast %arg1 : i32 to index
    %c0_33 = arith.constant 0 : index
    %c0_34 = arith.constant 0 : index
    %90 = vector.load %arg14[%89, %c0_33, %c0_34] : memref<2x32x32xbf16, #tpu.memory_space<vmem>>, vector<1x32x32xbf16>
    %91 = vector.shape_cast %90 : vector<1x32x32xbf16> to vector<32x32xbf16>
    %cst_35 = arith.constant dense<0.000000e+00> : vector<64x32xf32>
    %92 = tpu.matmul %88, %91, %cst_35 {dimension_numbers = #tpu.dot_dimension_numbers<[1], [0], [0], [1], [0, 0, 1, 1], [], []>} : vector<64x32xbf16>, vector<32x32xbf16>, vector<64x32xf32> -> vector<64x32xf32>
    %93 = arith.index_cast %arg1 : i32 to index
    %c0_36 = arith.constant 0 : index
    %c0_37 = arith.constant 0 : index
    %94 = vector.load %arg15[%93, %c0_36, %c0_37] : memref<2x1x32xf32, #tpu.memory_space<vmem>>, vector<1x1x32xf32>
    %95 = vector.shape_cast %94 : vector<1x1x32xf32> to vector<1x32xf32>
    %96 = vector.broadcast %95 : vector<1x32xf32> to vector<64x32xf32>
    %97 = arith.addf %92, %96 : vector<64x32xf32>
    %98 = arith.truncf %77 : vector<32x32xf32> to vector<32x32xbf16>
    %99 = arith.truncf %87 : vector<64x32xf32> to vector<64x32xbf16>
    %100 = arith.truncf %97 : vector<64x32xf32> to vector<64x32xbf16>
    %101 = vector.extract_strided_slice %98 {offsets = [0, 0], sizes = [32, 8], strides = [1, 1]} : vector<32x32xbf16> to vector<32x8xbf16>
    %102 = vector.shape_cast %101 : vector<32x8xbf16> to vector<4x8x8xbf16>
    %103 = vector.extract_strided_slice %99 {offsets = [0, 0], sizes = [64, 8], strides = [1, 1]} : vector<64x32xbf16> to vector<64x8xbf16>
    %104 = vector.shape_cast %103 : vector<64x8xbf16> to vector<4x16x8xbf16>
    %105 = vector.extract_strided_slice %100 {offsets = [0, 0], sizes = [64, 8], strides = [1, 1]} : vector<64x32xbf16> to vector<64x8xbf16>
    %106 = vector.shape_cast %105 : vector<64x8xbf16> to vector<4x16x8xbf16>
    "tpu.trace_start"() <{level = 10 : i32, message = "blk,btk->blt"}> : () -> ()
    %cst_38 = arith.constant dense<0.000000e+00> : vector<4x8x16xf32>
    %107 = tpu.matmul %102, %104, %cst_38 {dimension_numbers = #tpu.dot_dimension_numbers<[2], [2], [1], [1], [0, 0, 0, 1, 1, 1], [0], [0]>} : vector<4x8x8xbf16>, vector<4x16x8xbf16>, vector<4x8x16xf32> -> vector<4x8x16xf32>
    "tpu.trace_stop"() : () -> ()
    %cst_39 = arith.constant dense<0xFF800000> : vector<4x8xf32>
    %108 = vector.multi_reduction <maximumf>, %107, %cst_39 [2] : vector<4x8x16xf32> to vector<4x8xf32>
    %109 = vector.shape_cast %108 : vector<4x8xf32> to vector<4x8x1xf32>
    %110 = vector.broadcast %109 : vector<4x8x1xf32> to vector<4x8x16xf32>
    %111 = arith.subf %107, %110 : vector<4x8x16xf32>
    %112 = math.exp %111 : vector<4x8x16xf32>
    %cst_40 = arith.constant dense<0.000000e+00> : vector<4x8xf32>
    %113 = vector.multi_reduction <add>, %112, %cst_40 [2] : vector<4x8x16xf32> to vector<4x8xf32>
    %114 = vector.shape_cast %113 : vector<4x8xf32> to vector<4x8x1xf32>
    %115 = tpu.reciprocal %114 {approx = true} : vector<4x8x1xf32> -> vector<4x8x1xf32>
    %116 = vector.broadcast %115 : vector<4x8x1xf32> to vector<4x8x16xf32>
    %117 = arith.mulf %112, %116 : vector<4x8x16xf32>
    %118 = arith.truncf %117 : vector<4x8x16xf32> to vector<4x8x16xbf16>
    "tpu.trace_start"() <{level = 10 : i32, message = "blt,btk->blk"}> : () -> ()
    %cst_41 = arith.constant dense<0.000000e+00> : vector<4x8x8xf32>
    %119 = tpu.matmul %118, %106, %cst_41 {dimension_numbers = #tpu.dot_dimension_numbers<[2], [1], [1], [2], [0, 0, 0, 1, 1, 2], [0], [0]>} : vector<4x8x16xbf16>, vector<4x16x8xbf16>, vector<4x8x8xf32> -> vector<4x8x8xf32>
    "tpu.trace_stop"() : () -> ()
    %120 = vector.shape_cast %119 : vector<4x8x8xf32> to vector<32x8xf32>
    %121 = vector.extract_strided_slice %98 {offsets = [0, 8], sizes = [32, 8], strides = [1, 1]} : vector<32x32xbf16> to vector<32x8xbf16>
    %122 = vector.shape_cast %121 : vector<32x8xbf16> to vector<4x8x8xbf16>
    %123 = vector.extract_strided_slice %99 {offsets = [0, 8], sizes = [64, 8], strides = [1, 1]} : vector<64x32xbf16> to vector<64x8xbf16>
    %124 = vector.shape_cast %123 : vector<64x8xbf16> to vector<4x16x8xbf16>
    %125 = vector.extract_strided_slice %100 {offsets = [0, 8], sizes = [64, 8], strides = [1, 1]} : vector<64x32xbf16> to vector<64x8xbf16>
    %126 = vector.shape_cast %125 : vector<64x8xbf16> to vector<4x16x8xbf16>
    "tpu.trace_start"() <{level = 10 : i32, message = "blk,btk->blt"}> : () -> ()
    %cst_42 = arith.constant dense<0.000000e+00> : vector<4x8x16xf32>
    %127 = tpu.matmul %122, %124, %cst_42 {dimension_numbers = #tpu.dot_dimension_numbers<[2], [2], [1], [1], [0, 0, 0, 1, 1, 1], [0], [0]>} : vector<4x8x8xbf16>, vector<4x16x8xbf16>, vector<4x8x16xf32> -> vector<4x8x16xf32>
    "tpu.trace_stop"() : () -> ()
    %cst_43 = arith.constant dense<0xFF800000> : vector<4x8xf32>
    %128 = vector.multi_reduction <maximumf>, %127, %cst_43 [2] : vector<4x8x16xf32> to vector<4x8xf32>
    %129 = vector.shape_cast %128 : vector<4x8xf32> to vector<4x8x1xf32>
    %130 = vector.broadcast %129 : vector<4x8x1xf32> to vector<4x8x16xf32>
    %131 = arith.subf %127, %130 : vector<4x8x16xf32>
    %132 = math.exp %131 : vector<4x8x16xf32>
    %cst_44 = arith.constant dense<0.000000e+00> : vector<4x8xf32>
    %133 = vector.multi_reduction <add>, %132, %cst_44 [2] : vector<4x8x16xf32> to vector<4x8xf32>
    %134 = vector.shape_cast %133 : vector<4x8xf32> to vector<4x8x1xf32>
    %135 = tpu.reciprocal %134 {approx = true} : vector<4x8x1xf32> -> vector<4x8x1xf32>
    %136 = vector.broadcast %135 : vector<4x8x1xf32> to vector<4x8x16xf32>
    %137 = arith.mulf %132, %136 : vector<4x8x16xf32>
    %138 = arith.truncf %137 : vector<4x8x16xf32> to vector<4x8x16xbf16>
    "tpu.trace_start"() <{level = 10 : i32, message = "blt,btk->blk"}> : () -> ()
    %cst_45 = arith.constant dense<0.000000e+00> : vector<4x8x8xf32>
    %139 = tpu.matmul %138, %126, %cst_45 {dimension_numbers = #tpu.dot_dimension_numbers<[2], [1], [1], [2], [0, 0, 0, 1, 1, 2], [0], [0]>} : vector<4x8x16xbf16>, vector<4x16x8xbf16>, vector<4x8x8xf32> -> vector<4x8x8xf32>
    "tpu.trace_stop"() : () -> ()
    %140 = vector.shape_cast %139 : vector<4x8x8xf32> to vector<32x8xf32>
    %141 = vector.extract_strided_slice %98 {offsets = [0, 16], sizes = [32, 8], strides = [1, 1]} : vector<32x32xbf16> to vector<32x8xbf16>
    %142 = vector.shape_cast %141 : vector<32x8xbf16> to vector<4x8x8xbf16>
    %143 = vector.extract_strided_slice %99 {offsets = [0, 16], sizes = [64, 8], strides = [1, 1]} : vector<64x32xbf16> to vector<64x8xbf16>
    %144 = vector.shape_cast %143 : vector<64x8xbf16> to vector<4x16x8xbf16>
    %145 = vector.extract_strided_slice %100 {offsets = [0, 16], sizes = [64, 8], strides = [1, 1]} : vector<64x32xbf16> to vector<64x8xbf16>
    %146 = vector.shape_cast %145 : vector<64x8xbf16> to vector<4x16x8xbf16>
    "tpu.trace_start"() <{level = 10 : i32, message = "blk,btk->blt"}> : () -> ()
    %cst_46 = arith.constant dense<0.000000e+00> : vector<4x8x16xf32>
    %147 = tpu.matmul %142, %144, %cst_46 {dimension_numbers = #tpu.dot_dimension_numbers<[2], [2], [1], [1], [0, 0, 0, 1, 1, 1], [0], [0]>} : vector<4x8x8xbf16>, vector<4x16x8xbf16>, vector<4x8x16xf32> -> vector<4x8x16xf32>
    "tpu.trace_stop"() : () -> ()
    %cst_47 = arith.constant dense<0xFF800000> : vector<4x8xf32>
    %148 = vector.multi_reduction <maximumf>, %147, %cst_47 [2] : vector<4x8x16xf32> to vector<4x8xf32>
    %149 = vector.shape_cast %148 : vector<4x8xf32> to vector<4x8x1xf32>
    %150 = vector.broadcast %149 : vector<4x8x1xf32> to vector<4x8x16xf32>
    %151 = arith.subf %147, %150 : vector<4x8x16xf32>
    %152 = math.exp %151 : vector<4x8x16xf32>
    %cst_48 = arith.constant dense<0.000000e+00> : vector<4x8xf32>
    %153 = vector.multi_reduction <add>, %152, %cst_48 [2] : vector<4x8x16xf32> to vector<4x8xf32>
    %154 = vector.shape_cast %153 : vector<4x8xf32> to vector<4x8x1xf32>
    %155 = tpu.reciprocal %154 {approx = true} : vector<4x8x1xf32> -> vector<4x8x1xf32>
    %156 = vector.broadcast %155 : vector<4x8x1xf32> to vector<4x8x16xf32>
    %157 = arith.mulf %152, %156 : vector<4x8x16xf32>
    %158 = arith.truncf %157 : vector<4x8x16xf32> to vector<4x8x16xbf16>
    "tpu.trace_start"() <{level = 10 : i32, message = "blt,btk->blk"}> : () -> ()
    %cst_49 = arith.constant dense<0.000000e+00> : vector<4x8x8xf32>
    %159 = tpu.matmul %158, %146, %cst_49 {dimension_numbers = #tpu.dot_dimension_numbers<[2], [1], [1], [2], [0, 0, 0, 1, 1, 2], [0], [0]>} : vector<4x8x16xbf16>, vector<4x16x8xbf16>, vector<4x8x8xf32> -> vector<4x8x8xf32>
    "tpu.trace_stop"() : () -> ()
    %160 = vector.shape_cast %159 : vector<4x8x8xf32> to vector<32x8xf32>
    %161 = vector.extract_strided_slice %98 {offsets = [0, 24], sizes = [32, 8], strides = [1, 1]} : vector<32x32xbf16> to vector<32x8xbf16>
    %162 = vector.shape_cast %161 : vector<32x8xbf16> to vector<4x8x8xbf16>
    %163 = vector.extract_strided_slice %99 {offsets = [0, 24], sizes = [64, 8], strides = [1, 1]} : vector<64x32xbf16> to vector<64x8xbf16>
    %164 = vector.shape_cast %163 : vector<64x8xbf16> to vector<4x16x8xbf16>
    %165 = vector.extract_strided_slice %100 {offsets = [0, 24], sizes = [64, 8], strides = [1, 1]} : vector<64x32xbf16> to vector<64x8xbf16>
    %166 = vector.shape_cast %165 : vector<64x8xbf16> to vector<4x16x8xbf16>
    "tpu.trace_start"() <{level = 10 : i32, message = "blk,btk->blt"}> : () -> ()
    %cst_50 = arith.constant dense<0.000000e+00> : vector<4x8x16xf32>
    %167 = tpu.matmul %162, %164, %cst_50 {dimension_numbers = #tpu.dot_dimension_numbers<[2], [2], [1], [1], [0, 0, 0, 1, 1, 1], [0], [0]>} : vector<4x8x8xbf16>, vector<4x16x8xbf16>, vector<4x8x16xf32> -> vector<4x8x16xf32>
    "tpu.trace_stop"() : () -> ()
    %cst_51 = arith.constant dense<0xFF800000> : vector<4x8xf32>
    %168 = vector.multi_reduction <maximumf>, %167, %cst_51 [2] : vector<4x8x16xf32> to vector<4x8xf32>
    %169 = vector.shape_cast %168 : vector<4x8xf32> to vector<4x8x1xf32>
    %170 = vector.broadcast %169 : vector<4x8x1xf32> to vector<4x8x16xf32>
    %171 = arith.subf %167, %170 : vector<4x8x16xf32>
    %172 = math.exp %171 : vector<4x8x16xf32>
    %cst_52 = arith.constant dense<0.000000e+00> : vector<4x8xf32>
    %173 = vector.multi_reduction <add>, %172, %cst_52 [2] : vector<4x8x16xf32> to vector<4x8xf32>
    %174 = vector.shape_cast %173 : vector<4x8xf32> to vector<4x8x1xf32>
    %175 = tpu.reciprocal %174 {approx = true} : vector<4x8x1xf32> -> vector<4x8x1xf32>
    %176 = vector.broadcast %175 : vector<4x8x1xf32> to vector<4x8x16xf32>
    %177 = arith.mulf %172, %176 : vector<4x8x16xf32>
    %178 = arith.truncf %177 : vector<4x8x16xf32> to vector<4x8x16xbf16>
    "tpu.trace_start"() <{level = 10 : i32, message = "blt,btk->blk"}> : () -> ()
    %cst_53 = arith.constant dense<0.000000e+00> : vector<4x8x8xf32>
    %179 = tpu.matmul %178, %166, %cst_53 {dimension_numbers = #tpu.dot_dimension_numbers<[2], [1], [1], [2], [0, 0, 0, 1, 1, 2], [0], [0]>} : vector<4x8x16xbf16>, vector<4x16x8xbf16>, vector<4x8x8xf32> -> vector<4x8x8xf32>
    "tpu.trace_stop"() : () -> ()
    %180 = vector.shape_cast %179 : vector<4x8x8xf32> to vector<32x8xf32>
    %181 = tpu.concatenate %120, %140, %160, %180 in 1 : vector<32x8xf32>, vector<32x8xf32>, vector<32x8xf32>, vector<32x8xf32> -> vector<32x32xf32>
    %182 = arith.truncf %181 : vector<32x32xf32> to vector<32x32xbf16>
    %183 = arith.index_cast %arg1 : i32 to index
    %c0_54 = arith.constant 0 : index
    %c0_55 = arith.constant 0 : index
    %184 = vector.load %arg16[%183, %c0_54, %c0_55] : memref<2x32x32xbf16, #tpu.memory_space<vmem>>, vector<1x32x32xbf16>
    %185 = vector.shape_cast %184 : vector<1x32x32xbf16> to vector<32x32xbf16>
    %cst_56 = arith.constant dense<0.000000e+00> : vector<32x32xf32>
    %186 = tpu.matmul %182, %185, %cst_56 {dimension_numbers = #tpu.dot_dimension_numbers<[1], [0], [0], [1], [0, 0, 1, 1], [], []>} : vector<32x32xbf16>, vector<32x32xbf16>, vector<32x32xf32> -> vector<32x32xf32>
    %187 = arith.index_cast %arg1 : i32 to index
    %c0_57 = arith.constant 0 : index
    %c0_58 = arith.constant 0 : index
    %188 = vector.load %arg17[%187, %c0_57, %c0_58] : memref<2x1x32xf32, #tpu.memory_space<vmem>>, vector<1x1x32xf32>
    %189 = vector.shape_cast %188 : vector<1x1x32xf32> to vector<1x32xf32>
    %190 = vector.broadcast %189 : vector<1x32xf32> to vector<32x32xf32>
    %191 = arith.addf %186, %190 : vector<32x32xf32>
    %192 = arith.addf %4, %191 : vector<32x32xf32>
    %193 = arith.index_cast %arg1 : i32 to index
    %c0_59 = arith.constant 0 : index
    %c0_60 = arith.constant 0 : index
    %194 = vector.load %arg8[%193, %c0_59, %c0_60] : memref<2x1x32xf32, #tpu.memory_space<vmem>>, vector<1x1x32xf32>
    %195 = vector.shape_cast %194 : vector<1x1x32xf32> to vector<1x32xf32>
    %196 = arith.index_cast %arg1 : i32 to index
    %c0_61 = arith.constant 0 : index
    %c0_62 = arith.constant 0 : index
    %197 = vector.load %arg9[%196, %c0_61, %c0_62] : memref<2x1x32xf32, #tpu.memory_space<vmem>>, vector<1x1x32xf32>
    %198 = vector.shape_cast %197 : vector<1x1x32xf32> to vector<1x32xf32>
    %cst_63 = arith.constant dense<0.000000e+00> : vector<32xf32>
    %199 = vector.multi_reduction <add>, %192, %cst_63 [1] : vector<32x32xf32> to vector<32xf32>
    %200 = vector.shape_cast %199 : vector<32xf32> to vector<32x1xf32>
    %cst_64 = arith.constant 3.200000e+01 : f32
    %201 = vector.broadcast %cst_64 : f32 to vector<32x1xf32>
    %202 = arith.divf %200, %201 : vector<32x1xf32>
    %203 = vector.broadcast %202 : vector<32x1xf32> to vector<32x32xf32>
    %204 = arith.subf %192, %203 : vector<32x32xf32>
    %205 = arith.mulf %204, %204 : vector<32x32xf32>
    %cst_65 = arith.constant dense<0.000000e+00> : vector<32xf32>
    %206 = vector.multi_reduction <add>, %205, %cst_65 [1] : vector<32x32xf32> to vector<32xf32>
    %207 = vector.shape_cast %206 : vector<32xf32> to vector<32x1xf32>
    %cst_66 = arith.constant 3.200000e+01 : f32
    %208 = vector.broadcast %cst_66 : f32 to vector<32x1xf32>
    %209 = arith.divf %207, %208 : vector<32x1xf32>
    %210 = vector.broadcast %202 : vector<32x1xf32> to vector<32x32xf32>
    %211 = arith.subf %192, %210 : vector<32x32xf32>
    %cst_67 = arith.constant 9.99999974E-6 : f32
    %212 = vector.broadcast %cst_67 : f32 to vector<32x1xf32>
    %213 = arith.addf %209, %212 : vector<32x1xf32>
    %214 = math.rsqrt %213 : vector<32x1xf32>
    %215 = vector.broadcast %214 : vector<32x1xf32> to vector<32x32xf32>
    %216 = arith.mulf %211, %215 : vector<32x32xf32>
    %217 = vector.broadcast %195 : vector<1x32xf32> to vector<32x32xf32>
    %218 = arith.mulf %216, %217 : vector<32x32xf32>
    %219 = vector.broadcast %198 : vector<1x32xf32> to vector<32x32xf32>
    %220 = arith.addf %218, %219 : vector<32x32xf32>
    %221 = arith.truncf %220 : vector<32x32xf32> to vector<32x32xbf16>
    %222 = arith.index_cast %arg1 : i32 to index
    %c0_68 = arith.constant 0 : index
    %c0_69 = arith.constant 0 : index
    %223 = vector.load %arg18[%222, %c0_68, %c0_69] : memref<2x32x128xbf16, #tpu.memory_space<vmem>>, vector<1x32x128xbf16>
    %224 = vector.shape_cast %223 : vector<1x32x128xbf16> to vector<32x128xbf16>
    %cst_70 = arith.constant dense<0.000000e+00> : vector<32x128xf32>
    %225 = tpu.matmul %221, %224, %cst_70 {dimension_numbers = #tpu.dot_dimension_numbers<[1], [0], [0], [1], [0, 0, 1, 1], [], []>} : vector<32x32xbf16>, vector<32x128xbf16>, vector<32x128xf32> -> vector<32x128xf32>
    %226 = arith.index_cast %arg1 : i32 to index
    %c0_71 = arith.constant 0 : index
    %c0_72 = arith.constant 0 : index
    %227 = vector.load %arg19[%226, %c0_71, %c0_72] : memref<2x1x128xf32, #tpu.memory_space<vmem>>, vector<1x1x128xf32>
    %228 = vector.shape_cast %227 : vector<1x1x128xf32> to vector<1x128xf32>
    %229 = vector.broadcast %228 : vector<1x128xf32> to vector<32x128xf32>
    %230 = arith.addf %225, %229 : vector<32x128xf32>
    %cst_73 = arith.constant 0.000000e+00 : f32
    %231 = vector.broadcast %cst_73 : f32 to vector<32x128xf32>
    %232 = arith.maximumf %230, %231 : vector<32x128xf32>
    %233 = arith.mulf %232, %232 : vector<32x128xf32>
    %234 = arith.truncf %233 : vector<32x128xf32> to vector<32x128xbf16>
    %235 = arith.index_cast %arg1 : i32 to index
    %c0_74 = arith.constant 0 : index
    %c0_75 = arith.constant 0 : index
    %236 = vector.load %arg20[%235, %c0_74, %c0_75] : memref<2x128x32xbf16, #tpu.memory_space<vmem>>, vector<1x128x32xbf16>
    %237 = vector.shape_cast %236 : vector<1x128x32xbf16> to vector<128x32xbf16>
    %cst_76 = arith.constant dense<0.000000e+00> : vector<32x32xf32>
    %238 = tpu.matmul %234, %237, %cst_76 {dimension_numbers = #tpu.dot_dimension_numbers<[1], [0], [0], [1], [0, 0, 1, 1], [], []>} : vector<32x128xbf16>, vector<128x32xbf16>, vector<32x32xf32> -> vector<32x32xf32>
    %239 = arith.index_cast %arg1 : i32 to index
    %c0_77 = arith.constant 0 : index
    %c0_78 = arith.constant 0 : index
    %240 = vector.load %arg21[%239, %c0_77, %c0_78] : memref<2x1x32xf32, #tpu.memory_space<vmem>>, vector<1x1x32xf32>
    %241 = vector.shape_cast %240 : vector<1x1x32xf32> to vector<1x32xf32>
    %242 = vector.broadcast %241 : vector<1x32xf32> to vector<32x32xf32>
    %243 = arith.addf %238, %242 : vector<32x32xf32>
    %244 = arith.addf %192, %243 : vector<32x32xf32>
    %245 = vector.shape_cast %244 : vector<32x32xf32> to vector<4x8x32xf32>
    %c0_79 = arith.constant 0 : index
    %c0_80 = arith.constant 0 : index
    %c0_81 = arith.constant 0 : index
    %246 = vector.load %arg22[%c0_79, %c0_80, %c0_81] : memref<4x8x32xf32, #tpu.memory_space<vmem>>, vector<4x8x32xf32>
    tpu.vector_store %arg22[%c0_79, %c0_80, %c0_81], %245 {strides = array<i32>} : memref<4x8x32xf32, #tpu.memory_space<vmem>>, vector<4x8x32xf32>,
    return
  }
  func.func @transform_0(%arg0: i32, %arg1: i32) -> (i32, i32, i32) {
    %c0_i32 = arith.constant 0 : i32
    %c0_i32_0 = arith.constant 0 : i32
    %c0_i32_1 = arith.constant 0 : i32
    return %arg0, %c0_i32, %c0_i32_0 : i32, i32, i32
  }
  func.func @transform_1(%arg0: i32, %arg1: i32) -> (i32, i32, i32) {
    %c0_i32 = arith.constant 0 : i32
    %c0_i32_0 = arith.constant 0 : i32
    %c0_i32_1 = arith.constant 0 : i32
    return %arg0, %c0_i32, %c0_i32_0 : i32, i32, i32
  }
  func.func @transform_2(%arg0: i32, %arg1: i32) -> (i32, i32, i32) {
    %c0_i32 = arith.constant 0 : i32
    %c0_i32_0 = arith.constant 0 : i32
    %c0_i32_1 = arith.constant 0 : i32
    %c0_i32_2 = arith.constant 0 : i32
    return %c0_i32, %c0_i32_0, %c0_i32_1 : i32, i32, i32
  }
  func.func @transform_3(%arg0: i32, %arg1: i32) -> (i32, i32, i32) {
    %c0_i32 = arith.constant 0 : i32
    %c0_i32_0 = arith.constant 0 : i32
    %c0_i32_1 = arith.constant 0 : i32
    %c0_i32_2 = arith.constant 0 : i32
    return %c0_i32, %c0_i32_0, %c0_i32_1 : i32, i32, i32
  }
  func.func @transform_4(%arg0: i32, %arg1: i32) -> (i32, i32, i32) {
    %c0_i32 = arith.constant 0 : i32
    %c0_i32_0 = arith.constant 0 : i32
    %c0_i32_1 = arith.constant 0 : i32
    %c0_i32_2 = arith.constant 0 : i32
    return %c0_i32, %c0_i32_0, %c0_i32_1 : i32, i32, i32
  }
  func.func @transform_5(%arg0: i32, %arg1: i32) -> (i32, i32, i32) {
    %c0_i32 = arith.constant 0 : i32
    %c0_i32_0 = arith.constant 0 : i32
    %c0_i32_1 = arith.constant 0 : i32
    %c0_i32_2 = arith.constant 0 : i32
    return %c0_i32, %c0_i32_0, %c0_i32_1 : i32, i32, i32
  }
  func.func @transform_6(%arg0: i32, %arg1: i32) -> (i32, i32, i32) {
    %c0_i32 = arith.constant 0 : i32
    %c0_i32_0 = arith.constant 0 : i32
    %c0_i32_1 = arith.constant 0 : i32
    %c0_i32_2 = arith.constant 0 : i32
    return %c0_i32, %c0_i32_0, %c0_i32_1 : i32, i32, i32
  }
  func.func @transform_7(%arg0: i32, %arg1: i32) -> (i32, i32, i32) {
    %c0_i32 = arith.constant 0 : i32
    %c0_i32_0 = arith.constant 0 : i32
    %c0_i32_1 = arith.constant 0 : i32
    %c0_i32_2 = arith.constant 0 : i32
    return %c0_i32, %c0_i32_0, %c0_i32_1 : i32, i32, i32
  }
  func.func @transform_8(%arg0: i32, %arg1: i32) -> (i32, i32, i32) {
    %c0_i32 = arith.constant 0 : i32
    %c0_i32_0 = arith.constant 0 : i32
    %c0_i32_1 = arith.constant 0 : i32
    %c0_i32_2 = arith.constant 0 : i32
    return %c0_i32, %c0_i32_0, %c0_i32_1 : i32, i32, i32
  }
  func.func @transform_9(%arg0: i32, %arg1: i32) -> (i32, i32, i32) {
    %c0_i32 = arith.constant 0 : i32
    %c0_i32_0 = arith.constant 0 : i32
    %c0_i32_1 = arith.constant 0 : i32
    %c0_i32_2 = arith.constant 0 : i32
    return %c0_i32, %c0_i32_0, %c0_i32_1 : i32, i32, i32
  }
  func.func @transform_10(%arg0: i32, %arg1: i32) -> (i32, i32, i32) {
    %c0_i32 = arith.constant 0 : i32
    %c0_i32_0 = arith.constant 0 : i32
    %c0_i32_1 = arith.constant 0 : i32
    %c0_i32_2 = arith.constant 0 : i32
    return %c0_i32, %c0_i32_0, %c0_i32_1 : i32, i32, i32
  }
  func.func @transform_11(%arg0: i32, %arg1: i32) -> (i32, i32, i32) {
    %c0_i32 = arith.constant 0 : i32
    %c0_i32_0 = arith.constant 0 : i32
    %c0_i32_1 = arith.constant 0 : i32
    %c0_i32_2 = arith.constant 0 : i32
    return %c0_i32, %c0_i32_0, %c0_i32_1 : i32, i32, i32
  }
  func.func @transform_12(%arg0: i32, %arg1: i32) -> (i32, i32, i32) {
    %c0_i32 = arith.constant 0 : i32
    %c0_i32_0 = arith.constant 0 : i32
    %c0_i32_1 = arith.constant 0 : i32
    %c0_i32_2 = arith.constant 0 : i32
    return %c0_i32, %c0_i32_0, %c0_i32_1 : i32, i32, i32
  }
  func.func @transform_13(%arg0: i32, %arg1: i32) -> (i32, i32, i32) {
    %c0_i32 = arith.constant 0 : i32
    %c0_i32_0 = arith.constant 0 : i32
    %c0_i32_1 = arith.constant 0 : i32
    %c0_i32_2 = arith.constant 0 : i32
    return %c0_i32, %c0_i32_0, %c0_i32_1 : i32, i32, i32
  }
  func.func @transform_14(%arg0: i32, %arg1: i32) -> (i32, i32, i32) {
    %c0_i32 = arith.constant 0 : i32
    %c0_i32_0 = arith.constant 0 : i32
    %c0_i32_1 = arith.constant 0 : i32
    %c0_i32_2 = arith.constant 0 : i32
    return %c0_i32, %c0_i32_0, %c0_i32_1 : i32, i32, i32
  }
  func.func @transform_15(%arg0: i32, %arg1: i32) -> (i32, i32, i32) {
    %c0_i32 = arith.constant 0 : i32
    %c0_i32_0 = arith.constant 0 : i32
    %c0_i32_1 = arith.constant 0 : i32
    %c0_i32_2 = arith.constant 0 : i32
    return %c0_i32, %c0_i32_0, %c0_i32_1 : i32, i32, i32
  }
  func.func @transform_16(%arg0: i32, %arg1: i32) -> (i32, i32, i32) {
    %c0_i32 = arith.constant 0 : i32
    %c0_i32_0 = arith.constant 0 : i32
    %c0_i32_1 = arith.constant 0 : i32
    %c0_i32_2 = arith.constant 0 : i32
    return %c0_i32, %c0_i32_0, %c0_i32_1 : i32, i32, i32
  }
  func.func @transform_17(%arg0: i32, %arg1: i32) -> (i32, i32, i32) {
    %c0_i32 = arith.constant 0 : i32
    %c0_i32_0 = arith.constant 0 : i32
    %c0_i32_1 = arith.constant 0 : i32
    %c0_i32_2 = arith.constant 0 : i32
    return %c0_i32, %c0_i32_0, %c0_i32_1 : i32, i32, i32
  }
  func.func @transform_18(%arg0: i32, %arg1: i32) -> (i32, i32, i32) {
    %c0_i32 = arith.constant 0 : i32
    %c0_i32_0 = arith.constant 0 : i32
    %c0_i32_1 = arith.constant 0 : i32
    %c0_i32_2 = arith.constant 0 : i32
    return %c0_i32, %c0_i32_0, %c0_i32_1 : i32, i32, i32
  }
  func.func @transform_19(%arg0: i32, %arg1: i32) -> (i32, i32, i32) {
    %c0_i32 = arith.constant 0 : i32
    %c0_i32_0 = arith.constant 0 : i32
    %c0_i32_1 = arith.constant 0 : i32
    %c0_i32_2 = arith.constant 0 : i32
    return %c0_i32, %c0_i32_0, %c0_i32_1 : i32, i32, i32
  }
  func.func @transform_20(%arg0: i32, %arg1: i32) -> (i32, i32, i32) {
    %c0_i32 = arith.constant 0 : i32
    %c0_i32_0 = arith.constant 0 : i32
    %c0_i32_1 = arith.constant 0 : i32
    return %arg0, %c0_i32, %c0_i32_0 : i32, i32, i32
  }
}

</mosaic_0001>

<llo_original>
// kernel: tpu_custom_call.1
$region0: #{tpu_custom_call.1}
  #allocation0 [shape = 'u32[]', space=smem, size = 0x4, offset = 0x4, fixed_abs, tag = 'smem constant byte address 0x4 - core index']
  #allocation1 [shape = 'u32[144,128]{1,0:T(1,128)}', space=vmem, size = 0x12000, scoped, tag = 'internal scratch']
  %s0 = inlined_call_operand.hbm [shape: bf16[4,8,32], index: 0, kind: input, shape index: {}]
  %s1 = inlined_call_operand.vmem [shape: f32[4,8,32], index: 1, kind: input, shape index: {}]
  %s2 = inlined_call_operand.hbm [shape: f32[2,1,32], index: 2, kind: input, shape index: {}]
  %s3 = inlined_call_operand.hbm [shape: f32[2,1,32], index: 3, kind: input, shape index: {}]
  %s4 = inlined_call_operand.hbm [shape: f32[2,1,32], index: 4, kind: input, shape index: {}]
  %s5 = inlined_call_operand.hbm [shape: f32[2,1,32], index: 5, kind: input, shape index: {}]
  %s6 = inlined_call_operand.hbm [shape: f32[2,1,32], index: 6, kind: input, shape index: {}]
  %s7 = inlined_call_operand.hbm [shape: f32[2,1,32], index: 7, kind: input, shape index: {}]
  %s8 = inlined_call_operand.vmem [shape: bf16[2,32,32], index: 8, kind: input, shape index: {}]
  %s9 = inlined_call_operand.hbm [shape: f32[2,1,32], index: 9, kind: input, shape index: {}]
  %s10 = inlined_call_operand.vmem [shape: bf16[2,32,32], index: 10, kind: input, shape index: {}]
  %s11 = inlined_call_operand.hbm [shape: f32[2,1,32], index: 11, kind: input, shape index: {}]
  %s12 = inlined_call_operand.vmem [shape: bf16[2,32,32], index: 12, kind: input, shape index: {}]
  %s13 = inlined_call_operand.hbm [shape: f32[2,1,32], index: 13, kind: input, shape index: {}]
  %s14 = inlined_call_operand.vmem [shape: bf16[2,32,32], index: 14, kind: input, shape index: {}]
  %s15 = inlined_call_operand.hbm [shape: f32[2,1,32], index: 15, kind: input, shape index: {}]
  %s16 = inlined_call_operand.vmem [shape: bf16[2,32,128], index: 16, kind: input, shape index: {}]
  %s17 = inlined_call_operand.hbm [shape: f32[2,1,128], index: 17, kind: input, shape index: {}]
  %s18 = inlined_call_operand.vmem [shape: bf16[2,128,32], index: 18, kind: input, shape index: {}]
  %s19 = inlined_call_operand.vmem [shape: f32[2,1,32], index: 19, kind: input, shape index: {}]
  %s20 = inlined_call_operand.hbm [shape: f32[4,8,32], index: 20, kind: output, shape index: {}]
  %s21 = sld [smem:[#allocation0]]
  $region165: #{tpu_custom_call.1} parent=0
    _
  %s23 = ssub.s32 1, %s21
  %s24 = scalar_select 0, %s23, %s21
  $region1: #{tpu_custom_call.1} parent=0
    #allocation2 [shape = 'u8[8192]{0}', space=vmem, size = 0x2000, scoped, tag = 'input window, operand 0, single buffered']
    #allocation3 [shape = 's32[2]{0}', space=sflag, size = 0x8, scoped, tag = 'scoped memory for tpu_custom_call.1']
    #allocation4 [shape = 's32[2]{0}', space=sflag, size = 0x8, scoped, tag = 'scoped memory for tpu_custom_call.1']
    #allocation5 [shape = 'u8[1024]{0}', space=vmem, size = 0x400, scoped, tag = 'input window, operand 2, single buffered']
    #allocation6 [shape = 's32[1]{0}', space=sflag, size = 0x4, scoped, tag = 'scoped memory for tpu_custom_call.1']
    #allocation7 [shape = 'u8[1024]{0}', space=vmem, size = 0x400, scoped, tag = 'input window, operand 3, single buffered']
    #allocation8 [shape = 'u8[1024]{0}', space=vmem, size = 0x400, scoped, tag = 'input window, operand 4, single buffered']
    #allocation9 [shape = 's32[1]{0}', space=sflag, size = 0x4, scoped, tag = 'scoped memory for tpu_custom_call.1']
    #allocation10 [shape = 'u8[1024]{0}', space=vmem, size = 0x400, scoped, tag = 'input window, operand 5, single buffered']
    #allocation11 [shape = 'u8[1024]{0}', space=vmem, size = 0x400, scoped, tag = 'input window, operand 6, single buffered']
    #allocation12 [shape = 's32[1]{0}', space=sflag, size = 0x4, scoped, tag = 'scoped memory for tpu_custom_call.1']
    #allocation13 [shape = 'u8[1024]{0}', space=vmem, size = 0x400, scoped, tag = 'input window, operand 7, single buffered']
    #allocation14 [shape = 'u8[1024]{0}', space=vmem, size = 0x400, scoped, tag = 'input window, operand 9, single buffered']
    #allocation15 [shape = 's32[1]{0}', space=sflag, size = 0x4, scoped, tag = 'scoped memory for tpu_custom_call.1']
    #allocation16 [shape = 'u8[1024]{0}', space=vmem, size = 0x400, scoped, tag = 'input window, operand 11, single buffered']
    #allocation17 [shape = 'u8[1024]{0}', space=vmem, size = 0x400, scoped, tag = 'input window, operand 13, single buffered']
    #allocation18 [shape = 's32[1]{0}', space=sflag, size = 0x4, scoped, tag = 'scoped memory for tpu_custom_call.1']
    #allocation19 [shape = 'u8[1024]{0}', space=vmem, size = 0x400, scoped, tag = 'input window, operand 15, single buffered']
    #allocation20 [shape = 'u8[1024]{0}', space=vmem, size = 0x400, scoped, tag = 'input window, operand 17, single buffered']
    #allocation21 [shape = 's32[1]{0}', space=sflag, size = 0x4, scoped, tag = 'scoped memory for tpu_custom_call.1']
    #allocation22 [shape = 'u8[16384]{0}', space=vmem, size = 0x4000, scoped, tag = 'output window, operand 0, single buffered']
    %25 = vsyncpa [#allocation3], 0
    %26 = vsyncpa [#allocation6], 0
    %27 = vsyncpa [#allocation9], 0
    %28 = vsyncpa [#allocation12], 0
    %29 = vsyncpa [#allocation15], 0
    %30 = vsyncpa [#allocation18], 0
    %31 = vsyncpa [#allocation21], 0
    %32 = vsyncpa [#allocation4], 0
    loop: start=0, step=1, limit=4
    $region2: #{tpu_custom_call.1} parent=1 // loop_pre_header
      _
    $region3: #{tpu_custom_call.1} parent=1 // loop_header
      %s34 = sphi 0, %s38
      %p35 = scmp.ge.s32.totalorder %s34, 4
      %s41 = sphi 0, %s53
      %s42 = sphi 0, %s49
      %s43 = sphi 0, %s41
      %s44 = sphi 0, %s42
      %s45 = sphi 0, %s43
      %s46 = sphi 0, %s44
      %s56 = sphi 0, %s58
      %s59 = sphi 0, %s56
      %s60 = sphi 0, %s59
      %s76 = sphi 0, %s60
      %s82 = sphi 0, %s84
      %s85 = sphi 0, %s82
      %s86 = sphi 0, %s85
      %s102 = sphi 0, %s86
      %s106 = sphi 0, %s106
      %s108 = sphi 0, %s106
      %s109 = sphi 0, %s108
      %s123 = sphi 0, %s109
      %s127 = sphi 0, %s127
      %s129 = sphi 0, %s127
      %s130 = sphi 0, %s129
      %s144 = sphi 0, %s130
      %s148 = sphi 0, %s148
      %s150 = sphi 0, %s148
      %s151 = sphi 0, %s150
      %s165 = sphi 0, %s151
      %s169 = sphi 0, %s169
      %s171 = sphi 0, %s169
      %s172 = sphi 0, %s171
      %s186 = sphi 0, %s172
      %s190 = sphi 0, %s190
      %s192 = sphi 0, %s190
      %s193 = sphi 0, %s192
      %s207 = sphi 0, %s193
      %s211 = sphi 0, %s211
      %s213 = sphi 0, %s211
      %s214 = sphi 0, %s213
      %s228 = sphi 0, %s214
      %s232 = sphi 0, %s232
      %s234 = sphi 0, %s232
      %s235 = sphi 0, %s234
      %s249 = sphi 0, %s235
      %s253 = sphi 0, %s253
      %s255 = sphi 0, %s253
      %s256 = sphi 0, %s255
      %s270 = sphi 0, %s256
      %s274 = sphi 0, %s274
      %s276 = sphi 0, %s274
      %s277 = sphi 0, %s276
      %s291 = sphi 0, %s277
      %s295 = sphi 0, %s295
      %s297 = sphi 0, %s295
      %s298 = sphi 0, %s297
      %s312 = sphi 0, %s298
      %s316 = sphi 0, %s316
      %s318 = sphi 0, %s316
      %s319 = sphi 0, %s318
      %s333 = sphi 0, %s319
      %s337 = sphi 0, %s337
      %s339 = sphi 0, %s337
      %s340 = sphi 0, %s339
      %s354 = sphi 0, %s340
      %s358 = sphi 0, %s358
      %s360 = sphi 0, %s358
      %s361 = sphi 0, %s360
      %s375 = sphi 0, %s361
      %s379 = sphi 0, %s379
      %s381 = sphi 0, %s379
      %s382 = sphi 0, %s381
      %s396 = sphi 0, %s382
      %s400 = sphi 0, %s400
      %s402 = sphi 0, %s400
      %s403 = sphi 0, %s402
      %s417 = sphi 0, %s403
      %s421 = sphi 0, %s421
      %s423 = sphi 0, %s421
      %s424 = sphi 0, %s423
      %s438 = sphi 0, %s424
      %s442 = sphi 0, %s442
      %s444 = sphi 0, %s442
      %s445 = sphi 0, %s444
      %s459 = sphi 0, %s445
      %s463 = sphi 0, %s463
      %s465 = sphi 0, %s463
      %s466 = sphi 0, %s465
      %s480 = sphi 0, %s466
      %s486 = sphi 0, %s488
      %s489 = sphi 0, %s486
      %s490 = sphi 0, %s489
      %s506 = sphi 0, %s490
    $region4: #{tpu_custom_call.1} parent=1 // loop_header_branch
      %37 = sbr.rel (%p35) target = $region8
    $region5: #{tpu_custom_call.1} parent=1 // loop_body
      %s39 = ssub.s32 %s34, 1
      %s40 = ssub.s32 %s34, 2
      %s47 = sadd.s32 1, %s42
      %p48 = scmp.ge.s32.totalorder %s47, 2
      %s49 = scalar_select %p48, 0, %s47
      %s50 = sadd.s32 1, %s41
      %s51 = scalar_select %p48, %s50, %s41
      %p52 = scmp.ge.s32.totalorder %s51, 1
      %s53 = scalar_select %p52, 0, %s51
      %s54 = ssub.s32 %s41, %s53
      %p55 = scmp.eq.s32.totalorder %s54, 0
      %s57 = sadd.s32 %s56, 1
      %s58 = scalar_select %p55, %s56, %s57
      %p61 = pneg %p55
      %p62 = scmp.eq.s32.totalorder %s34, 1
      %p63 = por %p61, %p62
      %p64 = scmp.ne.s32.totalorder %s56, %s59
      %p65 = scmp.eq.s32.totalorder %s34, 0
      %p66 = por %p64, %p65
      %p67 = scmp.ne.s32.totalorder %s56, %s59
      %p68 = scmp.eq.s32.totalorder %s39, 1
      %p69 = por %p67, %p68
      %p70 = scmp.ne.s32.totalorder %s59, %s60
      %p71 = scmp.eq.s32.totalorder %s39, 0
      %p72 = por %p70, %p71
      %p73 = scmp.ne.s32.totalorder %s59, %s60
      %p74 = scmp.eq.s32.totalorder %s40, 1
      %p75 = por %p73, %p74
      %p77 = scmp.ne.s32.totalorder %s60, %s76
      %p78 = scmp.eq.s32.totalorder %s40, 0
      %p79 = por %p77, %p78
      %s80 = ssub.s32 %s41, %s53
      %p81 = scmp.eq.s32.totalorder %s80, 0
      %s83 = sadd.s32 %s82, 1
      %s84 = scalar_select %p81, %s82, %s83
      %p87 = pneg %p81
      %p88 = scmp.eq.s32.totalorder %s34, 1
      %p89 = por %p87, %p88
      %p90 = scmp.ne.s32.totalorder %s82, %s85
      %p91 = scmp.eq.s32.totalorder %s34, 0
      %p92 = por %p90, %p91
      %p93 = scmp.ne.s32.totalorder %s82, %s85
      %p94 = scmp.eq.s32.totalorder %s39, 1
      %p95 = por %p93, %p94
      %p96 = scmp.ne.s32.totalorder %s85, %s86
      %p97 = scmp.eq.s32.totalorder %s39, 0
      %p98 = por %p96, %p97
      %p99 = scmp.ne.s32.totalorder %s85, %s86
      %p100 = scmp.eq.s32.totalorder %s40, 1
      %p101 = por %p99, %p100
      %p103 = scmp.ne.s32.totalorder %s86, %s102
      %p104 = scmp.eq.s32.totalorder %s40, 0
      %p105 = por %p103, %p104
      %s107 = sadd.s32 %s106, 1
      %p110 = scmp.eq.s32.totalorder %s34, 1
      %p111 = scmp.ne.s32.totalorder %s106, %s108
      %p112 = scmp.eq.s32.totalorder %s34, 0
      %p113 = por %p111, %p112
      %p114 = scmp.ne.s32.totalorder %s106, %s108
      %p115 = scmp.eq.s32.totalorder %s39, 1
      %p116 = por %p114, %p115
      %p117 = scmp.ne.s32.totalorder %s108, %s109
      %p118 = scmp.eq.s32.totalorder %s39, 0
      %p119 = por %p117, %p118
      %p120 = scmp.ne.s32.totalorder %s108, %s109
      %p121 = scmp.eq.s32.totalorder %s40, 1
      %p122 = por %p120, %p121
      %p124 = scmp.ne.s32.totalorder %s109, %s123
      %p125 = scmp.eq.s32.totalorder %s40, 0
      %p126 = por %p124, %p125
      %s128 = sadd.s32 %s127, 1
      %p131 = scmp.eq.s32.totalorder %s34, 1
      %p132 = scmp.ne.s32.totalorder %s127, %s129
      %p133 = scmp.eq.s32.totalorder %s34, 0
      %p134 = por %p132, %p133
      %p135 = scmp.ne.s32.totalorder %s127, %s129
      %p136 = scmp.eq.s32.totalorder %s39, 1
      %p137 = por %p135, %p136
      %p138 = scmp.ne.s32.totalorder %s129, %s130
      %p139 = scmp.eq.s32.totalorder %s39, 0
      %p140 = por %p138, %p139
      %p141 = scmp.ne.s32.totalorder %s129, %s130
      %p142 = scmp.eq.s32.totalorder %s40, 1
      %p143 = por %p141, %p142
      %p145 = scmp.ne.s32.totalorder %s130, %s144
      %p146 = scmp.eq.s32.totalorder %s40, 0
      %p147 = por %p145, %p146
      %s149 = sadd.s32 %s148, 1
      %p152 = scmp.eq.s32.totalorder %s34, 1
      %p153 = scmp.ne.s32.totalorder %s148, %s150
      %p154 = scmp.eq.s32.totalorder %s34, 0
      %p155 = por %p153, %p154
      %p156 = scmp.ne.s32.totalorder %s148, %s150
      %p157 = scmp.eq.s32.totalorder %s39, 1
      %p158 = por %p156, %p157
      %p159 = scmp.ne.s32.totalorder %s150, %s151
      %p160 = scmp.eq.s32.totalorder %s39, 0
      %p161 = por %p159, %p160
      %p162 = scmp.ne.s32.totalorder %s150, %s151
      %p163 = scmp.eq.s32.totalorder %s40, 1
      %p164 = por %p162, %p163
      %p166 = scmp.ne.s32.totalorder %s151, %s165
      %p167 = scmp.eq.s32.totalorder %s40, 0
      %p168 = por %p166, %p167
      %s170 = sadd.s32 %s169, 1
      %p173 = scmp.eq.s32.totalorder %s34, 1
      %p174 = scmp.ne.s32.totalorder %s169, %s171
      %p175 = scmp.eq.s32.totalorder %s34, 0
      %p176 = por %p174, %p175
      %p177 = scmp.ne.s32.totalorder %s169, %s171
      %p178 = scmp.eq.s32.totalorder %s39, 1
      %p179 = por %p177, %p178
      %p180 = scmp.ne.s32.totalorder %s171, %s172
      %p181 = scmp.eq.s32.totalorder %s39, 0
      %p182 = por %p180, %p181
      %p183 = scmp.ne.s32.totalorder %s171, %s172
      %p184 = scmp.eq.s32.totalorder %s40, 1
      %p185 = por %p183, %p184
      %p187 = scmp.ne.s32.totalorder %s172, %s186
      %p188 = scmp.eq.s32.totalorder %s40, 0
      %p189 = por %p187, %p188
      %s191 = sadd.s32 %s190, 1
      %p194 = scmp.eq.s32.totalorder %s34, 1
      %p195 = scmp.ne.s32.totalorder %s190, %s192
      %p196 = scmp.eq.s32.totalorder %s34, 0
      %p197 = por %p195, %p196
      %p198 = scmp.ne.s32.totalorder %s190, %s192
      %p199 = scmp.eq.s32.totalorder %s39, 1
      %p200 = por %p198, %p199
      %p201 = scmp.ne.s32.totalorder %s192, %s193
      %p202 = scmp.eq.s32.totalorder %s39, 0
      %p203 = por %p201, %p202
      %p204 = scmp.ne.s32.totalorder %s192, %s193
      %p205 = scmp.eq.s32.totalorder %s40, 1
      %p206 = por %p204, %p205
      %p208 = scmp.ne.s32.totalorder %s193, %s207
      %p209 = scmp.eq.s32.totalorder %s40, 0
      %p210 = por %p208, %p209
      %s212 = sadd.s32 %s211, 1
      %p215 = scmp.eq.s32.totalorder %s34, 1
      %p216 = scmp.ne.s32.totalorder %s211, %s213
      %p217 = scmp.eq.s32.totalorder %s34, 0
      %p218 = por %p216, %p217
      %p219 = scmp.ne.s32.totalorder %s211, %s213
      %p220 = scmp.eq.s32.totalorder %s39, 1
      %p221 = por %p219, %p220
      %p222 = scmp.ne.s32.totalorder %s213, %s214
      %p223 = scmp.eq.s32.totalorder %s39, 0
      %p224 = por %p222, %p223
      %p225 = scmp.ne.s32.totalorder %s213, %s214
      %p226 = scmp.eq.s32.totalorder %s40, 1
      %p227 = por %p225, %p226
      %p229 = scmp.ne.s32.totalorder %s214, %s228
      %p230 = scmp.eq.s32.totalorder %s40, 0
      %p231 = por %p229, %p230
      %s233 = sadd.s32 %s232, 1
      %p236 = scmp.eq.s32.totalorder %s34, 1
      %p237 = scmp.ne.s32.totalorder %s232, %s234
      %p238 = scmp.eq.s32.totalorder %s34, 0
      %p239 = por %p237, %p238
      %p240 = scmp.ne.s32.totalorder %s232, %s234
      %p241 = scmp.eq.s32.totalorder %s39, 1
      %p242 = por %p240, %p241
      %p243 = scmp.ne.s32.totalorder %s234, %s235
      %p244 = scmp.eq.s32.totalorder %s39, 0
      %p245 = por %p243, %p244
      %p246 = scmp.ne.s32.totalorder %s234, %s235
      %p247 = scmp.eq.s32.totalorder %s40, 1
      %p248 = por %p246, %p247
      %p250 = scmp.ne.s32.totalorder %s235, %s249
      %p251 = scmp.eq.s32.totalorder %s40, 0
      %p252 = por %p250, %p251
      %s254 = sadd.s32 %s253, 1
      %p257 = scmp.eq.s32.totalorder %s34, 1
      %p258 = scmp.ne.s32.totalorder %s253, %s255
      %p259 = scmp.eq.s32.totalorder %s34, 0
      %p260 = por %p258, %p259
      %p261 = scmp.ne.s32.totalorder %s253, %s255
      %p262 = scmp.eq.s32.totalorder %s39, 1
      %p263 = por %p261, %p262
      %p264 = scmp.ne.s32.totalorder %s255, %s256
      %p265 = scmp.eq.s32.totalorder %s39, 0
      %p266 = por %p264, %p265
      %p267 = scmp.ne.s32.totalorder %s255, %s256
      %p268 = scmp.eq.s32.totalorder %s40, 1
      %p269 = por %p267, %p268
      %p271 = scmp.ne.s32.totalorder %s256, %s270
      %p272 = scmp.eq.s32.totalorder %s40, 0
      %p273 = por %p271, %p272
      %s275 = sadd.s32 %s274, 1
      %p278 = scmp.eq.s32.totalorder %s34, 1
      %p279 = scmp.ne.s32.totalorder %s274, %s276
      %p280 = scmp.eq.s32.totalorder %s34, 0
      %p281 = por %p279, %p280
      %p282 = scmp.ne.s32.totalorder %s274, %s276
      %p283 = scmp.eq.s32.totalorder %s39, 1
      %p284 = por %p282, %p283
      %p285 = scmp.ne.s32.totalorder %s276, %s277
      %p286 = scmp.eq.s32.totalorder %s39, 0
      %p287 = por %p285, %p286
      %p288 = scmp.ne.s32.totalorder %s276, %s277
      %p289 = scmp.eq.s32.totalorder %s40, 1
      %p290 = por %p288, %p289
      %p292 = scmp.ne.s32.totalorder %s277, %s291
      %p293 = scmp.eq.s32.totalorder %s40, 0
      %p294 = por %p292, %p293
      %s296 = sadd.s32 %s295, 1
      %p299 = scmp.eq.s32.totalorder %s34, 1
      %p300 = scmp.ne.s32.totalorder %s295, %s297
      %p301 = scmp.eq.s32.totalorder %s34, 0
      %p302 = por %p300, %p301
      %p303 = scmp.ne.s32.totalorder %s295, %s297
      %p304 = scmp.eq.s32.totalorder %s39, 1
      %p305 = por %p303, %p304
      %p306 = scmp.ne.s32.totalorder %s297, %s298
      %p307 = scmp.eq.s32.totalorder %s39, 0
      %p308 = por %p306, %p307
      %p309 = scmp.ne.s32.totalorder %s297, %s298
      %p310 = scmp.eq.s32.totalorder %s40, 1
      %p311 = por %p309, %p310
      %p313 = scmp.ne.s32.totalorder %s298, %s312
      %p314 = scmp.eq.s32.totalorder %s40, 0
      %p315 = por %p313, %p314
      %s317 = sadd.s32 %s316, 1
      %p320 = scmp.eq.s32.totalorder %s34, 1
      %p321 = scmp.ne.s32.totalorder %s316, %s318
      %p322 = scmp.eq.s32.totalorder %s34, 0
      %p323 = por %p321, %p322
      %p324 = scmp.ne.s32.totalorder %s316, %s318
      %p325 = scmp.eq.s32.totalorder %s39, 1
      %p326 = por %p324, %p325
      %p327 = scmp.ne.s32.totalorder %s318, %s319
      %p328 = scmp.eq.s32.totalorder %s39, 0
      %p329 = por %p327, %p328
      %p330 = scmp.ne.s32.totalorder %s318, %s319
      %p331 = scmp.eq.s32.totalorder %s40, 1
      %p332 = por %p330, %p331
      %p334 = scmp.ne.s32.totalorder %s319, %s333
      %p335 = scmp.eq.s32.totalorder %s40, 0
      %p336 = por %p334, %p335
      %s338 = sadd.s32 %s337, 1
      %p341 = scmp.eq.s32.totalorder %s34, 1
      %p342 = scmp.ne.s32.totalorder %s337, %s339
      %p343 = scmp.eq.s32.totalorder %s34, 0
      %p344 = por %p342, %p343
      %p345 = scmp.ne.s32.totalorder %s337, %s339
      %p346 = scmp.eq.s32.totalorder %s39, 1
      %p347 = por %p345, %p346
      %p348 = scmp.ne.s32.totalorder %s339, %s340
      %p349 = scmp.eq.s32.totalorder %s39, 0
      %p350 = por %p348, %p349
      %p351 = scmp.ne.s32.totalorder %s339, %s340
      %p352 = scmp.eq.s32.totalorder %s40, 1
      %p353 = por %p351, %p352
      %p355 = scmp.ne.s32.totalorder %s340, %s354
      %p356 = scmp.eq.s32.totalorder %s40, 0
      %p357 = por %p355, %p356
      %s359 = sadd.s32 %s358, 1
      %p362 = scmp.eq.s32.totalorder %s34, 1
      %p363 = scmp.ne.s32.totalorder %s358, %s360
      %p364 = scmp.eq.s32.totalorder %s34, 0
      %p365 = por %p363, %p364
      %p366 = scmp.ne.s32.totalorder %s358, %s360
      %p367 = scmp.eq.s32.totalorder %s39, 1
      %p368 = por %p366, %p367
      %p369 = scmp.ne.s32.totalorder %s360, %s361
      %p370 = scmp.eq.s32.totalorder %s39, 0
      %p371 = por %p369, %p370
      %p372 = scmp.ne.s32.totalorder %s360, %s361
      %p373 = scmp.eq.s32.totalorder %s40, 1
      %p374 = por %p372, %p373
      %p376 = scmp.ne.s32.totalorder %s361, %s375
      %p377 = scmp.eq.s32.totalorder %s40, 0
      %p378 = por %p376, %p377
      %s380 = sadd.s32 %s379, 1
      %p383 = scmp.eq.s32.totalorder %s34, 1
      %p384 = scmp.ne.s32.totalorder %s379, %s381
      %p385 = scmp.eq.s32.totalorder %s34, 0
      %p386 = por %p384, %p385
      %p387 = scmp.ne.s32.totalorder %s379, %s381
      %p388 = scmp.eq.s32.totalorder %s39, 1
      %p389 = por %p387, %p388
      %p390 = scmp.ne.s32.totalorder %s381, %s382
      %p391 = scmp.eq.s32.totalorder %s39, 0
      %p392 = por %p390, %p391
      %p393 = scmp.ne.s32.totalorder %s381, %s382
      %p394 = scmp.eq.s32.totalorder %s40, 1
      %p395 = por %p393, %p394
      %p397 = scmp.ne.s32.totalorder %s382, %s396
      %p398 = scmp.eq.s32.totalorder %s40, 0
      %p399 = por %p397, %p398
      %s401 = sadd.s32 %s400, 1
      %p404 = scmp.eq.s32.totalorder %s34, 1
      %p405 = scmp.ne.s32.totalorder %s400, %s402
      %p406 = scmp.eq.s32.totalorder %s34, 0
      %p407 = por %p405, %p406
      %p408 = scmp.ne.s32.totalorder %s400, %s402
      %p409 = scmp.eq.s32.totalorder %s39, 1
      %p410 = por %p408, %p409
      %p411 = scmp.ne.s32.totalorder %s402, %s403
      %p412 = scmp.eq.s32.totalorder %s39, 0
      %p413 = por %p411, %p412
      %p414 = scmp.ne.s32.totalorder %s402, %s403
      %p415 = scmp.eq.s32.totalorder %s40, 1
      %p416 = por %p414, %p415
      %p418 = scmp.ne.s32.totalorder %s403, %s417
      %p419 = scmp.eq.s32.totalorder %s40, 0
      %p420 = por %p418, %p419
      %s422 = sadd.s32 %s421, 1
      %p425 = scmp.eq.s32.totalorder %s34, 1
      %p426 = scmp.ne.s32.totalorder %s421, %s423
      %p427 = scmp.eq.s32.totalorder %s34, 0
      %p428 = por %p426, %p427
      %p429 = scmp.ne.s32.totalorder %s421, %s423
      %p430 = scmp.eq.s32.totalorder %s39, 1
      %p431 = por %p429, %p430
      %p432 = scmp.ne.s32.totalorder %s423, %s424
      %p433 = scmp.eq.s32.totalorder %s39, 0
      %p434 = por %p432, %p433
      %p435 = scmp.ne.s32.totalorder %s423, %s424
      %p436 = scmp.eq.s32.totalorder %s40, 1
      %p437 = por %p435, %p436
      %p439 = scmp.ne.s32.totalorder %s424, %s438
      %p440 = scmp.eq.s32.totalorder %s40, 0
      %p441 = por %p439, %p440
      %s443 = sadd.s32 %s442, 1
      %p446 = scmp.eq.s32.totalorder %s34, 1
      %p447 = scmp.ne.s32.totalorder %s442, %s444
      %p448 = scmp.eq.s32.totalorder %s34, 0
      %p449 = por %p447, %p448
      %p450 = scmp.ne.s32.totalorder %s442, %s444
      %p451 = scmp.eq.s32.totalorder %s39, 1
      %p452 = por %p450, %p451
      %p453 = scmp.ne.s32.totalorder %s444, %s445
      %p454 = scmp.eq.s32.totalorder %s39, 0
      %p455 = por %p453, %p454
      %p456 = scmp.ne.s32.totalorder %s444, %s445
      %p457 = scmp.eq.s32.totalorder %s40, 1
      %p458 = por %p456, %p457
      %p460 = scmp.ne.s32.totalorder %s445, %s459
      %p461 = scmp.eq.s32.totalorder %s40, 0
      %p462 = por %p460, %p461
      %s464 = sadd.s32 %s463, 1
      %p467 = scmp.eq.s32.totalorder %s34, 1
      %p468 = scmp.ne.s32.totalorder %s463, %s465
      %p469 = scmp.eq.s32.totalorder %s34, 0
      %p470 = por %p468, %p469
      %p471 = scmp.ne.s32.totalorder %s463, %s465
      %p472 = scmp.eq.s32.totalorder %s39, 1
      %p473 = por %p471, %p472
      %p474 = scmp.ne.s32.totalorder %s465, %s466
      %p475 = scmp.eq.s32.totalorder %s39, 0
      %p476 = por %p474, %p475
      %p477 = scmp.ne.s32.totalorder %s465, %s466
      %p478 = scmp.eq.s32.totalorder %s40, 1
      %p479 = por %p477, %p478
      %p481 = scmp.ne.s32.totalorder %s466, %s480
      %p482 = scmp.eq.s32.totalorder %s40, 0
      %p483 = por %p481, %p482
      %s484 = ssub.s32 %s41, %s53
      %p485 = scmp.eq.s32.totalorder %s484, 0
      %s487 = sadd.s32 %s486, 1
      %s488 = scalar_select %p485, %s486, %s487
      %p491 = pneg %p485
      %p492 = scmp.eq.s32.totalorder %s34, 1
      %p493 = por %p491, %p492
      %p494 = scmp.ne.s32.totalorder %s486, %s489
      %p495 = scmp.eq.s32.totalorder %s34, 0
      %p496 = por %p494, %p495
      %p497 = scmp.ne.s32.totalorder %s486, %s489
      %p498 = scmp.eq.s32.totalorder %s39, 1
      %p499 = por %p497, %p498
      %p500 = scmp.ne.s32.totalorder %s489, %s490
      %p501 = scmp.eq.s32.totalorder %s39, 0
      %p502 = por %p500, %p501
      %p503 = scmp.ne.s32.totalorder %s489, %s490
      %p504 = scmp.eq.s32.totalorder %s40, 1
      %p505 = por %p503, %p504
      %p507 = scmp.ne.s32.totalorder %s490, %s506
      %p508 = scmp.eq.s32.totalorder %s40, 0
      %p509 = por %p507, %p508
      %p510 = scmp.le.s32.totalorder 1, %s34
      %p511 = scmp.lt.s32.totalorder %s34, 3
      %p512 = pnand %p510, %p511
      %p513 = pneg %p512
      // Predicated region
      $region9: #{tpu_custom_call.1} parent=5 // pred_check
        _
      $region10: #{tpu_custom_call.1} parent=5 // pred_check_branch
        %515 = sbr.rel (%p512) target = $region12
      $region11: #{tpu_custom_call.1} parent=5 // pred_region
        %s516 = ssub.s32 %s34, 1
        // Predicated region
        $region13: #{tpu_custom_call.1} parent=11 // pred_check
          %p517 = pneg %p72
        $region14: #{tpu_custom_call.1} parent=11 // pred_check_branch
          %519 = sbr.rel (%p517) target = $region16
        $region15: #{tpu_custom_call.1} parent=11 // pred_region
          %s520 = smul.u32 4, %s43
          %s522 = ssub.s32 256, 256
          %523 = vsyncadd [#allocation3], %s522
          %s524 = smul.addr %s520, 64
          %s525 = scalar_lea.hbm %s0, %s524
          %s526 = sshll.u32 [#allocation2], 4
          %s527 = int_to_ptr.vmem [resolvable:$true] %s526
          %532 = dma.hbm_to_vmem [thread:$0]  %s525, 256, %s527, [#allocation3], 64, 64, 4
        $region16: #{tpu_custom_call.1} parent=11 // pred_fallthru
          _
        // Predicated region
        $region17: #{tpu_custom_call.1} parent=11 // pred_check
          %p533 = pneg %p98
        $region18: #{tpu_custom_call.1} parent=11 // pred_check_branch
          %535 = sbr.rel (%p533) target = $region20
        $region19: #{tpu_custom_call.1} parent=11 // pred_region
          %s536 = smul.u32 4, %s43
          %p537 = scmp.lt.s32.totalorder %s536, 3
          %s538 = scalar_select %p537, %s536, 3
          %s539 = smul.addr %s538, 8
          %s540 = scalar_lea.vmem %s1, %s539
          %s541 = smul.u32 4, %s43
        $region20: #{tpu_custom_call.1} parent=11 // pred_fallthru
          _
        // Predicated region
        $region21: #{tpu_custom_call.1} parent=11 // pred_check
          %p542 = pneg %p119
        $region22: #{tpu_custom_call.1} parent=11 // pred_check_branch
          %544 = sbr.rel (%p542) target = $region24
        $region23: #{tpu_custom_call.1} parent=11 // pred_region
          %s546 = ssub.s32 32, 32
          %547 = vsyncadd [#allocation6], %s546
          %s548 = sshll.u32 [#allocation5], 4
          %s549 = int_to_ptr.vmem [resolvable:$true] %s548
          %554 = dma.hbm_to_vmem [thread:$0]  %s2, 32, %s549, [#allocation6], 16, 16, 1
        $region24: #{tpu_custom_call.1} parent=11 // pred_fallthru
          _
        // Predicated region
        $region25: #{tpu_custom_call.1} parent=11 // pred_check
          %p555 = pneg %p140
        $region26: #{tpu_custom_call.1} parent=11 // pred_check_branch
          %557 = sbr.rel (%p555) target = $region28
        $region27: #{tpu_custom_call.1} parent=11 // pred_region
          %s559 = ssub.s32 32, 32
          %560 = vsyncadd [#allocation6], %s559
          %s561 = sshll.u32 [#allocation7], 4
          %s562 = int_to_ptr.vmem [resolvable:$true] %s561
          %567 = dma.hbm_to_vmem [thread:$0]  %s3, 32, %s562, [#allocation6], 16, 16, 1
        $region28: #{tpu_custom_call.1} parent=11 // pred_fallthru
          _
        // Predicated region
        $region29: #{tpu_custom_call.1} parent=11 // pred_check
          %p568 = pneg %p161
        $region30: #{tpu_custom_call.1} parent=11 // pred_check_branch
          %570 = sbr.rel (%p568) target = $region32
        $region31: #{tpu_custom_call.1} parent=11 // pred_region
          %s572 = ssub.s32 32, 32
          %573 = vsyncadd [#allocation9], %s572
          %s574 = sshll.u32 [#allocation8], 4
          %s575 = int_to_ptr.vmem [resolvable:$true] %s574
          %580 = dma.hbm_to_vmem [thread:$0]  %s4, 32, %s575, [#allocation9], 16, 16, 1
        $region32: #{tpu_custom_call.1} parent=11 // pred_fallthru
          _
        // Predicated region
        $region33: #{tpu_custom_call.1} parent=11 // pred_check
          %p581 = pneg %p182
        $region34: #{tpu_custom_call.1} parent=11 // pred_check_branch
          %583 = sbr.rel (%p581) target = $region36
        $region35: #{tpu_custom_call.1} parent=11 // pred_region
          %s585 = ssub.s32 32, 32
          %586 = vsyncadd [#allocation9], %s585
          %s587 = sshll.u32 [#allocation10], 4
          %s588 = int_to_ptr.vmem [resolvable:$true] %s587
          %593 = dma.hbm_to_vmem [thread:$0]  %s5, 32, %s588, [#allocation9], 16, 16, 1
        $region36: #{tpu_custom_call.1} parent=11 // pred_fallthru
          _
        // Predicated region
        $region37: #{tpu_custom_call.1} parent=11 // pred_check
          %p594 = pneg %p203
        $region38: #{tpu_custom_call.1} parent=11 // pred_check_branch
          %596 = sbr.rel (%p594) target = $region40
        $region39: #{tpu_custom_call.1} parent=11 // pred_region
          %s598 = ssub.s32 32, 32
          %599 = vsyncadd [#allocation12], %s598
          %s600 = sshll.u32 [#allocation11], 4
          %s601 = int_to_ptr.vmem [resolvable:$true] %s600
          %606 = dma.hbm_to_vmem [thread:$0]  %s6, 32, %s601, [#allocation12], 16, 16, 1
        $region40: #{tpu_custom_call.1} parent=11 // pred_fallthru
          _
        // Predicated region
        $region41: #{tpu_custom_call.1} parent=11 // pred_check
          %p607 = pneg %p224
        $region42: #{tpu_custom_call.1} parent=11 // pred_check_branch
          %609 = sbr.rel (%p607) target = $region44
        $region43: #{tpu_custom_call.1} parent=11 // pred_region
          %s611 = ssub.s32 32, 32
          %612 = vsyncadd [#allocation12], %s611
          %s613 = sshll.u32 [#allocation13], 4
          %s614 = int_to_ptr.vmem [resolvable:$true] %s613
          %619 = dma.hbm_to_vmem [thread:$0]  %s7, 32, %s614, [#allocation12], 16, 16, 1
        $region44: #{tpu_custom_call.1} parent=11 // pred_fallthru
          _
        // Predicated region
        $region45: #{tpu_custom_call.1} parent=11 // pred_check
          %p620 = pneg %p245
        $region46: #{tpu_custom_call.1} parent=11 // pred_check_branch
          %622 = sbr.rel (%p620) target = $region48
        $region47: #{tpu_custom_call.1} parent=11 // pred_region
          _
        $region48: #{tpu_custom_call.1} parent=11 // pred_fallthru
          _
        // Predicated region
        $region49: #{tpu_custom_call.1} parent=11 // pred_check
          %p623 = pneg %p266
        $region50: #{tpu_custom_call.1} parent=11 // pred_check_branch
          %625 = sbr.rel (%p623) target = $region52
        $region51: #{tpu_custom_call.1} parent=11 // pred_region
          %s627 = ssub.s32 32, 32
          %628 = vsyncadd [#allocation15], %s627
          %s629 = sshll.u32 [#allocation14], 4
          %s630 = int_to_ptr.vmem [resolvable:$true] %s629
          %635 = dma.hbm_to_vmem [thread:$0]  %s9, 32, %s630, [#allocation15], 16, 16, 1
        $region52: #{tpu_custom_call.1} parent=11 // pred_fallthru
          _
        // Predicated region
        $region53: #{tpu_custom_call.1} parent=11 // pred_check
          %p636 = pneg %p287
        $region54: #{tpu_custom_call.1} parent=11 // pred_check_branch
          %638 = sbr.rel (%p636) target = $region56
        $region55: #{tpu_custom_call.1} parent=11 // pred_region
          _
        $region56: #{tpu_custom_call.1} parent=11 // pred_fallthru
          _
        // Predicated region
        $region57: #{tpu_custom_call.1} parent=11 // pred_check
          %p639 = pneg %p308
        $region58: #{tpu_custom_call.1} parent=11 // pred_check_branch
          %641 = sbr.rel (%p639) target = $region60
        $region59: #{tpu_custom_call.1} parent=11 // pred_region
          %s643 = ssub.s32 32, 32
          %644 = vsyncadd [#allocation15], %s643
          %s645 = sshll.u32 [#allocation16], 4
          %s646 = int_to_ptr.vmem [resolvable:$true] %s645
          %651 = dma.hbm_to_vmem [thread:$0]  %s11, 32, %s646, [#allocation15], 16, 16, 1
        $region60: #{tpu_custom_call.1} parent=11 // pred_fallthru
          _
        // Predicated region
        $region61: #{tpu_custom_call.1} parent=11 // pred_check
          %p652 = pneg %p329
        $region62: #{tpu_custom_call.1} parent=11 // pred_check_branch
          %654 = sbr.rel (%p652) target = $region64
        $region63: #{tpu_custom_call.1} parent=11 // pred_region
          _
        $region64: #{tpu_custom_call.1} parent=11 // pred_fallthru
          _
        // Predicated region
        $region65: #{tpu_custom_call.1} parent=11 // pred_check
          %p655 = pneg %p350
        $region66: #{tpu_custom_call.1} parent=11 // pred_check_branch
          %657 = sbr.rel (%p655) target = $region68
        $region67: #{tpu_custom_call.1} parent=11 // pred_region
          %s659 = ssub.s32 32, 32
          %660 = vsyncadd [#allocation18], %s659
          %s661 = sshll.u32 [#allocation17], 4
          %s662 = int_to_ptr.vmem [resolvable:$true] %s661
          %667 = dma.hbm_to_vmem [thread:$0]  %s13, 32, %s662, [#allocation18], 16, 16, 1
        $region68: #{tpu_custom_call.1} parent=11 // pred_fallthru
          _
        // Predicated region
        $region69: #{tpu_custom_call.1} parent=11 // pred_check
          %p668 = pneg %p371
        $region70: #{tpu_custom_call.1} parent=11 // pred_check_branch
          %670 = sbr.rel (%p668) target = $region72
        $region71: #{tpu_custom_call.1} parent=11 // pred_region
          _
        $region72: #{tpu_custom_call.1} parent=11 // pred_fallthru
          _
        // Predicated region
        $region73: #{tpu_custom_call.1} parent=11 // pred_check
          %p671 = pneg %p392
        $region74: #{tpu_custom_call.1} parent=11 // pred_check_branch
          %673 = sbr.rel (%p671) target = $region76
        $region75: #{tpu_custom_call.1} parent=11 // pred_region
          %s675 = ssub.s32 32, 32
          %676 = vsyncadd [#allocation18], %s675
          %s677 = sshll.u32 [#allocation19], 4
          %s678 = int_to_ptr.vmem [resolvable:$true] %s677
          %683 = dma.hbm_to_vmem [thread:$0]  %s15, 32, %s678, [#allocation18], 16, 16, 1
        $region76: #{tpu_custom_call.1} parent=11 // pred_fallthru
          _
        // Predicated region
        $region77: #{tpu_custom_call.1} parent=11 // pred_check
          %p684 = pneg %p413
        $region78: #{tpu_custom_call.1} parent=11 // pred_check_branch
          %686 = sbr.rel (%p684) target = $region80
        $region79: #{tpu_custom_call.1} parent=11 // pred_region
          _
        $region80: #{tpu_custom_call.1} parent=11 // pred_fallthru
          _
        // Predicated region
        $region81: #{tpu_custom_call.1} parent=11 // pred_check
          %p687 = pneg %p434
        $region82: #{tpu_custom_call.1} parent=11 // pred_check_branch
          %689 = sbr.rel (%p687) target = $region84
        $region83: #{tpu_custom_call.1} parent=11 // pred_region
          %s691 = ssub.s32 32, 32
          %692 = vsyncadd [#allocation21], %s691
          %s693 = sshll.u32 [#allocation20], 4
          %s694 = int_to_ptr.vmem [resolvable:$true] %s693
          %699 = dma.hbm_to_vmem [thread:$0]  %s17, 32, %s694, [#allocation21], 16, 16, 1
        $region84: #{tpu_custom_call.1} parent=11 // pred_fallthru
          _
        // Predicated region
        $region85: #{tpu_custom_call.1} parent=11 // pred_check
          %p700 = pneg %p455
        $region86: #{tpu_custom_call.1} parent=11 // pred_check_branch
          %702 = sbr.rel (%p700) target = $region88
        $region87: #{tpu_custom_call.1} parent=11 // pred_region
          _
        $region88: #{tpu_custom_call.1} parent=11 // pred_fallthru
          _
        // Predicated region
        $region89: #{tpu_custom_call.1} parent=11 // pred_check
          %p703 = pneg %p476
        $region90: #{tpu_custom_call.1} parent=11 // pred_check_branch
          %705 = sbr.rel (%p703) target = $region92
        $region91: #{tpu_custom_call.1} parent=11 // pred_region
          _
        $region92: #{tpu_custom_call.1} parent=11 // pred_fallthru
          _
      $region12: #{tpu_custom_call.1} parent=5 // pred_fallthru
        _
      %p706 = scmp.lt.s32.totalorder %s34, 2
      // Predicated region
      $region93: #{tpu_custom_call.1} parent=5 // pred_check
        %p707 = pneg %p706
      $region94: #{tpu_custom_call.1} parent=5 // pred_check_branch
        %709 = sbr.rel (%p707) target = $region96
      $region95: #{tpu_custom_call.1} parent=5 // pred_region
        _
      $region96: #{tpu_custom_call.1} parent=5 // pred_fallthru
        _
      %p710 = scmp.le.s32.totalorder 1, %s34
      %p711 = scmp.lt.s32.totalorder %s34, 3
      %p712 = pnand %p710, %p711
      %p713 = pneg %p712
      // Predicated region
      $region97: #{tpu_custom_call.1} parent=5 // pred_check
        _
      $region98: #{tpu_custom_call.1} parent=5 // pred_check_branch
        %715 = sbr.rel (%p712) target = $region100
      $region99: #{tpu_custom_call.1} parent=5 // pred_region
        %s716 = ssub.s32 %s34, 1
        // Predicated region
        $region101: #{tpu_custom_call.1} parent=99 // pred_check
          %p717 = pneg %p72
        $region102: #{tpu_custom_call.1} parent=99 // pred_check_branch
          %719 = sbr.rel (%p717) target = $region104
        $region103: #{tpu_custom_call.1} parent=99 // pred_region
          %720 = dma.done [#allocation3], 256
        $region104: #{tpu_custom_call.1} parent=99 // pred_fallthru
          _
        // Predicated region
        $region105: #{tpu_custom_call.1} parent=99 // pred_check
          %p721 = pneg %p119
        $region106: #{tpu_custom_call.1} parent=99 // pred_check_branch
          %723 = sbr.rel (%p721) target = $region108
        $region107: #{tpu_custom_call.1} parent=99 // pred_region
          %724 = dma.done [#allocation6], 32
        $region108: #{tpu_custom_call.1} parent=99 // pred_fallthru
          _
        // Predicated region
        $region109: #{tpu_custom_call.1} parent=99 // pred_check
          %p725 = pneg %p140
        $region110: #{tpu_custom_call.1} parent=99 // pred_check_branch
          %727 = sbr.rel (%p725) target = $region112
        $region111: #{tpu_custom_call.1} parent=99 // pred_region
          %728 = dma.done [#allocation6], 32
        $region112: #{tpu_custom_call.1} parent=99 // pred_fallthru
          _
        // Predicated region
        $region113: #{tpu_custom_call.1} parent=99 // pred_check
          %p729 = pneg %p161
        $region114: #{tpu_custom_call.1} parent=99 // pred_check_branch
          %731 = sbr.rel (%p729) target = $region116
        $region115: #{tpu_custom_call.1} parent=99 // pred_region
          %732 = dma.done [#allocation9], 32
        $region116: #{tpu_custom_call.1} parent=99 // pred_fallthru
          _
        // Predicated region
        $region117: #{tpu_custom_call.1} parent=99 // pred_check
          %p733 = pneg %p182
        $region118: #{tpu_custom_call.1} parent=99 // pred_check_branch
          %735 = sbr.rel (%p733) target = $region120
        $region119: #{tpu_custom_call.1} parent=99 // pred_region
          %736 = dma.done [#allocation9], 32
        $region120: #{tpu_custom_call.1} parent=99 // pred_fallthru
          _
        // Predicated region
        $region121: #{tpu_custom_call.1} parent=99 // pred_check
          %p737 = pneg %p203
        $region122: #{tpu_custom_call.1} parent=99 // pred_check_branch
          %739 = sbr.rel (%p737) target = $region124
        $region123: #{tpu_custom_call.1} parent=99 // pred_region
          %740 = dma.done [#allocation12], 32
        $region124: #{tpu_custom_call.1} parent=99 // pred_fallthru
          _
        // Predicated region
        $region125: #{tpu_custom_call.1} parent=99 // pred_check
          %p741 = pneg %p224
        $region126: #{tpu_custom_call.1} parent=99 // pred_check_branch
          %743 = sbr.rel (%p741) target = $region128
        $region127: #{tpu_custom_call.1} parent=99 // pred_region
          %744 = dma.done [#allocation12], 32
        $region128: #{tpu_custom_call.1} parent=99 // pred_fallthru
          _
        // Predicated region
        $region129: #{tpu_custom_call.1} parent=99 // pred_check
          %p745 = pneg %p266
        $region130: #{tpu_custom_call.1} parent=99 // pred_check_branch
          %747 = sbr.rel (%p745) target = $region132
        $region131: #{tpu_custom_call.1} parent=99 // pred_region
          %748 = dma.done [#allocation15], 32
        $region132: #{tpu_custom_call.1} parent=99 // pred_fallthru
          _
        // Predicated region
        $region133: #{tpu_custom_call.1} parent=99 // pred_check
          %p749 = pneg %p308
        $region134: #{tpu_custom_call.1} parent=99 // pred_check_branch
          %751 = sbr.rel (%p749) target = $region136
        $region135: #{tpu_custom_call.1} parent=99 // pred_region
          %752 = dma.done [#allocation15], 32
        $region136: #{tpu_custom_call.1} parent=99 // pred_fallthru
          _
        // Predicated region
        $region137: #{tpu_custom_call.1} parent=99 // pred_check
          %p753 = pneg %p350
        $region138: #{tpu_custom_call.1} parent=99 // pred_check_branch
          %755 = sbr.rel (%p753) target = $region140
        $region139: #{tpu_custom_call.1} parent=99 // pred_region
          %756 = dma.done [#allocation18], 32
        $region140: #{tpu_custom_call.1} parent=99 // pred_fallthru
          _
        // Predicated region
        $region141: #{tpu_custom_call.1} parent=99 // pred_check
          %p757 = pneg %p392
        $region142: #{tpu_custom_call.1} parent=99 // pred_check_branch
          %759 = sbr.rel (%p757) target = $region144
        $region143: #{tpu_custom_call.1} parent=99 // pred_region
          %760 = dma.done [#allocation18], 32
        $region144: #{tpu_custom_call.1} parent=99 // pred_fallthru
          _
        // Predicated region
        $region145: #{tpu_custom_call.1} parent=99 // pred_check
          %p761 = pneg %p434
        $region146: #{tpu_custom_call.1} parent=99 // pred_check_branch
          %763 = sbr.rel (%p761) target = $region148
        $region147: #{tpu_custom_call.1} parent=99 // pred_region
          %764 = dma.done [#allocation21], 32
        $region148: #{tpu_custom_call.1} parent=99 // pred_fallthru
          _
        %p765 = pneg %p72
        %p766 = pneg %p69
        %s767 = smul.u32 4, %s43
        %p768 = scmp.lt.s32.totalorder %s767, 3
        %s769 = scalar_select %p768, %s767, 3
        %s770 = smul.addr %s769, 8
        %s771 = scalar_lea.vmem %s1, %s770
        %p772 = pneg %p98
        %p773 = pneg %p95
        %p774 = pneg %p119
        %p775 = pneg %p116
        %p776 = pneg %p140
        %p777 = pneg %p137
        %p778 = pneg %p161
        %p779 = pneg %p158
        %p780 = pneg %p182
        %p781 = pneg %p179
        %p782 = pneg %p203
        %p783 = pneg %p200
        %p784 = pneg %p224
        %p785 = pneg %p221
        %p786 = pneg %p245
        %p787 = pneg %p242
        %p788 = pneg %p266
        %p789 = pneg %p263
        %p790 = pneg %p287
        %p791 = pneg %p284
        %p792 = pneg %p308
        %p793 = pneg %p305
        %p794 = pneg %p329
        %p795 = pneg %p326
        %p796 = pneg %p350
        %p797 = pneg %p347
        %p798 = pneg %p371
        %p799 = pneg %p368
        %p800 = pneg %p392
        %p801 = pneg %p389
        %p802 = pneg %p413
        %p803 = pneg %p410
        %p804 = pneg %p434
        %p805 = pneg %p431
        %p806 = pneg %p455
        %p807 = pneg %p452
        %p808 = pneg %p476
        %p809 = pneg %p473
        %p810 = pneg %p502
        %p811 = pneg %p499
        %s812 = smul.u32 4, %s43
        %s813 = smul.u32 4, %s43
        %p814 = scmp.lt.s32.totalorder %s813, 3
        %s815 = scalar_select %p814, %s813, 3
        %s816 = smul.addr %s815, 8
        %s817 = scalar_lea.vmem %s1, %s816
        %s818 = smul.u32 4, %s43
        %s819 = smul.u32 4, %s43
        %p821 = scmp.eq.s32.totalorder %s44, 0
        // Predicated region
        $region149: #{tpu_custom_call.1} parent=99 // pred_check
          %p822 = pneg %p821
        $region150: #{tpu_custom_call.1} parent=99 // pred_check_branch
          %824 = sbr.rel (%p822) target = $region152
        $region151: #{tpu_custom_call.1} parent=99 // pred_region
          %v825 = vld [vmem:[%s817] sm:$0xff]
          %v826 = vld [vmem:[%s817 + $0x8] sm:$0xff]
          %v827 = vld [vmem:[%s817 + $0x10] sm:$0xff]
          %v828 = vld [vmem:[%s817 + $0x18] sm:$0xff]
          %vm829 = vcmask 261120
          %830 = vst.msk [vmem:[#allocation22] sm:$0xff] %vm829, %v825
          %831 = vst.msk [vmem:[#allocation22 + $0x8] sm:$0xff] %vm829, %v826
          %832 = vst.msk [vmem:[#allocation22 + $0x10] sm:$0xff] %vm829, %v827
          %833 = vst.msk [vmem:[#allocation22 + $0x18] sm:$0xff] %vm829, %v828
        $region152: #{tpu_custom_call.1} parent=99 // pred_fallthru
          _
        %v834 = vld [vmem:[#allocation22] sm:$0xff]
        %v835 = vld [vmem:[#allocation22 + $0x8] sm:$0xff]
        %v836 = vld [vmem:[#allocation22 + $0x10] sm:$0xff]
        %v837 = vld [vmem:[#allocation22 + $0x18] sm:$0xff]
        %v838 = vld [vmem:[#allocation2] sm:$0xf]
        %v839 = vld [vmem:[#allocation2 + $0x4] sm:$0xf]
        %v840 = vld [vmem:[#allocation2 + $0x8] sm:$0xf]
        %v841 = vld [vmem:[#allocation2 + $0xc] sm:$0xf]
        %v842 = vunpack.c.l.bf16 %v838
        %v843 = vunpack.c.l.bf16 %v839
        %v844 = vunpack.c.l.bf16 %v840
        %v845 = vunpack.c.l.bf16 %v841
        %s846 = scalar_lea.vmem [#allocation5], %s44
        %v847 = vld [vmem:[%s846] sm:$0x1]
        %s848 = scalar_lea.vmem [#allocation7], %s44
        %v849 = vld [vmem:[%s848] sm:$0x1]
        %vm850 = vcmask 261120
        %v851 = vsel %vm850, %v834, 0.0
        %852 = vadd.xlane.f32.xlu0 %v851
        %v853 = vpop.xlane.xlu0 %852
        %v854 = vsel %vm850, %v835, 0.0
        %855 = vadd.xlane.f32.xlu0 %v854
        %v856 = vpop.xlane.xlu0 %855
        %v857 = vsel %vm850, %v836, 0.0
        %858 = vadd.xlane.f32.xlu0 %v857
        %v859 = vpop.xlane.xlu0 %858
        %v860 = vsel %vm850, %v837, 0.0
        %861 = vadd.xlane.f32.xlu0 %v860
        %v862 = vpop.xlane.xlu0 %861
        %v863 = vrcp.pop 32.0
        %v864 = vmul.f32 %v853, %v863
        %v865 = vmul.f32 %v856, %v863
        %v866 = vmul.f32 %v859, %v863
        %v867 = vmul.f32 %v862, %v863
        %v868 = vsub.f32 %v834, %v864
        %v869 = vsub.f32 %v835, %v865
        %v870 = vsub.f32 %v836, %v866
        %v871 = vsub.f32 %v837, %v867
        %v872 = vmul.f32 %v868, %v868
        %v873 = vmul.f32 %v869, %v869
        %v874 = vmul.f32 %v870, %v870
        %v875 = vmul.f32 %v871, %v871
        %v876 = vsel %vm850, %v872, 0.0
        %877 = vadd.xlane.f32.xlu0 %v876
        %v878 = vpop.xlane.xlu0 %877
        %v879 = vsel %vm850, %v873, 0.0
        %880 = vadd.xlane.f32.xlu0 %v879
        %v881 = vpop.xlane.xlu0 %880
        %v882 = vsel %vm850, %v874, 0.0
        %883 = vadd.xlane.f32.xlu0 %v882
        %v884 = vpop.xlane.xlu0 %883
        %v885 = vsel %vm850, %v875, 0.0
        %886 = vadd.xlane.f32.xlu0 %v885
        %v887 = vpop.xlane.xlu0 %886
        %v888 = vmul.f32 %v878, %v863
        %v889 = vmul.f32 %v881, %v863
        %v890 = vmul.f32 %v884, %v863
        %v891 = vmul.f32 %v887, %v863
        %v892 = vadd.f32 %v888, 1e-05
        %v893 = vadd.f32 %v889, 1e-05
        %v894 = vadd.f32 %v890, 1e-05
        %v895 = vadd.f32 %v891, 1e-05
        %v896 = vrsqrt.pop %v892
        %v897 = vrsqrt.pop %v893
        %v898 = vrsqrt.pop %v894
        %v899 = vrsqrt.pop %v895
        %v900 = vmul.f32 %v868, %v896
        %v901 = vmul.f32 %v869, %v897
        %v902 = vmul.f32 %v870, %v898
        %v903 = vmul.f32 %v871, %v899
        %v905 = vlaneseq
        %v906 = vshrl.u32 %v905, 7
        %v907 = vsub.s32 0, %v906
        %v908 = vrot.slane %v847, %v907
        %v910 = vmul.f32 %v900, %v908
        %v911 = vmul.f32 %v901, %v908
        %v912 = vmul.f32 %v902, %v908
        %v913 = vmul.f32 %v903, %v908
        %v915 = vlaneseq
        %v916 = vshrl.u32 %v915, 7
        %v917 = vsub.s32 0, %v916
        %v918 = vrot.slane %v849, %v917
        %v920 = vadd.f32 %v910, %v918
        %v921 = vadd.f32 %v911, %v918
        %v922 = vadd.f32 %v912, %v918
        %v923 = vadd.f32 %v913, %v918
        %s924 = scalar_lea.vmem [#allocation8], %s44
        %v925 = vld [vmem:[%s924] sm:$0x1]
        %s926 = scalar_lea.vmem [#allocation10], %s44
        %v927 = vld [vmem:[%s926] sm:$0x1]
        %v928 = vsel %vm850, %v842, 0.0
        %929 = vadd.xlane.f32.xlu0 %v928
        %v930 = vpop.xlane.xlu0 %929
        %v931 = vsel %vm850, %v843, 0.0
        %932 = vadd.xlane.f32.xlu0 %v931
        %v933 = vpop.xlane.xlu0 %932
        %v934 = vsel %vm850, %v844, 0.0
        %935 = vadd.xlane.f32.xlu0 %v934
        %v936 = vpop.xlane.xlu0 %935
        %v937 = vsel %vm850, %v845, 0.0
        %938 = vadd.xlane.f32.xlu0 %v937
        %v939 = vpop.xlane.xlu0 %938
        %v940 = vmul.f32 %v930, %v863
        %v941 = vmul.f32 %v933, %v863
        %v942 = vmul.f32 %v936, %v863
        %v943 = vmul.f32 %v939, %v863
        %v944 = vsub.f32 %v842, %v940
        %v945 = vsub.f32 %v843, %v941
        %v946 = vsub.f32 %v844, %v942
        %v947 = vsub.f32 %v845, %v943
        %v948 = vmul.f32 %v944, %v944
        %v949 = vmul.f32 %v945, %v945
        %v950 = vmul.f32 %v946, %v946
        %v951 = vmul.f32 %v947, %v947
        %v952 = vsel %vm850, %v948, 0.0
        %953 = vadd.xlane.f32.xlu0 %v952
        %v954 = vpop.xlane.xlu0 %953
        %v955 = vsel %vm850, %v949, 0.0
        %956 = vadd.xlane.f32.xlu0 %v955
        %v957 = vpop.xlane.xlu0 %956
        %v958 = vsel %vm850, %v950, 0.0
        %959 = vadd.xlane.f32.xlu0 %v958
        %v960 = vpop.xlane.xlu0 %959
        %v961 = vsel %vm850, %v951, 0.0
        %962 = vadd.xlane.f32.xlu0 %v961
        %v963 = vpop.xlane.xlu0 %962
        %v964 = vmul.f32 %v954, %v863
        %v965 = vmul.f32 %v957, %v863
        %v966 = vmul.f32 %v960, %v863
        %v967 = vmul.f32 %v963, %v863
        %v968 = vadd.f32 %v964, 1e-05
        %v969 = vadd.f32 %v965, 1e-05
        %v970 = vadd.f32 %v966, 1e-05
        %v971 = vadd.f32 %v967, 1e-05
        %v972 = vrsqrt.pop %v968
        %v973 = vrsqrt.pop %v969
        %v974 = vrsqrt.pop %v970
        %v975 = vrsqrt.pop %v971
        %v976 = vmul.f32 %v944, %v972
        %v977 = vmul.f32 %v945, %v973
        %v978 = vmul.f32 %v946, %v974
        %v979 = vmul.f32 %v947, %v975
        %v981 = vlaneseq
        %v982 = vshrl.u32 %v981, 7
        %v983 = vsub.s32 0, %v982
        %v984 = vrot.slane %v925, %v983
        %v986 = vmul.f32 %v976, %v984
        %v987 = vmul.f32 %v977, %v984
        %v988 = vmul.f32 %v978, %v984
        %v989 = vmul.f32 %v979, %v984
        %v991 = vlaneseq
        %v992 = vshrl.u32 %v991, 7
        %v993 = vsub.s32 0, %v992
        %v994 = vrot.slane %v927, %v993
        %v996 = vadd.f32 %v986, %v994
        %v997 = vadd.f32 %v987, %v994
        %v998 = vadd.f32 %v988, %v994
        %v999 = vadd.f32 %v989, %v994
        %v1000 = vpack.c.bf16 %v921, %v920
        %v1001 = vpack.c.bf16 %v923, %v922
        %s1002 = smul.u32 %s44, 4
        %s1003 = smul.addr %s1002, 4
        %s1004 = scalar_lea.vmem %s8, %s1003
        %v1005 = vld [vmem:[%s1004] sm:$0xf]
        %v1006 = vld [vmem:[%s1004 + $0x4] sm:$0xf]
        %v1007 = vld [vmem:[%s1004 + $0x8] sm:$0xf]
        %v1008 = vld [vmem:[%s1004 + $0xc] sm:$0xf]
        %s1009 = scalar_lea.vmem [#allocation14], %s44
        %v1010 = vld [vmem:[%s1009] sm:$0x1]
        %v1012 = vlaneseq
        %v1013 = vshrl.u32 %v1012, 7
        %v1014 = vsub.s32 0, %v1013
        %v1015 = vrot.slane %v1010, %v1014
        %v1021 = vunpack.c.l.b16 %v1005
        %v1022 = vunpack.c.l.b16 %v1006
        %v1023 = vunpack.c.l.b16 %v1007
        %v1024 = vunpack.c.l.b16 %v1008
        %v1025 = vpack.c.b16 %v1022, %v1021
        %v1026 = vpack.c.b16 %v1024, %v1023
        %v1030 = vsel %vm850, %v1000, 0
        %v1033 = vsel %vm850, %v1001, 0
        %1035 = vmatprep.subr.bf16.mxu0 0
        %1036 = vmatpush1.bf16.msra.mxu0 %v1025
        %1037 = vmatprep.subr.bf16.mxu0 0
        %1038 = vmatpush1.bf16.msra.mxu0 %v1026
        %1039 = vmatprep.subr.bf16.mxu0 0
        %1040 = vmatpush1.bf16.msra.mxu0 0
        %1041 = vmatprep.subr.bf16.mxu0 0
        %1042 = vmatpush1.bf16.msra.mxu0 0
        %1043 = vmatprep.subr.bf16.mxu0 0
        %1044 = vmatpush1.bf16.msra.mxu0 0
        %1045 = vmatprep.subr.bf16.mxu0 0
        %1046 = vmatpush1.bf16.msra.mxu0 0
        %1047 = vmatprep.subr.bf16.mxu0 0
        %1048 = vmatpush1.bf16.msra.mxu0 0
        %1049 = vmatprep.subr.bf16.mxu0 0
        %1050 = vmatpush1.bf16.msra.mxu0 0
        %1051 = vmatprep.subr.bf16.mxu0 0
        %1052 = vmatpush1.bf16.msra.mxu0 0
        %1053 = vmatprep.subr.bf16.mxu0 0
        %1054 = vmatpush1.bf16.msra.mxu0 0
        %1055 = vmatprep.subr.bf16.mxu0 0
        %1056 = vmatpush1.bf16.msra.mxu0 0
        %1057 = vmatprep.subr.bf16.mxu0 0
        %1058 = vmatpush1.bf16.msra.mxu0 0
        %1059 = vmatprep.subr.bf16.mxu0 0
        %1060 = vmatpush1.bf16.msra.mxu0 0
        %1061 = vmatprep.subr.bf16.mxu0 0
        %1062 = vmatpush1.bf16.msra.mxu0 0
        %1063 = vmatprep.subr.bf16.mxu0 0
        %1064 = vmatpush1.bf16.msra.mxu0 0
        %1065 = vmatprep.subr.bf16.mxu0 0
        %1066 = vmatpush1.bf16.msra.mxu0 0
        %1067 = vmatprep.mubr.bf16.mxu0 0
        %1068 = vmatmul.mubr.bf16.gmra.mrb[0].mxu0 %v1030
        %v1069 = vpop.f32.mrb[0].mxu0
        %v1070 = vadd.f32 %v1015, %v1069
        %v1071 = vpop.f32.mrb[0].mxu0
        %v1072 = vpop.f32.mrb[0].mxu0
        %v1073 = vadd.f32 %v1015, %v1072
        %v1074 = vpop.f32.mrb[0].mxu0
        %1075 = vmatprep.mubr.bf16.mxu0 0
        %1076 = vmatmul.mubr.bf16.gmra.mrb[0].mxu0 %v1033
        %v1077 = vpop.f32.mrb[0].mxu0
        %v1078 = vadd.f32 %v1015, %v1077
        %v1079 = vpop.f32.mrb[0].mxu0
        %v1080 = vpop.f32.mrb[0].mxu0
        %v1081 = vadd.f32 %v1015, %v1080
        %v1082 = vpop.f32.mrb[0].mxu0
        %1083 = vdwg.mxu0
        %v1084 = vpack.c.bf16 %v996, %v920
        %v1085 = vpack.c.bf16 %v997, %v921
        %v1086 = vpack.c.bf16 %v998, %v922
        %v1087 = vpack.c.bf16 %v999, %v923
        %s1088 = smul.addr %s1002, 4
        %s1089 = scalar_lea.vmem %s10, %s1088
        %v1090 = vld [vmem:[%s1089] sm:$0xf]
        %v1091 = vld [vmem:[%s1089 + $0x4] sm:$0xf]
        %v1092 = vld [vmem:[%s1089 + $0x8] sm:$0xf]
        %v1093 = vld [vmem:[%s1089 + $0xc] sm:$0xf]
        %s1094 = scalar_lea.vmem [#allocation16], %s44
        %v1095 = vld [vmem:[%s1094] sm:$0x1]
        %v1097 = vlaneseq
        %v1098 = vshrl.u32 %v1097, 7
        %v1099 = vsub.s32 0, %v1098
        %v1100 = vrot.slane %v1095, %v1099
        %v1106 = vunpack.c.l.b16 %v1090
        %v1107 = vunpack.c.l.b16 %v1091
        %v1108 = vunpack.c.l.b16 %v1092
        %v1109 = vunpack.c.l.b16 %v1093
        %v1110 = vpack.c.b16 %v1107, %v1106
        %v1111 = vpack.c.b16 %v1109, %v1108
        %v1115 = vsel %vm850, %v1084, 0
        %v1118 = vsel %vm850, %v1085, 0
        %v1121 = vsel %vm850, %v1086, 0
        %v1124 = vsel %vm850, %v1087, 0
        %1126 = vmatprep.subr.bf16.mxu0 0
        %1127 = vmatpush1.bf16.msra.mxu0 %v1110
        %1128 = vmatprep.subr.bf16.mxu0 0
        %1129 = vmatpush1.bf16.msra.mxu0 %v1111
        %1130 = vmatprep.subr.bf16.mxu0 0
        %1131 = vmatpush1.bf16.msra.mxu0 0
        %1132 = vmatprep.subr.bf16.mxu0 0
        %1133 = vmatpush1.bf16.msra.mxu0 0
        %1134 = vmatprep.subr.bf16.mxu0 0
        %1135 = vmatpush1.bf16.msra.mxu0 0
        %1136 = vmatprep.subr.bf16.mxu0 0
        %1137 = vmatpush1.bf16.msra.mxu0 0
        %1138 = vmatprep.subr.bf16.mxu0 0
        %1139 = vmatpush1.bf16.msra.mxu0 0
        %1140 = vmatprep.subr.bf16.mxu0 0
        %1141 = vmatpush1.bf16.msra.mxu0 0
        %1142 = vmatprep.subr.bf16.mxu0 0
        %1143 = vmatpush1.bf16.msra.mxu0 0
        %1144 = vmatprep.subr.bf16.mxu0 0
        %1145 = vmatpush1.bf16.msra.mxu0 0
        %1146 = vmatprep.subr.bf16.mxu0 0
        %1147 = vmatpush1.bf16.msra.mxu0 0
        %1148 = vmatprep.subr.bf16.mxu0 0
        %1149 = vmatpush1.bf16.msra.mxu0 0
        %1150 = vmatprep.subr.bf16.mxu0 0
        %1151 = vmatpush1.bf16.msra.mxu0 0
        %1152 = vmatprep.subr.bf16.mxu0 0
        %1153 = vmatpush1.bf16.msra.mxu0 0
        %1154 = vmatprep.subr.bf16.mxu0 0
        %1155 = vmatpush1.bf16.msra.mxu0 0
        %1156 = vmatprep.subr.bf16.mxu0 0
        %1157 = vmatpush1.bf16.msra.mxu0 0
        %1158 = vmatprep.mubr.bf16.mxu0 0
        %1159 = vmatmul.mubr.bf16.gmra.mrb[0].mxu0 %v1115
        %v1160 = vpop.f32.mrb[0].mxu0
        %v1161 = vadd.f32 %v1100, %v1160
        %v1162 = vpop.f32.mrb[0].mxu0
        %v1163 = vpop.f32.mrb[0].mxu0
        %v1164 = vadd.f32 %v1100, %v1163
        %v1165 = vpop.f32.mrb[0].mxu0
        %1166 = vmatprep.mubr.bf16.mxu0 0
        %1167 = vmatmul.mubr.bf16.gmra.mrb[0].mxu0 %v1118
        %v1168 = vpop.f32.mrb[0].mxu0
        %v1169 = vadd.f32 %v1100, %v1168
        %v1170 = vpop.f32.mrb[0].mxu0
        %v1171 = vpop.f32.mrb[0].mxu0
        %v1172 = vadd.f32 %v1100, %v1171
        %v1173 = vpop.f32.mrb[0].mxu0
        %1174 = vmatprep.mubr.bf16.mxu0 0
        %1175 = vmatmul.mubr.bf16.gmra.mrb[0].mxu0 %v1121
        %v1176 = vpop.f32.mrb[0].mxu0
        %v1177 = vadd.f32 %v1100, %v1176
        %v1178 = vpop.f32.mrb[0].mxu0
        %v1179 = vpop.f32.mrb[0].mxu0
        %v1180 = vadd.f32 %v1100, %v1179
        %v1181 = vpop.f32.mrb[0].mxu0
        %1182 = vmatprep.mubr.bf16.mxu0 0
        %1183 = vmatmul.mubr.bf16.gmra.mrb[0].mxu0 %v1124
        %v1184 = vpop.f32.mrb[0].mxu0
        %v1185 = vadd.f32 %v1100, %v1184
        %v1186 = vpop.f32.mrb[0].mxu0
        %v1187 = vpop.f32.mrb[0].mxu0
        %v1188 = vadd.f32 %v1100, %v1187
        %v1189 = vpop.f32.mrb[0].mxu0
        %1190 = vdwg.mxu0
        %s1191 = smul.addr %s1002, 4
        %s1192 = scalar_lea.vmem %s12, %s1191
        %v1193 = vld [vmem:[%s1192] sm:$0xf]
        %v1194 = vld [vmem:[%s1192 + $0x4] sm:$0xf]
        %v1195 = vld [vmem:[%s1192 + $0x8] sm:$0xf]
        %v1196 = vld [vmem:[%s1192 + $0xc] sm:$0xf]
        %s1197 = scalar_lea.vmem [#allocation17], %s44
        %v1198 = vld [vmem:[%s1197] sm:$0x1]
        %v1200 = vlaneseq
        %v1201 = vshrl.u32 %v1200, 7
        %v1202 = vsub.s32 0, %v1201
        %v1203 = vrot.slane %v1198, %v1202
        %v1209 = vunpack.c.l.b16 %v1193
        %v1210 = vunpack.c.l.b16 %v1194
        %v1211 = vunpack.c.l.b16 %v1195
        %v1212 = vunpack.c.l.b16 %v1196
        %v1213 = vpack.c.b16 %v1210, %v1209
        %v1214 = vpack.c.b16 %v1212, %v1211
        %1217 = vmatprep.subr.bf16.mxu0 0
        %1218 = vmatpush1.bf16.msra.mxu0 %v1213
        %1219 = vmatprep.subr.bf16.mxu0 0
        %1220 = vmatpush1.bf16.msra.mxu0 %v1214
        %1221 = vmatprep.subr.bf16.mxu0 0
        %1222 = vmatpush1.bf16.msra.mxu0 0
        %1223 = vmatprep.subr.bf16.mxu0 0
        %1224 = vmatpush1.bf16.msra.mxu0 0
        %1225 = vmatprep.subr.bf16.mxu0 0
        %1226 = vmatpush1.bf16.msra.mxu0 0
        %1227 = vmatprep.subr.bf16.mxu0 0
        %1228 = vmatpush1.bf16.msra.mxu0 0
        %1229 = vmatprep.subr.bf16.mxu0 0
        %1230 = vmatpush1.bf16.msra.mxu0 0
        %1231 = vmatprep.subr.bf16.mxu0 0
        %1232 = vmatpush1.bf16.msra.mxu0 0
        %1233 = vmatprep.subr.bf16.mxu0 0
        %1234 = vmatpush1.bf16.msra.mxu0 0
        %1235 = vmatprep.subr.bf16.mxu0 0
        %1236 = vmatpush1.bf16.msra.mxu0 0
        %1237 = vmatprep.subr.bf16.mxu0 0
        %1238 = vmatpush1.bf16.msra.mxu0 0
        %1239 = vmatprep.subr.bf16.mxu0 0
        %1240 = vmatpush1.bf16.msra.mxu0 0
        %1241 = vmatprep.subr.bf16.mxu0 0
        %1242 = vmatpush1.bf16.msra.mxu0 0
        %1243 = vmatprep.subr.bf16.mxu0 0
        %1244 = vmatpush1.bf16.msra.mxu0 0
        %1245 = vmatprep.subr.bf16.mxu0 0
        %1246 = vmatpush1.bf16.msra.mxu0 0
        %1247 = vmatprep.subr.bf16.mxu0 0
        %1248 = vmatpush1.bf16.msra.mxu0 0
        %1249 = vmatprep.mubr.bf16.mxu0 0
        %1250 = vmatmul.mubr.bf16.gmra.mrb[0].mxu0 %v1115
        %v1251 = vpop.f32.mrb[0].mxu0
        %v1252 = vadd.f32 %v1203, %v1251
        %v1253 = vpop.f32.mrb[0].mxu0
        %v1254 = vpop.f32.mrb[0].mxu0
        %v1255 = vadd.f32 %v1203, %v1254
        %v1256 = vpop.f32.mrb[0].mxu0
        %1257 = vmatprep.mubr.bf16.mxu0 0
        %1258 = vmatmul.mubr.bf16.gmra.mrb[0].mxu0 %v1118
        %v1259 = vpop.f32.mrb[0].mxu0
        %v1260 = vadd.f32 %v1203, %v1259
        %v1261 = vpop.f32.mrb[0].mxu0
        %v1262 = vpop.f32.mrb[0].mxu0
        %v1263 = vadd.f32 %v1203, %v1262
        %v1264 = vpop.f32.mrb[0].mxu0
        %1265 = vmatprep.mubr.bf16.mxu0 0
        %1266 = vmatmul.mubr.bf16.gmra.mrb[0].mxu0 %v1121
        %v1267 = vpop.f32.mrb[0].mxu0
        %v1268 = vadd.f32 %v1203, %v1267
        %v1269 = vpop.f32.mrb[0].mxu0
        %v1270 = vpop.f32.mrb[0].mxu0
        %v1271 = vadd.f32 %v1203, %v1270
        %v1272 = vpop.f32.mrb[0].mxu0
        %1273 = vmatprep.mubr.bf16.mxu0 0
        %1274 = vmatmul.mubr.bf16.gmra.mrb[0].mxu0 %v1124
        %v1275 = vpop.f32.mrb[0].mxu0
        %v1276 = vadd.f32 %v1203, %v1275
        %v1277 = vpop.f32.mrb[0].mxu0
        %v1278 = vpop.f32.mrb[0].mxu0
        %v1279 = vadd.f32 %v1203, %v1278
        %v1280 = vpop.f32.mrb[0].mxu0
        %1281 = vdwg.mxu0
        %v1282 = vpack.c.bf16 %v1073, %v1070
        %v1283 = vpack.c.bf16 %v1081, %v1078
        %v1284 = vpack.c.bf16 %v1164, %v1161
        %v1285 = vpack.c.bf16 %v1172, %v1169
        %v1286 = vpack.c.bf16 %v1180, %v1177
        %v1287 = vpack.c.bf16 %v1188, %v1185
        %v1288 = vpack.c.bf16 %v1255, %v1252
        %v1289 = vpack.c.bf16 %v1263, %v1260
        %v1290 = vpack.c.bf16 %v1271, %v1268
        %v1291 = vpack.c.bf16 %v1279, %v1276
        %v1294 = vunpack.c.l.b16 %v1282
        %v1295 = vunpack.c.h.b16 %v1282
        %v1296 = vunpack.c.l.b16 %v1283
        %v1297 = vunpack.c.h.b16 %v1283
        %v1298 = vpack.c.b16 %v1294, %v1294
        %v1299 = vpack.c.b16 %v1295, %v1295
        %v1300 = vpack.c.b16 %v1296, %v1296
        %v1301 = vpack.c.b16 %v1297, %v1297
        %vm1302 = vcmask 64512
        %v1304 = vsel %vm1302, %v1298, 0
        %v1307 = vsel %vm1302, %v1284, 0
        %1309 = vmatprep.subr.bf16.mxu0 0
        %1310 = vmatpush1.bf16.xpose.msra.mxu0 %v1307
        %1311 = vmatprep.subr.bf16.mxu0 0
        %1312 = vmatpush1.bf16.xpose.msra.mxu0 0
        %1313 = vmatprep.subr.bf16.mxu0 0
        %1314 = vmatpush1.bf16.xpose.msra.mxu0 0
        %1315 = vmatprep.subr.bf16.mxu0 0
        %1316 = vmatpush1.bf16.xpose.msra.mxu0 0
        %1317 = vmatprep.subr.bf16.mxu0 0
        %1318 = vmatpush1.bf16.xpose.msra.mxu0 0
        %1319 = vmatprep.subr.bf16.mxu0 0
        %1320 = vmatpush1.bf16.xpose.msra.mxu0 0
        %1321 = vmatprep.subr.bf16.mxu0 0
        %1322 = vmatpush1.bf16.xpose.msra.mxu0 0
        %1323 = vmatprep.subr.bf16.mxu0 0
        %1324 = vmatpush1.bf16.xpose.msra.mxu0 0
        %1325 = vmatprep.subr.bf16.mxu0 0
        %1326 = vmatpush1.bf16.xpose.msra.mxu0 0
        %1327 = vmatprep.subr.bf16.mxu0 0
        %1328 = vmatpush1.bf16.xpose.msra.mxu0 0
        %1329 = vmatprep.subr.bf16.mxu0 0
        %1330 = vmatpush1.bf16.xpose.msra.mxu0 0
        %1331 = vmatprep.subr.bf16.mxu0 0
        %1332 = vmatpush1.bf16.xpose.msra.mxu0 0
        %1333 = vmatprep.subr.bf16.mxu0 0
        %1334 = vmatpush1.bf16.xpose.msra.mxu0 0
        %1335 = vmatprep.subr.bf16.mxu0 0
        %1336 = vmatpush1.bf16.xpose.msra.mxu0 0
        %1337 = vmatprep.subr.bf16.mxu0 0
        %1338 = vmatpush1.bf16.xpose.msra.mxu0 0
        %1339 = vmatprep.subr.bf16.mxu0 0
        %1340 = vmatpush1.bf16.xpose.msra.mxu0 0
        %1341 = vmatprep.mubr.bf16.mxu0 0
        %1342 = vmatmul.mubr.bf16.gmra.mrb[0].mxu0 %v1304
        %v1343 = vpop.f32.mrb[0].mxu0
        %v1344 = vadd.f32 0.0, %v1343
        %v1345 = vpop.f32.mrb[0].mxu0
        %v1346 = vpop.f32.mrb[0].mxu0
        %v1347 = vpop.f32.mrb[0].mxu0
        %1348 = vdwg.mxu0
        %v1350 = vsel %vm1302, %v1299, 0
        %v1353 = vsel %vm1302, %v1285, 0
        %1355 = vmatprep.subr.bf16.mxu0 0
        %1356 = vmatpush1.bf16.xpose.msra.mxu0 %v1353
        %1357 = vmatprep.subr.bf16.mxu0 0
        %1358 = vmatpush1.bf16.xpose.msra.mxu0 0
        %1359 = vmatprep.subr.bf16.mxu0 0
        %1360 = vmatpush1.bf16.xpose.msra.mxu0 0
        %1361 = vmatprep.subr.bf16.mxu0 0
        %1362 = vmatpush1.bf16.xpose.msra.mxu0 0
        %1363 = vmatprep.subr.bf16.mxu0 0
        %1364 = vmatpush1.bf16.xpose.msra.mxu0 0
        %1365 = vmatprep.subr.bf16.mxu0 0
        %1366 = vmatpush1.bf16.xpose.msra.mxu0 0
        %1367 = vmatprep.subr.bf16.mxu0 0
        %1368 = vmatpush1.bf16.xpose.msra.mxu0 0
        %1369 = vmatprep.subr.bf16.mxu0 0
        %1370 = vmatpush1.bf16.xpose.msra.mxu0 0
        %1371 = vmatprep.subr.bf16.mxu0 0
        %1372 = vmatpush1.bf16.xpose.msra.mxu0 0
        %1373 = vmatprep.subr.bf16.mxu0 0
        %1374 = vmatpush1.bf16.xpose.msra.mxu0 0
        %1375 = vmatprep.subr.bf16.mxu0 0
        %1376 = vmatpush1.bf16.xpose.msra.mxu0 0
        %1377 = vmatprep.subr.bf16.mxu0 0
        %1378 = vmatpush1.bf16.xpose.msra.mxu0 0
        %1379 = vmatprep.subr.bf16.mxu0 0
        %1380 = vmatpush1.bf16.xpose.msra.mxu0 0
        %1381 = vmatprep.subr.bf16.mxu0 0
        %1382 = vmatpush1.bf16.xpose.msra.mxu0 0
        %1383 = vmatprep.subr.bf16.mxu0 0
        %1384 = vmatpush1.bf16.xpose.msra.mxu0 0
        %1385 = vmatprep.subr.bf16.mxu0 0
        %1386 = vmatpush1.bf16.xpose.msra.mxu0 0
        %1387 = vmatprep.mubr.bf16.mxu0 0
        %1388 = vmatmul.mubr.bf16.gmra.mrb[0].mxu0 %v1350
        %v1389 = vpop.f32.mrb[0].mxu0
        %v1390 = vadd.f32 0.0, %v1389
        %v1391 = vpop.f32.mrb[0].mxu0
        %v1392 = vpop.f32.mrb[0].mxu0
        %v1393 = vpop.f32.mrb[0].mxu0
        %1394 = vdwg.mxu0
        %v1396 = vsel %vm1302, %v1300, 0
        %v1399 = vsel %vm1302, %v1286, 0
        %1401 = vmatprep.subr.bf16.mxu0 0
        %1402 = vmatpush1.bf16.xpose.msra.mxu0 %v1399
        %1403 = vmatprep.subr.bf16.mxu0 0
        %1404 = vmatpush1.bf16.xpose.msra.mxu0 0
        %1405 = vmatprep.subr.bf16.mxu0 0
        %1406 = vmatpush1.bf16.xpose.msra.mxu0 0
        %1407 = vmatprep.subr.bf16.mxu0 0
        %1408 = vmatpush1.bf16.xpose.msra.mxu0 0
        %1409 = vmatprep.subr.bf16.mxu0 0
        %1410 = vmatpush1.bf16.xpose.msra.mxu0 0
        %1411 = vmatprep.subr.bf16.mxu0 0
        %1412 = vmatpush1.bf16.xpose.msra.mxu0 0
        %1413 = vmatprep.subr.bf16.mxu0 0
        %1414 = vmatpush1.bf16.xpose.msra.mxu0 0
        %1415 = vmatprep.subr.bf16.mxu0 0
        %1416 = vmatpush1.bf16.xpose.msra.mxu0 0
        %1417 = vmatprep.subr.bf16.mxu0 0
        %1418 = vmatpush1.bf16.xpose.msra.mxu0 0
        %1419 = vmatprep.subr.bf16.mxu0 0
        %1420 = vmatpush1.bf16.xpose.msra.mxu0 0
        %1421 = vmatprep.subr.bf16.mxu0 0
        %1422 = vmatpush1.bf16.xpose.msra.mxu0 0
        %1423 = vmatprep.subr.bf16.mxu0 0
        %1424 = vmatpush1.bf16.xpose.msra.mxu0 0
        %1425 = vmatprep.subr.bf16.mxu0 0
        %1426 = vmatpush1.bf16.xpose.msra.mxu0 0
        %1427 = vmatprep.subr.bf16.mxu0 0
        %1428 = vmatpush1.bf16.xpose.msra.mxu0 0
        %1429 = vmatprep.subr.bf16.mxu0 0
        %1430 = vmatpush1.bf16.xpose.msra.mxu0 0
        %1431 = vmatprep.subr.bf16.mxu0 0
        %1432 = vmatpush1.bf16.xpose.msra.mxu0 0
        %1433 = vmatprep.mubr.bf16.mxu0 0
        %1434 = vmatmul.mubr.bf16.gmra.mrb[0].mxu0 %v1396
        %v1435 = vpop.f32.mrb[0].mxu0
        %v1436 = vadd.f32 0.0, %v1435
        %v1437 = vpop.f32.mrb[0].mxu0
        %v1438 = vpop.f32.mrb[0].mxu0
        %v1439 = vpop.f32.mrb[0].mxu0
        %1440 = vdwg.mxu0
        %v1442 = vsel %vm1302, %v1301, 0
        %v1445 = vsel %vm1302, %v1287, 0
        %1447 = vmatprep.subr.bf16.mxu0 0
        %1448 = vmatpush1.bf16.xpose.msra.mxu0 %v1445
        %1449 = vmatprep.subr.bf16.mxu0 0
        %1450 = vmatpush1.bf16.xpose.msra.mxu0 0
        %1451 = vmatprep.subr.bf16.mxu0 0
        %1452 = vmatpush1.bf16.xpose.msra.mxu0 0
        %1453 = vmatprep.subr.bf16.mxu0 0
        %1454 = vmatpush1.bf16.xpose.msra.mxu0 0
        %1455 = vmatprep.subr.bf16.mxu0 0
        %1456 = vmatpush1.bf16.xpose.msra.mxu0 0
        %1457 = vmatprep.subr.bf16.mxu0 0
        %1458 = vmatpush1.bf16.xpose.msra.mxu0 0
        %1459 = vmatprep.subr.bf16.mxu0 0
        %1460 = vmatpush1.bf16.xpose.msra.mxu0 0
        %1461 = vmatprep.subr.bf16.mxu0 0
        %1462 = vmatpush1.bf16.xpose.msra.mxu0 0
        %1463 = vmatprep.subr.bf16.mxu0 0
        %1464 = vmatpush1.bf16.xpose.msra.mxu0 0
        %1465 = vmatprep.subr.bf16.mxu0 0
        %1466 = vmatpush1.bf16.xpose.msra.mxu0 0
        %1467 = vmatprep.subr.bf16.mxu0 0
        %1468 = vmatpush1.bf16.xpose.msra.mxu0 0
        %1469 = vmatprep.subr.bf16.mxu0 0
        %1470 = vmatpush1.bf16.xpose.msra.mxu0 0
        %1471 = vmatprep.subr.bf16.mxu0 0
        %1472 = vmatpush1.bf16.xpose.msra.mxu0 0
        %1473 = vmatprep.subr.bf16.mxu0 0
        %1474 = vmatpush1.bf16.xpose.msra.mxu0 0
        %1475 = vmatprep.subr.bf16.mxu0 0
        %1476 = vmatpush1.bf16.xpose.msra.mxu0 0
        %1477 = vmatprep.subr.bf16.mxu0 0
        %1478 = vmatpush1.bf16.xpose.msra.mxu0 0
        %1479 = vmatprep.mubr.bf16.mxu0 0
        %1480 = vmatmul.mubr.bf16.gmra.mrb[0].mxu0 %v1442
        %v1481 = vpop.f32.mrb[0].mxu0
        %v1482 = vadd.f32 0.0, %v1481
        %v1483 = vpop.f32.mrb[0].mxu0
        %v1484 = vpop.f32.mrb[0].mxu0
        %v1485 = vpop.f32.mrb[0].mxu0
        %1486 = vdwg.mxu0
        %vm1487 = vcmask 130048
        %v1488 = vsel %vm1487, %v1344, -inf
        %1489 = vmax.xlane.f32.xlu0 %v1488
        %v1490 = vpop.xlane.xlu0 %1489
        %v1491 = vsel %vm1487, %v1390, -inf
        %1492 = vmax.xlane.f32.xlu0 %v1491
        %v1493 = vpop.xlane.xlu0 %1492
        %v1494 = vsel %vm1487, %v1436, -inf
        %1495 = vmax.xlane.f32.xlu0 %v1494
        %v1496 = vpop.xlane.xlu0 %1495
        %v1497 = vsel %vm1487, %v1482, -inf
        %1498 = vmax.xlane.f32.xlu0 %v1497
        %v1499 = vpop.xlane.xlu0 %1498
        %v1500 = vsub.f32 %v1344, %v1490
        %v1501 = vsub.f32 %v1390, %v1493
        %v1502 = vsub.f32 %v1436, %v1496
        %v1503 = vsub.f32 %v1482, %v1499
        %v1504 = vmul.f32 %v1500, 1.442695
        %v1505 = vpow.pop %v1504
        %v1506 = vmul.f32 %v1501, 1.442695
        %v1507 = vpow.pop %v1506
        %v1508 = vmul.f32 %v1502, 1.442695
        %v1509 = vpow.pop %v1508
        %v1510 = vmul.f32 %v1503, 1.442695
        %v1511 = vpow.pop %v1510
        %v1512 = vsel %vm1487, %v1505, 0.0
        %1513 = vadd.xlane.f32.xlu0 %v1512
        %v1514 = vpop.xlane.xlu0 %1513
        %v1515 = vsel %vm1487, %v1507, 0.0
        %1516 = vadd.xlane.f32.xlu0 %v1515
        %v1517 = vpop.xlane.xlu0 %1516
        %v1518 = vsel %vm1487, %v1509, 0.0
        %1519 = vadd.xlane.f32.xlu0 %v1518
        %v1520 = vpop.xlane.xlu0 %1519
        %v1521 = vsel %vm1487, %v1511, 0.0
        %1522 = vadd.xlane.f32.xlu0 %v1521
        %v1523 = vpop.xlane.xlu0 %1522
        %v1524 = vrcp.pop %v1514
        %v1525 = vrcp.pop %v1517
        %v1526 = vrcp.pop %v1520
        %v1527 = vrcp.pop %v1523
        %v1528 = vmul.f32 %v1505, %v1524
        %v1529 = vmul.f32 %v1507, %v1525
        %v1530 = vmul.f32 %v1509, %v1526
        %v1531 = vmul.f32 %v1511, %v1527
        %v1532 = vpack.c.bf16 %v1528, %v1528
        %v1533 = vpack.c.bf16 %v1529, %v1529
        %v1534 = vpack.c.bf16 %v1530, %v1530
        %v1535 = vpack.c.bf16 %v1531, %v1531
        %v1537 = vsel %vm1487, %v1532, 0
        %1539 = vmatprep.subr.bf16.mxu0 0
        %1540 = vmatpush1.bf16.msra.mxu0 %v1288
        %1541 = vmatprep.subr.bf16.mxu0 0
        %1542 = vmatpush1.bf16.msra.mxu0 0
        %1543 = vmatprep.subr.bf16.mxu0 0
        %1544 = vmatpush1.bf16.msra.mxu0 0
        %1545 = vmatprep.subr.bf16.mxu0 0
        %1546 = vmatpush1.bf16.msra.mxu0 0
        %1547 = vmatprep.subr.bf16.mxu0 0
        %1548 = vmatpush1.bf16.msra.mxu0 0
        %1549 = vmatprep.subr.bf16.mxu0 0
        %1550 = vmatpush1.bf16.msra.mxu0 0
        %1551 = vmatprep.subr.bf16.mxu0 0
        %1552 = vmatpush1.bf16.msra.mxu0 0
        %1553 = vmatprep.subr.bf16.mxu0 0
        %1554 = vmatpush1.bf16.msra.mxu0 0
        %1555 = vmatprep.subr.bf16.mxu0 0
        %1556 = vmatpush1.bf16.msra.mxu0 0
        %1557 = vmatprep.subr.bf16.mxu0 0
        %1558 = vmatpush1.bf16.msra.mxu0 0
        %1559 = vmatprep.subr.bf16.mxu0 0
        %1560 = vmatpush1.bf16.msra.mxu0 0
        %1561 = vmatprep.subr.bf16.mxu0 0
        %1562 = vmatpush1.bf16.msra.mxu0 0
        %1563 = vmatprep.subr.bf16.mxu0 0
        %1564 = vmatpush1.bf16.msra.mxu0 0
        %1565 = vmatprep.subr.bf16.mxu0 0
        %1566 = vmatpush1.bf16.msra.mxu0 0
        %1567 = vmatprep.subr.bf16.mxu0 0
        %1568 = vmatpush1.bf16.msra.mxu0 0
        %1569 = vmatprep.subr.bf16.mxu0 0
        %1570 = vmatpush1.bf16.msra.mxu0 0
        %1571 = vmatprep.mubr.bf16.mxu0 0
        %1572 = vmatmul.mubr.bf16.gmra.mrb[0].mxu0 %v1537
        %v1573 = vpop.f32.mrb[0].mxu0
        %v1574 = vadd.f32 0.0, %v1573
        %v1575 = vpop.f32.mrb[0].mxu0
        %v1576 = vpop.f32.mrb[0].mxu0
        %v1577 = vpop.f32.mrb[0].mxu0
        %1578 = vdwg.mxu0
        %v1580 = vsel %vm1487, %v1533, 0
        %1582 = vmatprep.subr.bf16.mxu0 0
        %1583 = vmatpush1.bf16.msra.mxu0 %v1289
        %1584 = vmatprep.subr.bf16.mxu0 0
        %1585 = vmatpush1.bf16.msra.mxu0 0
        %1586 = vmatprep.subr.bf16.mxu0 0
        %1587 = vmatpush1.bf16.msra.mxu0 0
        %1588 = vmatprep.subr.bf16.mxu0 0
        %1589 = vmatpush1.bf16.msra.mxu0 0
        %1590 = vmatprep.subr.bf16.mxu0 0
        %1591 = vmatpush1.bf16.msra.mxu0 0
        %1592 = vmatprep.subr.bf16.mxu0 0
        %1593 = vmatpush1.bf16.msra.mxu0 0
        %1594 = vmatprep.subr.bf16.mxu0 0
        %1595 = vmatpush1.bf16.msra.mxu0 0
        %1596 = vmatprep.subr.bf16.mxu0 0
        %1597 = vmatpush1.bf16.msra.mxu0 0
        %1598 = vmatprep.subr.bf16.mxu0 0
        %1599 = vmatpush1.bf16.msra.mxu0 0
        %1600 = vmatprep.subr.bf16.mxu0 0
        %1601 = vmatpush1.bf16.msra.mxu0 0
        %1602 = vmatprep.subr.bf16.mxu0 0
        %1603 = vmatpush1.bf16.msra.mxu0 0
        %1604 = vmatprep.subr.bf16.mxu0 0
        %1605 = vmatpush1.bf16.msra.mxu0 0
        %1606 = vmatprep.subr.bf16.mxu0 0
        %1607 = vmatpush1.bf16.msra.mxu0 0
        %1608 = vmatprep.subr.bf16.mxu0 0
        %1609 = vmatpush1.bf16.msra.mxu0 0
        %1610 = vmatprep.subr.bf16.mxu0 0
        %1611 = vmatpush1.bf16.msra.mxu0 0
        %1612 = vmatprep.subr.bf16.mxu0 0
        %1613 = vmatpush1.bf16.msra.mxu0 0
        %1614 = vmatprep.mubr.bf16.mxu0 0
        %1615 = vmatmul.mubr.bf16.gmra.mrb[0].mxu0 %v1580
        %v1616 = vpop.f32.mrb[0].mxu0
        %v1617 = vadd.f32 0.0, %v1616
        %v1618 = vpop.f32.mrb[0].mxu0
        %v1619 = vpop.f32.mrb[0].mxu0
        %v1620 = vpop.f32.mrb[0].mxu0
        %1621 = vdwg.mxu0
        %v1623 = vsel %vm1487, %v1534, 0
        %1625 = vmatprep.subr.bf16.mxu0 0
        %1626 = vmatpush1.bf16.msra.mxu0 %v1290
        %1627 = vmatprep.subr.bf16.mxu0 0
        %1628 = vmatpush1.bf16.msra.mxu0 0
        %1629 = vmatprep.subr.bf16.mxu0 0
        %1630 = vmatpush1.bf16.msra.mxu0 0
        %1631 = vmatprep.subr.bf16.mxu0 0
        %1632 = vmatpush1.bf16.msra.mxu0 0
        %1633 = vmatprep.subr.bf16.mxu0 0
        %1634 = vmatpush1.bf16.msra.mxu0 0
        %1635 = vmatprep.subr.bf16.mxu0 0
        %1636 = vmatpush1.bf16.msra.mxu0 0
        %1637 = vmatprep.subr.bf16.mxu0 0
        %1638 = vmatpush1.bf16.msra.mxu0 0
        %1639 = vmatprep.subr.bf16.mxu0 0
        %1640 = vmatpush1.bf16.msra.mxu0 0
        %1641 = vmatprep.subr.bf16.mxu0 0
        %1642 = vmatpush1.bf16.msra.mxu0 0
        %1643 = vmatprep.subr.bf16.mxu0 0
        %1644 = vmatpush1.bf16.msra.mxu0 0
        %1645 = vmatprep.subr.bf16.mxu0 0
        %1646 = vmatpush1.bf16.msra.mxu0 0
        %1647 = vmatprep.subr.bf16.mxu0 0
        %1648 = vmatpush1.bf16.msra.mxu0 0
        %1649 = vmatprep.subr.bf16.mxu0 0
        %1650 = vmatpush1.bf16.msra.mxu0 0
        %1651 = vmatprep.subr.bf16.mxu0 0
        %1652 = vmatpush1.bf16.msra.mxu0 0
        %1653 = vmatprep.subr.bf16.mxu0 0
        %1654 = vmatpush1.bf16.msra.mxu0 0
        %1655 = vmatprep.subr.bf16.mxu0 0
        %1656 = vmatpush1.bf16.msra.mxu0 0
        %1657 = vmatprep.mubr.bf16.mxu0 0
        %1658 = vmatmul.mubr.bf16.gmra.mrb[0].mxu0 %v1623
        %v1659 = vpop.f32.mrb[0].mxu0
        %v1660 = vadd.f32 0.0, %v1659
        %v1661 = vpop.f32.mrb[0].mxu0
        %v1662 = vpop.f32.mrb[0].mxu0
        %v1663 = vpop.f32.mrb[0].mxu0
        %1664 = vdwg.mxu0
        %v1666 = vsel %vm1487, %v1535, 0
        %1668 = vmatprep.subr.bf16.mxu0 0
        %1669 = vmatpush1.bf16.msra.mxu0 %v1291
        %1670 = vmatprep.subr.bf16.mxu0 0
        %1671 = vmatpush1.bf16.msra.mxu0 0
        %1672 = vmatprep.subr.bf16.mxu0 0
        %1673 = vmatpush1.bf16.msra.mxu0 0
        %1674 = vmatprep.subr.bf16.mxu0 0
        %1675 = vmatpush1.bf16.msra.mxu0 0
        %1676 = vmatprep.subr.bf16.mxu0 0
        %1677 = vmatpush1.bf16.msra.mxu0 0
        %1678 = vmatprep.subr.bf16.mxu0 0
        %1679 = vmatpush1.bf16.msra.mxu0 0
        %1680 = vmatprep.subr.bf16.mxu0 0
        %1681 = vmatpush1.bf16.msra.mxu0 0
        %1682 = vmatprep.subr.bf16.mxu0 0
        %1683 = vmatpush1.bf16.msra.mxu0 0
        %1684 = vmatprep.subr.bf16.mxu0 0
        %1685 = vmatpush1.bf16.msra.mxu0 0
        %1686 = vmatprep.subr.bf16.mxu0 0
        %1687 = vmatpush1.bf16.msra.mxu0 0
        %1688 = vmatprep.subr.bf16.mxu0 0
        %1689 = vmatpush1.bf16.msra.mxu0 0
        %1690 = vmatprep.subr.bf16.mxu0 0
        %1691 = vmatpush1.bf16.msra.mxu0 0
        %1692 = vmatprep.subr.bf16.mxu0 0
        %1693 = vmatpush1.bf16.msra.mxu0 0
        %1694 = vmatprep.subr.bf16.mxu0 0
        %1695 = vmatpush1.bf16.msra.mxu0 0
        %1696 = vmatprep.subr.bf16.mxu0 0
        %1697 = vmatpush1.bf16.msra.mxu0 0
        %1698 = vmatprep.subr.bf16.mxu0 0
        %1699 = vmatpush1.bf16.msra.mxu0 0
        %1700 = vmatprep.mubr.bf16.mxu0 0
        %1701 = vmatmul.mubr.bf16.gmra.mrb[0].mxu0 %v1666
        %v1702 = vpop.f32.mrb[0].mxu0
        %v1703 = vadd.f32 0.0, %v1702
        %v1704 = vpop.f32.mrb[0].mxu0
        %v1705 = vpop.f32.mrb[0].mxu0
        %v1706 = vpop.f32.mrb[0].mxu0
        %1707 = vdwg.mxu0
        %1708 = vrot.lane.b32.xlu0 %v1298, 120
        %v1709 = vpop.permute.xlu0 %1708
        %1711 = vrot.lane.b32.xlu0 %v1284, 120
        %v1712 = vpop.permute.xlu0 %1711
        %v1714 = vsel %vm1302, %v1709, 0
        %v1717 = vsel %vm1302, %v1712, 0
        %1719 = vmatprep.subr.bf16.mxu0 0
        %1720 = vmatpush1.bf16.xpose.msra.mxu0 %v1717
        %1721 = vmatprep.subr.bf16.mxu0 0
        %1722 = vmatpush1.bf16.xpose.msra.mxu0 0
        %1723 = vmatprep.subr.bf16.mxu0 0
        %1724 = vmatpush1.bf16.xpose.msra.mxu0 0
        %1725 = vmatprep.subr.bf16.mxu0 0
        %1726 = vmatpush1.bf16.xpose.msra.mxu0 0
        %1727 = vmatprep.subr.bf16.mxu0 0
        %1728 = vmatpush1.bf16.xpose.msra.mxu0 0
        %1729 = vmatprep.subr.bf16.mxu0 0
        %1730 = vmatpush1.bf16.xpose.msra.mxu0 0
        %1731 = vmatprep.subr.bf16.mxu0 0
        %1732 = vmatpush1.bf16.xpose.msra.mxu0 0
        %1733 = vmatprep.subr.bf16.mxu0 0
        %1734 = vmatpush1.bf16.xpose.msra.mxu0 0
        %1735 = vmatprep.subr.bf16.mxu0 0
        %1736 = vmatpush1.bf16.xpose.msra.mxu0 0
        %1737 = vmatprep.subr.bf16.mxu0 0
        %1738 = vmatpush1.bf16.xpose.msra.mxu0 0
        %1739 = vmatprep.subr.bf16.mxu0 0
        %1740 = vmatpush1.bf16.xpose.msra.mxu0 0
        %1741 = vmatprep.subr.bf16.mxu0 0
        %1742 = vmatpush1.bf16.xpose.msra.mxu0 0
        %1743 = vmatprep.subr.bf16.mxu0 0
        %1744 = vmatpush1.bf16.xpose.msra.mxu0 0
        %1745 = vmatprep.subr.bf16.mxu0 0
        %1746 = vmatpush1.bf16.xpose.msra.mxu0 0
        %1747 = vmatprep.subr.bf16.mxu0 0
        %1748 = vmatpush1.bf16.xpose.msra.mxu0 0
        %1749 = vmatprep.subr.bf16.mxu0 0
        %1750 = vmatpush1.bf16.xpose.msra.mxu0 0
        %1751 = vmatprep.mubr.bf16.mxu0 0
        %1752 = vmatmul.mubr.bf16.gmra.mrb[0].mxu0 %v1714
        %v1753 = vpop.f32.mrb[0].mxu0
        %v1754 = vadd.f32 0.0, %v1753
        %v1755 = vpop.f32.mrb[0].mxu0
        %v1756 = vpop.f32.mrb[0].mxu0
        %v1757 = vpop.f32.mrb[0].mxu0
        %1758 = vdwg.mxu0
        %1759 = vrot.lane.b32.xlu0 %v1299, 120
        %v1760 = vpop.permute.xlu0 %1759
        %1762 = vrot.lane.b32.xlu0 %v1285, 120
        %v1763 = vpop.permute.xlu0 %1762
        %v1765 = vsel %vm1302, %v1760, 0
        %v1768 = vsel %vm1302, %v1763, 0
        %1770 = vmatprep.subr.bf16.mxu0 0
        %1771 = vmatpush1.bf16.xpose.msra.mxu0 %v1768
        %1772 = vmatprep.subr.bf16.mxu0 0
        %1773 = vmatpush1.bf16.xpose.msra.mxu0 0
        %1774 = vmatprep.subr.bf16.mxu0 0
        %1775 = vmatpush1.bf16.xpose.msra.mxu0 0
        %1776 = vmatprep.subr.bf16.mxu0 0
        %1777 = vmatpush1.bf16.xpose.msra.mxu0 0
        %1778 = vmatprep.subr.bf16.mxu0 0
        %1779 = vmatpush1.bf16.xpose.msra.mxu0 0
        %1780 = vmatprep.subr.bf16.mxu0 0
        %1781 = vmatpush1.bf16.xpose.msra.mxu0 0
        %1782 = vmatprep.subr.bf16.mxu0 0
        %1783 = vmatpush1.bf16.xpose.msra.mxu0 0
        %1784 = vmatprep.subr.bf16.mxu0 0
        %1785 = vmatpush1.bf16.xpose.msra.mxu0 0
        %1786 = vmatprep.subr.bf16.mxu0 0
        %1787 = vmatpush1.bf16.xpose.msra.mxu0 0
        %1788 = vmatprep.subr.bf16.mxu0 0
        %1789 = vmatpush1.bf16.xpose.msra.mxu0 0
        %1790 = vmatprep.subr.bf16.mxu0 0
        %1791 = vmatpush1.bf16.xpose.msra.mxu0 0
        %1792 = vmatprep.subr.bf16.mxu0 0
        %1793 = vmatpush1.bf16.xpose.msra.mxu0 0
        %1794 = vmatprep.subr.bf16.mxu0 0
        %1795 = vmatpush1.bf16.xpose.msra.mxu0 0
        %1796 = vmatprep.subr.bf16.mxu0 0
        %1797 = vmatpush1.bf16.xpose.msra.mxu0 0
        %1798 = vmatprep.subr.bf16.mxu0 0
        %1799 = vmatpush1.bf16.xpose.msra.mxu0 0
        %1800 = vmatprep.subr.bf16.mxu0 0
        %1801 = vmatpush1.bf16.xpose.msra.mxu0 0
        %1802 = vmatprep.mubr.bf16.mxu0 0
        %1803 = vmatmul.mubr.bf16.gmra.mrb[0].mxu0 %v1765
        %v1804 = vpop.f32.mrb[0].mxu0
        %v1805 = vadd.f32 0.0, %v1804
        %v1806 = vpop.f32.mrb[0].mxu0
        %v1807 = vpop.f32.mrb[0].mxu0
        %v1808 = vpop.f32.mrb[0].mxu0
        %1809 = vdwg.mxu0
        %1810 = vrot.lane.b32.xlu0 %v1300, 120
        %v1811 = vpop.permute.xlu0 %1810
        %1813 = vrot.lane.b32.xlu0 %v1286, 120
        %v1814 = vpop.permute.xlu0 %1813
        %v1816 = vsel %vm1302, %v1811, 0
        %v1819 = vsel %vm1302, %v1814, 0
        %1821 = vmatprep.subr.bf16.mxu0 0
        %1822 = vmatpush1.bf16.xpose.msra.mxu0 %v1819
        %1823 = vmatprep.subr.bf16.mxu0 0
        %1824 = vmatpush1.bf16.xpose.msra.mxu0 0
        %1825 = vmatprep.subr.bf16.mxu0 0
        %1826 = vmatpush1.bf16.xpose.msra.mxu0 0
        %1827 = vmatprep.subr.bf16.mxu0 0
        %1828 = vmatpush1.bf16.xpose.msra.mxu0 0
        %1829 = vmatprep.subr.bf16.mxu0 0
        %1830 = vmatpush1.bf16.xpose.msra.mxu0 0
        %1831 = vmatprep.subr.bf16.mxu0 0
        %1832 = vmatpush1.bf16.xpose.msra.mxu0 0
        %1833 = vmatprep.subr.bf16.mxu0 0
        %1834 = vmatpush1.bf16.xpose.msra.mxu0 0
        %1835 = vmatprep.subr.bf16.mxu0 0
        %1836 = vmatpush1.bf16.xpose.msra.mxu0 0
        %1837 = vmatprep.subr.bf16.mxu0 0
        %1838 = vmatpush1.bf16.xpose.msra.mxu0 0
        %1839 = vmatprep.subr.bf16.mxu0 0
        %1840 = vmatpush1.bf16.xpose.msra.mxu0 0
        %1841 = vmatprep.subr.bf16.mxu0 0
        %1842 = vmatpush1.bf16.xpose.msra.mxu0 0
        %1843 = vmatprep.subr.bf16.mxu0 0
        %1844 = vmatpush1.bf16.xpose.msra.mxu0 0
        %1845 = vmatprep.subr.bf16.mxu0 0
        %1846 = vmatpush1.bf16.xpose.msra.mxu0 0
        %1847 = vmatprep.subr.bf16.mxu0 0
        %1848 = vmatpush1.bf16.xpose.msra.mxu0 0
        %1849 = vmatprep.subr.bf16.mxu0 0
        %1850 = vmatpush1.bf16.xpose.msra.mxu0 0
        %1851 = vmatprep.subr.bf16.mxu0 0
        %1852 = vmatpush1.bf16.xpose.msra.mxu0 0
        %1853 = vmatprep.mubr.bf16.mxu0 0
        %1854 = vmatmul.mubr.bf16.gmra.mrb[0].mxu0 %v1816
        %v1855 = vpop.f32.mrb[0].mxu0
        %v1856 = vadd.f32 0.0, %v1855
        %v1857 = vpop.f32.mrb[0].mxu0
        %v1858 = vpop.f32.mrb[0].mxu0
        %v1859 = vpop.f32.mrb[0].mxu0
        %1860 = vdwg.mxu0
        %1861 = vrot.lane.b32.xlu0 %v1301, 120
        %v1862 = vpop.permute.xlu0 %1861
        %1864 = vrot.lane.b32.xlu0 %v1287, 120
        %v1865 = vpop.permute.xlu0 %1864
        %v1867 = vsel %vm1302, %v1862, 0
        %v1870 = vsel %vm1302, %v1865, 0
        %1872 = vmatprep.subr.bf16.mxu0 0
        %1873 = vmatpush1.bf16.xpose.msra.mxu0 %v1870
        %1874 = vmatprep.subr.bf16.mxu0 0
        %1875 = vmatpush1.bf16.xpose.msra.mxu0 0
        %1876 = vmatprep.subr.bf16.mxu0 0
        %1877 = vmatpush1.bf16.xpose.msra.mxu0 0
        %1878 = vmatprep.subr.bf16.mxu0 0
        %1879 = vmatpush1.bf16.xpose.msra.mxu0 0
        %1880 = vmatprep.subr.bf16.mxu0 0
        %1881 = vmatpush1.bf16.xpose.msra.mxu0 0
        %1882 = vmatprep.subr.bf16.mxu0 0
        %1883 = vmatpush1.bf16.xpose.msra.mxu0 0
        %1884 = vmatprep.subr.bf16.mxu0 0
        %1885 = vmatpush1.bf16.xpose.msra.mxu0 0
        %1886 = vmatprep.subr.bf16.mxu0 0
        %1887 = vmatpush1.bf16.xpose.msra.mxu0 0
        %1888 = vmatprep.subr.bf16.mxu0 0
        %1889 = vmatpush1.bf16.xpose.msra.mxu0 0
        %1890 = vmatprep.subr.bf16.mxu0 0
        %1891 = vmatpush1.bf16.xpose.msra.mxu0 0
        %1892 = vmatprep.subr.bf16.mxu0 0
        %1893 = vmatpush1.bf16.xpose.msra.mxu0 0
        %1894 = vmatprep.subr.bf16.mxu0 0
        %1895 = vmatpush1.bf16.xpose.msra.mxu0 0
        %1896 = vmatprep.subr.bf16.mxu0 0
        %1897 = vmatpush1.bf16.xpose.msra.mxu0 0
        %1898 = vmatprep.subr.bf16.mxu0 0
        %1899 = vmatpush1.bf16.xpose.msra.mxu0 0
        %1900 = vmatprep.subr.bf16.mxu0 0
        %1901 = vmatpush1.bf16.xpose.msra.mxu0 0
        %1902 = vmatprep.subr.bf16.mxu0 0
        %1903 = vmatpush1.bf16.xpose.msra.mxu0 0
        %1904 = vmatprep.mubr.bf16.mxu0 0
        %1905 = vmatmul.mubr.bf16.gmra.mrb[0].mxu0 %v1867
        %v1906 = vpop.f32.mrb[0].mxu0
        %v1907 = vadd.f32 0.0, %v1906
        %v1908 = vpop.f32.mrb[0].mxu0
        %v1909 = vpop.f32.mrb[0].mxu0
        %v1910 = vpop.f32.mrb[0].mxu0
        %1911 = vdwg.mxu0
        %v1912 = vsel %vm1487, %v1754, -inf
        %1913 = vmax.xlane.f32.xlu0 %v1912
        %v1914 = vpop.xlane.xlu0 %1913
        %v1915 = vsel %vm1487, %v1805, -inf
        %1916 = vmax.xlane.f32.xlu0 %v1915
        %v1917 = vpop.xlane.xlu0 %1916
        %v1918 = vsel %vm1487, %v1856, -inf
        %1919 = vmax.xlane.f32.xlu0 %v1918
        %v1920 = vpop.xlane.xlu0 %1919
        %v1921 = vsel %vm1487, %v1907, -inf
        %1922 = vmax.xlane.f32.xlu0 %v1921
        %v1923 = vpop.xlane.xlu0 %1922
        %v1924 = vsub.f32 %v1754, %v1914
        %v1925 = vsub.f32 %v1805, %v1917
        %v1926 = vsub.f32 %v1856, %v1920
        %v1927 = vsub.f32 %v1907, %v1923
        %v1928 = vmul.f32 %v1924, 1.442695
        %v1929 = vpow.pop %v1928
        %v1930 = vmul.f32 %v1925, 1.442695
        %v1931 = vpow.pop %v1930
        %v1932 = vmul.f32 %v1926, 1.442695
        %v1933 = vpow.pop %v1932
        %v1934 = vmul.f32 %v1927, 1.442695
        %v1935 = vpow.pop %v1934
        %v1936 = vsel %vm1487, %v1929, 0.0
        %1937 = vadd.xlane.f32.xlu0 %v1936
        %v1938 = vpop.xlane.xlu0 %1937
        %v1939 = vsel %vm1487, %v1931, 0.0
        %1940 = vadd.xlane.f32.xlu0 %v1939
        %v1941 = vpop.xlane.xlu0 %1940
        %v1942 = vsel %vm1487, %v1933, 0.0
        %1943 = vadd.xlane.f32.xlu0 %v1942
        %v1944 = vpop.xlane.xlu0 %1943
        %v1945 = vsel %vm1487, %v1935, 0.0
        %1946 = vadd.xlane.f32.xlu0 %v1945
        %v1947 = vpop.xlane.xlu0 %1946
        %v1948 = vrcp.pop %v1938
        %v1949 = vrcp.pop %v1941
        %v1950 = vrcp.pop %v1944
        %v1951 = vrcp.pop %v1947
        %v1952 = vmul.f32 %v1929, %v1948
        %v1953 = vmul.f32 %v1931, %v1949
        %v1954 = vmul.f32 %v1933, %v1950
        %v1955 = vmul.f32 %v1935, %v1951
        %v1956 = vpack.c.bf16 %v1952, %v1952
        %v1957 = vpack.c.bf16 %v1953, %v1953
        %v1958 = vpack.c.bf16 %v1954, %v1954
        %v1959 = vpack.c.bf16 %v1955, %v1955
        %1961 = vrot.lane.b32.xlu0 %v1288, 120
        %v1962 = vpop.permute.xlu0 %1961
        %v1965 = vsel %vm1487, %v1956, 0
        %1967 = vmatprep.subr.bf16.mxu0 0
        %1968 = vmatpush1.bf16.msra.mxu0 %v1962
        %1969 = vmatprep.subr.bf16.mxu0 0
        %1970 = vmatpush1.bf16.msra.mxu0 0
        %1971 = vmatprep.subr.bf16.mxu0 0
        %1972 = vmatpush1.bf16.msra.mxu0 0
        %1973 = vmatprep.subr.bf16.mxu0 0
        %1974 = vmatpush1.bf16.msra.mxu0 0
        %1975 = vmatprep.subr.bf16.mxu0 0
        %1976 = vmatpush1.bf16.msra.mxu0 0
        %1977 = vmatprep.subr.bf16.mxu0 0
        %1978 = vmatpush1.bf16.msra.mxu0 0
        %1979 = vmatprep.subr.bf16.mxu0 0
        %1980 = vmatpush1.bf16.msra.mxu0 0
        %1981 = vmatprep.subr.bf16.mxu0 0
        %1982 = vmatpush1.bf16.msra.mxu0 0
        %1983 = vmatprep.subr.bf16.mxu0 0
        %1984 = vmatpush1.bf16.msra.mxu0 0
        %1985 = vmatprep.subr.bf16.mxu0 0
        %1986 = vmatpush1.bf16.msra.mxu0 0
        %1987 = vmatprep.subr.bf16.mxu0 0
        %1988 = vmatpush1.bf16.msra.mxu0 0
        %1989 = vmatprep.subr.bf16.mxu0 0
        %1990 = vmatpush1.bf16.msra.mxu0 0
        %1991 = vmatprep.subr.bf16.mxu0 0
        %1992 = vmatpush1.bf16.msra.mxu0 0
        %1993 = vmatprep.subr.bf16.mxu0 0
        %1994 = vmatpush1.bf16.msra.mxu0 0
        %1995 = vmatprep.subr.bf16.mxu0 0
        %1996 = vmatpush1.bf16.msra.mxu0 0
        %1997 = vmatprep.subr.bf16.mxu0 0
        %1998 = vmatpush1.bf16.msra.mxu0 0
        %1999 = vmatprep.mubr.bf16.mxu0 0
        %2000 = vmatmul.mubr.bf16.gmra.mrb[0].mxu0 %v1965
        %v2001 = vpop.f32.mrb[0].mxu0
        %v2002 = vadd.f32 0.0, %v2001
        %v2003 = vpop.f32.mrb[0].mxu0
        %v2004 = vpop.f32.mrb[0].mxu0
        %v2005 = vpop.f32.mrb[0].mxu0
        %2006 = vdwg.mxu0
        %2008 = vrot.lane.b32.xlu0 %v1289, 120
        %v2009 = vpop.permute.xlu0 %2008
        %v2012 = vsel %vm1487, %v1957, 0
        %2014 = vmatprep.subr.bf16.mxu0 0
        %2015 = vmatpush1.bf16.msra.mxu0 %v2009
        %2016 = vmatprep.subr.bf16.mxu0 0
        %2017 = vmatpush1.bf16.msra.mxu0 0
        %2018 = vmatprep.subr.bf16.mxu0 0
        %2019 = vmatpush1.bf16.msra.mxu0 0
        %2020 = vmatprep.subr.bf16.mxu0 0
        %2021 = vmatpush1.bf16.msra.mxu0 0
        %2022 = vmatprep.subr.bf16.mxu0 0
        %2023 = vmatpush1.bf16.msra.mxu0 0
        %2024 = vmatprep.subr.bf16.mxu0 0
        %2025 = vmatpush1.bf16.msra.mxu0 0
        %2026 = vmatprep.subr.bf16.mxu0 0
        %2027 = vmatpush1.bf16.msra.mxu0 0
        %2028 = vmatprep.subr.bf16.mxu0 0
        %2029 = vmatpush1.bf16.msra.mxu0 0
        %2030 = vmatprep.subr.bf16.mxu0 0
        %2031 = vmatpush1.bf16.msra.mxu0 0
        %2032 = vmatprep.subr.bf16.mxu0 0
        %2033 = vmatpush1.bf16.msra.mxu0 0
        %2034 = vmatprep.subr.bf16.mxu0 0
        %2035 = vmatpush1.bf16.msra.mxu0 0
        %2036 = vmatprep.subr.bf16.mxu0 0
        %2037 = vmatpush1.bf16.msra.mxu0 0
        %2038 = vmatprep.subr.bf16.mxu0 0
        %2039 = vmatpush1.bf16.msra.mxu0 0
        %2040 = vmatprep.subr.bf16.mxu0 0
        %2041 = vmatpush1.bf16.msra.mxu0 0
        %2042 = vmatprep.subr.bf16.mxu0 0
        %2043 = vmatpush1.bf16.msra.mxu0 0
        %2044 = vmatprep.subr.bf16.mxu0 0
        %2045 = vmatpush1.bf16.msra.mxu0 0
        %2046 = vmatprep.mubr.bf16.mxu0 0
        %2047 = vmatmul.mubr.bf16.gmra.mrb[0].mxu0 %v2012
        %v2048 = vpop.f32.mrb[0].mxu0
        %v2049 = vadd.f32 0.0, %v2048
        %v2050 = vpop.f32.mrb[0].mxu0
        %v2051 = vpop.f32.mrb[0].mxu0
        %v2052 = vpop.f32.mrb[0].mxu0
        %2053 = vdwg.mxu0
        %2055 = vrot.lane.b32.xlu0 %v1290, 120
        %v2056 = vpop.permute.xlu0 %2055
        %v2059 = vsel %vm1487, %v1958, 0
        %2061 = vmatprep.subr.bf16.mxu0 0
        %2062 = vmatpush1.bf16.msra.mxu0 %v2056
        %2063 = vmatprep.subr.bf16.mxu0 0
        %2064 = vmatpush1.bf16.msra.mxu0 0
        %2065 = vmatprep.subr.bf16.mxu0 0
        %2066 = vmatpush1.bf16.msra.mxu0 0
        %2067 = vmatprep.subr.bf16.mxu0 0
        %2068 = vmatpush1.bf16.msra.mxu0 0
        %2069 = vmatprep.subr.bf16.mxu0 0
        %2070 = vmatpush1.bf16.msra.mxu0 0
        %2071 = vmatprep.subr.bf16.mxu0 0
        %2072 = vmatpush1.bf16.msra.mxu0 0
        %2073 = vmatprep.subr.bf16.mxu0 0
        %2074 = vmatpush1.bf16.msra.mxu0 0
        %2075 = vmatprep.subr.bf16.mxu0 0
        %2076 = vmatpush1.bf16.msra.mxu0 0
        %2077 = vmatprep.subr.bf16.mxu0 0
        %2078 = vmatpush1.bf16.msra.mxu0 0
        %2079 = vmatprep.subr.bf16.mxu0 0
        %2080 = vmatpush1.bf16.msra.mxu0 0
        %2081 = vmatprep.subr.bf16.mxu0 0
        %2082 = vmatpush1.bf16.msra.mxu0 0
        %2083 = vmatprep.subr.bf16.mxu0 0
        %2084 = vmatpush1.bf16.msra.mxu0 0
        %2085 = vmatprep.subr.bf16.mxu0 0
        %2086 = vmatpush1.bf16.msra.mxu0 0
        %2087 = vmatprep.subr.bf16.mxu0 0
        %2088 = vmatpush1.bf16.msra.mxu0 0
        %2089 = vmatprep.subr.bf16.mxu0 0
        %2090 = vmatpush1.bf16.msra.mxu0 0
        %2091 = vmatprep.subr.bf16.mxu0 0
        %2092 = vmatpush1.bf16.msra.mxu0 0
        %2093 = vmatprep.mubr.bf16.mxu0 0
        %2094 = vmatmul.mubr.bf16.gmra.mrb[0].mxu0 %v2059
        %v2095 = vpop.f32.mrb[0].mxu0
        %v2096 = vadd.f32 0.0, %v2095
        %v2097 = vpop.f32.mrb[0].mxu0
        %v2098 = vpop.f32.mrb[0].mxu0
        %v2099 = vpop.f32.mrb[0].mxu0
        %2100 = vdwg.mxu0
        %2102 = vrot.lane.b32.xlu0 %v1291, 120
        %v2103 = vpop.permute.xlu0 %2102
        %v2106 = vsel %vm1487, %v1959, 0
        %2108 = vmatprep.subr.bf16.mxu0 0
        %2109 = vmatpush1.bf16.msra.mxu0 %v2103
        %2110 = vmatprep.subr.bf16.mxu0 0
        %2111 = vmatpush1.bf16.msra.mxu0 0
        %2112 = vmatprep.subr.bf16.mxu0 0
        %2113 = vmatpush1.bf16.msra.mxu0 0
        %2114 = vmatprep.subr.bf16.mxu0 0
        %2115 = vmatpush1.bf16.msra.mxu0 0
        %2116 = vmatprep.subr.bf16.mxu0 0
        %2117 = vmatpush1.bf16.msra.mxu0 0
        %2118 = vmatprep.subr.bf16.mxu0 0
        %2119 = vmatpush1.bf16.msra.mxu0 0
        %2120 = vmatprep.subr.bf16.mxu0 0
        %2121 = vmatpush1.bf16.msra.mxu0 0
        %2122 = vmatprep.subr.bf16.mxu0 0
        %2123 = vmatpush1.bf16.msra.mxu0 0
        %2124 = vmatprep.subr.bf16.mxu0 0
        %2125 = vmatpush1.bf16.msra.mxu0 0
        %2126 = vmatprep.subr.bf16.mxu0 0
        %2127 = vmatpush1.bf16.msra.mxu0 0
        %2128 = vmatprep.subr.bf16.mxu0 0
        %2129 = vmatpush1.bf16.msra.mxu0 0
        %2130 = vmatprep.subr.bf16.mxu0 0
        %2131 = vmatpush1.bf16.msra.mxu0 0
        %2132 = vmatprep.subr.bf16.mxu0 0
        %2133 = vmatpush1.bf16.msra.mxu0 0
        %2134 = vmatprep.subr.bf16.mxu0 0
        %2135 = vmatpush1.bf16.msra.mxu0 0
        %2136 = vmatprep.subr.bf16.mxu0 0
        %2137 = vmatpush1.bf16.msra.mxu0 0
        %2138 = vmatprep.subr.bf16.mxu0 0
        %2139 = vmatpush1.bf16.msra.mxu0 0
        %2140 = vmatprep.mubr.bf16.mxu0 0
        %2141 = vmatmul.mubr.bf16.gmra.mrb[0].mxu0 %v2106
        %v2142 = vpop.f32.mrb[0].mxu0
        %v2143 = vadd.f32 0.0, %v2142
        %v2144 = vpop.f32.mrb[0].mxu0
        %v2145 = vpop.f32.mrb[0].mxu0
        %v2146 = vpop.f32.mrb[0].mxu0
        %2147 = vdwg.mxu0
        %2148 = vrot.lane.b32.xlu0 %v1298, 112
        %v2149 = vpop.permute.xlu0 %2148
        %2150 = vrot.lane.b32.xlu0 %v1284, 112
        %v2151 = vpop.permute.xlu0 %2150
        %v2153 = vsel %vm1302, %v2149, 0
        %v2156 = vsel %vm1302, %v2151, 0
        %2158 = vmatprep.subr.bf16.mxu0 0
        %2159 = vmatpush1.bf16.xpose.msra.mxu0 %v2156
        %2160 = vmatprep.subr.bf16.mxu0 0
        %2161 = vmatpush1.bf16.xpose.msra.mxu0 0
        %2162 = vmatprep.subr.bf16.mxu0 0
        %2163 = vmatpush1.bf16.xpose.msra.mxu0 0
        %2164 = vmatprep.subr.bf16.mxu0 0
        %2165 = vmatpush1.bf16.xpose.msra.mxu0 0
        %2166 = vmatprep.subr.bf16.mxu0 0
        %2167 = vmatpush1.bf16.xpose.msra.mxu0 0
        %2168 = vmatprep.subr.bf16.mxu0 0
        %2169 = vmatpush1.bf16.xpose.msra.mxu0 0
        %2170 = vmatprep.subr.bf16.mxu0 0
        %2171 = vmatpush1.bf16.xpose.msra.mxu0 0
        %2172 = vmatprep.subr.bf16.mxu0 0
        %2173 = vmatpush1.bf16.xpose.msra.mxu0 0
        %2174 = vmatprep.subr.bf16.mxu0 0
        %2175 = vmatpush1.bf16.xpose.msra.mxu0 0
        %2176 = vmatprep.subr.bf16.mxu0 0
        %2177 = vmatpush1.bf16.xpose.msra.mxu0 0
        %2178 = vmatprep.subr.bf16.mxu0 0
        %2179 = vmatpush1.bf16.xpose.msra.mxu0 0
        %2180 = vmatprep.subr.bf16.mxu0 0
        %2181 = vmatpush1.bf16.xpose.msra.mxu0 0
        %2182 = vmatprep.subr.bf16.mxu0 0
        %2183 = vmatpush1.bf16.xpose.msra.mxu0 0
        %2184 = vmatprep.subr.bf16.mxu0 0
        %2185 = vmatpush1.bf16.xpose.msra.mxu0 0
        %2186 = vmatprep.subr.bf16.mxu0 0
        %2187 = vmatpush1.bf16.xpose.msra.mxu0 0
        %2188 = vmatprep.subr.bf16.mxu0 0
        %2189 = vmatpush1.bf16.xpose.msra.mxu0 0
        %2190 = vmatprep.mubr.bf16.mxu0 0
        %2191 = vmatmul.mubr.bf16.gmra.mrb[0].mxu0 %v2153
        %v2192 = vpop.f32.mrb[0].mxu0
        %v2193 = vadd.f32 0.0, %v2192
        %v2194 = vpop.f32.mrb[0].mxu0
        %v2195 = vpop.f32.mrb[0].mxu0
        %v2196 = vpop.f32.mrb[0].mxu0
        %2197 = vdwg.mxu0
        %2198 = vrot.lane.b32.xlu0 %v1299, 112
        %v2199 = vpop.permute.xlu0 %2198
        %2200 = vrot.lane.b32.xlu0 %v1285, 112
        %v2201 = vpop.permute.xlu0 %2200
        %v2203 = vsel %vm1302, %v2199, 0
        %v2206 = vsel %vm1302, %v2201, 0
        %2208 = vmatprep.subr.bf16.mxu0 0
        %2209 = vmatpush1.bf16.xpose.msra.mxu0 %v2206
        %2210 = vmatprep.subr.bf16.mxu0 0
        %2211 = vmatpush1.bf16.xpose.msra.mxu0 0
        %2212 = vmatprep.subr.bf16.mxu0 0
        %2213 = vmatpush1.bf16.xpose.msra.mxu0 0
        %2214 = vmatprep.subr.bf16.mxu0 0
        %2215 = vmatpush1.bf16.xpose.msra.mxu0 0
        %2216 = vmatprep.subr.bf16.mxu0 0
        %2217 = vmatpush1.bf16.xpose.msra.mxu0 0
        %2218 = vmatprep.subr.bf16.mxu0 0
        %2219 = vmatpush1.bf16.xpose.msra.mxu0 0
        %2220 = vmatprep.subr.bf16.mxu0 0
        %2221 = vmatpush1.bf16.xpose.msra.mxu0 0
        %2222 = vmatprep.subr.bf16.mxu0 0
        %2223 = vmatpush1.bf16.xpose.msra.mxu0 0
        %2224 = vmatprep.subr.bf16.mxu0 0
        %2225 = vmatpush1.bf16.xpose.msra.mxu0 0
        %2226 = vmatprep.subr.bf16.mxu0 0
        %2227 = vmatpush1.bf16.xpose.msra.mxu0 0
        %2228 = vmatprep.subr.bf16.mxu0 0
        %2229 = vmatpush1.bf16.xpose.msra.mxu0 0
        %2230 = vmatprep.subr.bf16.mxu0 0
        %2231 = vmatpush1.bf16.xpose.msra.mxu0 0
        %2232 = vmatprep.subr.bf16.mxu0 0
        %2233 = vmatpush1.bf16.xpose.msra.mxu0 0
        %2234 = vmatprep.subr.bf16.mxu0 0
        %2235 = vmatpush1.bf16.xpose.msra.mxu0 0
        %2236 = vmatprep.subr.bf16.mxu0 0
        %2237 = vmatpush1.bf16.xpose.msra.mxu0 0
        %2238 = vmatprep.subr.bf16.mxu0 0
        %2239 = vmatpush1.bf16.xpose.msra.mxu0 0
        %2240 = vmatprep.mubr.bf16.mxu0 0
        %2241 = vmatmul.mubr.bf16.gmra.mrb[0].mxu0 %v2203
        %v2242 = vpop.f32.mrb[0].mxu0
        %v2243 = vadd.f32 0.0, %v2242
        %v2244 = vpop.f32.mrb[0].mxu0
        %v2245 = vpop.f32.mrb[0].mxu0
        %v2246 = vpop.f32.mrb[0].mxu0
        %2247 = vdwg.mxu0
        %2248 = vrot.lane.b32.xlu0 %v1300, 112
        %v2249 = vpop.permute.xlu0 %2248
        %2250 = vrot.lane.b32.xlu0 %v1286, 112
        %v2251 = vpop.permute.xlu0 %2250
        %v2253 = vsel %vm1302, %v2249, 0
        %v2256 = vsel %vm1302, %v2251, 0
        %2258 = vmatprep.subr.bf16.mxu0 0
        %2259 = vmatpush1.bf16.xpose.msra.mxu0 %v2256
        %2260 = vmatprep.subr.bf16.mxu0 0
        %2261 = vmatpush1.bf16.xpose.msra.mxu0 0
        %2262 = vmatprep.subr.bf16.mxu0 0
        %2263 = vmatpush1.bf16.xpose.msra.mxu0 0
        %2264 = vmatprep.subr.bf16.mxu0 0
        %2265 = vmatpush1.bf16.xpose.msra.mxu0 0
        %2266 = vmatprep.subr.bf16.mxu0 0
        %2267 = vmatpush1.bf16.xpose.msra.mxu0 0
        %2268 = vmatprep.subr.bf16.mxu0 0
        %2269 = vmatpush1.bf16.xpose.msra.mxu0 0
        %2270 = vmatprep.subr.bf16.mxu0 0
        %2271 = vmatpush1.bf16.xpose.msra.mxu0 0
        %2272 = vmatprep.subr.bf16.mxu0 0
        %2273 = vmatpush1.bf16.xpose.msra.mxu0 0
        %2274 = vmatprep.subr.bf16.mxu0 0
        %2275 = vmatpush1.bf16.xpose.msra.mxu0 0
        %2276 = vmatprep.subr.bf16.mxu0 0
        %2277 = vmatpush1.bf16.xpose.msra.mxu0 0
        %2278 = vmatprep.subr.bf16.mxu0 0
        %2279 = vmatpush1.bf16.xpose.msra.mxu0 0
        %2280 = vmatprep.subr.bf16.mxu0 0
        %2281 = vmatpush1.bf16.xpose.msra.mxu0 0
        %2282 = vmatprep.subr.bf16.mxu0 0
        %2283 = vmatpush1.bf16.xpose.msra.mxu0 0
        %2284 = vmatprep.subr.bf16.mxu0 0
        %2285 = vmatpush1.bf16.xpose.msra.mxu0 0
        %2286 = vmatprep.subr.bf16.mxu0 0
        %2287 = vmatpush1.bf16.xpose.msra.mxu0 0
        %2288 = vmatprep.subr.bf16.mxu0 0
        %2289 = vmatpush1.bf16.xpose.msra.mxu0 0
        %2290 = vmatprep.mubr.bf16.mxu0 0
        %2291 = vmatmul.mubr.bf16.gmra.mrb[0].mxu0 %v2253
        %v2292 = vpop.f32.mrb[0].mxu0
        %v2293 = vadd.f32 0.0, %v2292
        %v2294 = vpop.f32.mrb[0].mxu0
        %v2295 = vpop.f32.mrb[0].mxu0
        %v2296 = vpop.f32.mrb[0].mxu0
        %2297 = vdwg.mxu0
        %2298 = vrot.lane.b32.xlu0 %v1301, 112
        %v2299 = vpop.permute.xlu0 %2298
        %2300 = vrot.lane.b32.xlu0 %v1287, 112
        %v2301 = vpop.permute.xlu0 %2300
        %v2303 = vsel %vm1302, %v2299, 0
        %v2306 = vsel %vm1302, %v2301, 0
        %2308 = vmatprep.subr.bf16.mxu0 0
        %2309 = vmatpush1.bf16.xpose.msra.mxu0 %v2306
        %2310 = vmatprep.subr.bf16.mxu0 0
        %2311 = vmatpush1.bf16.xpose.msra.mxu0 0
        %2312 = vmatprep.subr.bf16.mxu0 0
        %2313 = vmatpush1.bf16.xpose.msra.mxu0 0
        %2314 = vmatprep.subr.bf16.mxu0 0
        %2315 = vmatpush1.bf16.xpose.msra.mxu0 0
        %2316 = vmatprep.subr.bf16.mxu0 0
        %2317 = vmatpush1.bf16.xpose.msra.mxu0 0
        %2318 = vmatprep.subr.bf16.mxu0 0
        %2319 = vmatpush1.bf16.xpose.msra.mxu0 0
        %2320 = vmatprep.subr.bf16.mxu0 0
        %2321 = vmatpush1.bf16.xpose.msra.mxu0 0
        %2322 = vmatprep.subr.bf16.mxu0 0
        %2323 = vmatpush1.bf16.xpose.msra.mxu0 0
        %2324 = vmatprep.subr.bf16.mxu0 0
        %2325 = vmatpush1.bf16.xpose.msra.mxu0 0
        %2326 = vmatprep.subr.bf16.mxu0 0
        %2327 = vmatpush1.bf16.xpose.msra.mxu0 0
        %2328 = vmatprep.subr.bf16.mxu0 0
        %2329 = vmatpush1.bf16.xpose.msra.mxu0 0
        %2330 = vmatprep.subr.bf16.mxu0 0
        %2331 = vmatpush1.bf16.xpose.msra.mxu0 0
        %2332 = vmatprep.subr.bf16.mxu0 0
        %2333 = vmatpush1.bf16.xpose.msra.mxu0 0
        %2334 = vmatprep.subr.bf16.mxu0 0
        %2335 = vmatpush1.bf16.xpose.msra.mxu0 0
        %2336 = vmatprep.subr.bf16.mxu0 0
        %2337 = vmatpush1.bf16.xpose.msra.mxu0 0
        %2338 = vmatprep.subr.bf16.mxu0 0
        %2339 = vmatpush1.bf16.xpose.msra.mxu0 0
        %2340 = vmatprep.mubr.bf16.mxu0 0
        %2341 = vmatmul.mubr.bf16.gmra.mrb[0].mxu0 %v2303
        %v2342 = vpop.f32.mrb[0].mxu0
        %v2343 = vadd.f32 0.0, %v2342
        %v2344 = vpop.f32.mrb[0].mxu0
        %v2345 = vpop.f32.mrb[0].mxu0
        %v2346 = vpop.f32.mrb[0].mxu0
        %2347 = vdwg.mxu0
        %v2348 = vsel %vm1487, %v2193, -inf
        %2349 = vmax.xlane.f32.xlu0 %v2348
        %v2350 = vpop.xlane.xlu0 %2349
        %v2351 = vsel %vm1487, %v2243, -inf
        %2352 = vmax.xlane.f32.xlu0 %v2351
        %v2353 = vpop.xlane.xlu0 %2352
        %v2354 = vsel %vm1487, %v2293, -inf
        %2355 = vmax.xlane.f32.xlu0 %v2354
        %v2356 = vpop.xlane.xlu0 %2355
        %v2357 = vsel %vm1487, %v2343, -inf
        %2358 = vmax.xlane.f32.xlu0 %v2357
        %v2359 = vpop.xlane.xlu0 %2358
        %v2360 = vsub.f32 %v2193, %v2350
        %v2361 = vsub.f32 %v2243, %v2353
        %v2362 = vsub.f32 %v2293, %v2356
        %v2363 = vsub.f32 %v2343, %v2359
        %v2364 = vmul.f32 %v2360, 1.442695
        %v2365 = vpow.pop %v2364
        %v2366 = vmul.f32 %v2361, 1.442695
        %v2367 = vpow.pop %v2366
        %v2368 = vmul.f32 %v2362, 1.442695
        %v2369 = vpow.pop %v2368
        %v2370 = vmul.f32 %v2363, 1.442695
        %v2371 = vpow.pop %v2370
        %v2372 = vsel %vm1487, %v2365, 0.0
        %2373 = vadd.xlane.f32.xlu0 %v2372
        %v2374 = vpop.xlane.xlu0 %2373
        %v2375 = vsel %vm1487, %v2367, 0.0
        %2376 = vadd.xlane.f32.xlu0 %v2375
        %v2377 = vpop.xlane.xlu0 %2376
        %v2378 = vsel %vm1487, %v2369, 0.0
        %2379 = vadd.xlane.f32.xlu0 %v2378
        %v2380 = vpop.xlane.xlu0 %2379
        %v2381 = vsel %vm1487, %v2371, 0.0
        %2382 = vadd.xlane.f32.xlu0 %v2381
        %v2383 = vpop.xlane.xlu0 %2382
        %v2384 = vrcp.pop %v2374
        %v2385 = vrcp.pop %v2377
        %v2386 = vrcp.pop %v2380
        %v2387 = vrcp.pop %v2383
        %v2388 = vmul.f32 %v2365, %v2384
        %v2389 = vmul.f32 %v2367, %v2385
        %v2390 = vmul.f32 %v2369, %v2386
        %v2391 = vmul.f32 %v2371, %v2387
        %v2392 = vpack.c.bf16 %v2388, %v2388
        %v2393 = vpack.c.bf16 %v2389, %v2389
        %v2394 = vpack.c.bf16 %v2390, %v2390
        %v2395 = vpack.c.bf16 %v2391, %v2391
        %2396 = vrot.lane.b32.xlu0 %v1288, 112
        %v2397 = vpop.permute.xlu0 %2396
        %v2400 = vsel %vm1487, %v2392, 0
        %2402 = vmatprep.subr.bf16.mxu0 0
        %2403 = vmatpush1.bf16.msra.mxu0 %v2397
        %2404 = vmatprep.subr.bf16.mxu0 0
        %2405 = vmatpush1.bf16.msra.mxu0 0
        %2406 = vmatprep.subr.bf16.mxu0 0
        %2407 = vmatpush1.bf16.msra.mxu0 0
        %2408 = vmatprep.subr.bf16.mxu0 0
        %2409 = vmatpush1.bf16.msra.mxu0 0
        %2410 = vmatprep.subr.bf16.mxu0 0
        %2411 = vmatpush1.bf16.msra.mxu0 0
        %2412 = vmatprep.subr.bf16.mxu0 0
        %2413 = vmatpush1.bf16.msra.mxu0 0
        %2414 = vmatprep.subr.bf16.mxu0 0
        %2415 = vmatpush1.bf16.msra.mxu0 0
        %2416 = vmatprep.subr.bf16.mxu0 0
        %2417 = vmatpush1.bf16.msra.mxu0 0
        %2418 = vmatprep.subr.bf16.mxu0 0
        %2419 = vmatpush1.bf16.msra.mxu0 0
        %2420 = vmatprep.subr.bf16.mxu0 0
        %2421 = vmatpush1.bf16.msra.mxu0 0
        %2422 = vmatprep.subr.bf16.mxu0 0
        %2423 = vmatpush1.bf16.msra.mxu0 0
        %2424 = vmatprep.subr.bf16.mxu0 0
        %2425 = vmatpush1.bf16.msra.mxu0 0
        %2426 = vmatprep.subr.bf16.mxu0 0
        %2427 = vmatpush1.bf16.msra.mxu0 0
        %2428 = vmatprep.subr.bf16.mxu0 0
        %2429 = vmatpush1.bf16.msra.mxu0 0
        %2430 = vmatprep.subr.bf16.mxu0 0
        %2431 = vmatpush1.bf16.msra.mxu0 0
        %2432 = vmatprep.subr.bf16.mxu0 0
        %2433 = vmatpush1.bf16.msra.mxu0 0
        %2434 = vmatprep.mubr.bf16.mxu0 0
        %2435 = vmatmul.mubr.bf16.gmra.mrb[0].mxu0 %v2400
        %v2436 = vpop.f32.mrb[0].mxu0
        %v2437 = vadd.f32 0.0, %v2436
        %v2438 = vpop.f32.mrb[0].mxu0
        %v2439 = vpop.f32.mrb[0].mxu0
        %v2440 = vpop.f32.mrb[0].mxu0
        %2441 = vdwg.mxu0
        %2442 = vrot.lane.b32.xlu0 %v1289, 112
        %v2443 = vpop.permute.xlu0 %2442
        %v2446 = vsel %vm1487, %v2393, 0
        %2448 = vmatprep.subr.bf16.mxu0 0
        %2449 = vmatpush1.bf16.msra.mxu0 %v2443
        %2450 = vmatprep.subr.bf16.mxu0 0
        %2451 = vmatpush1.bf16.msra.mxu0 0
        %2452 = vmatprep.subr.bf16.mxu0 0
        %2453 = vmatpush1.bf16.msra.mxu0 0
        %2454 = vmatprep.subr.bf16.mxu0 0
        %2455 = vmatpush1.bf16.msra.mxu0 0
        %2456 = vmatprep.subr.bf16.mxu0 0
        %2457 = vmatpush1.bf16.msra.mxu0 0
        %2458 = vmatprep.subr.bf16.mxu0 0
        %2459 = vmatpush1.bf16.msra.mxu0 0
        %2460 = vmatprep.subr.bf16.mxu0 0
        %2461 = vmatpush1.bf16.msra.mxu0 0
        %2462 = vmatprep.subr.bf16.mxu0 0
        %2463 = vmatpush1.bf16.msra.mxu0 0
        %2464 = vmatprep.subr.bf16.mxu0 0
        %2465 = vmatpush1.bf16.msra.mxu0 0
        %2466 = vmatprep.subr.bf16.mxu0 0
        %2467 = vmatpush1.bf16.msra.mxu0 0
        %2468 = vmatprep.subr.bf16.mxu0 0
        %2469 = vmatpush1.bf16.msra.mxu0 0
        %2470 = vmatprep.subr.bf16.mxu0 0
        %2471 = vmatpush1.bf16.msra.mxu0 0
        %2472 = vmatprep.subr.bf16.mxu0 0
        %2473 = vmatpush1.bf16.msra.mxu0 0
        %2474 = vmatprep.subr.bf16.mxu0 0
        %2475 = vmatpush1.bf16.msra.mxu0 0
        %2476 = vmatprep.subr.bf16.mxu0 0
        %2477 = vmatpush1.bf16.msra.mxu0 0
        %2478 = vmatprep.subr.bf16.mxu0 0
        %2479 = vmatpush1.bf16.msra.mxu0 0
        %2480 = vmatprep.mubr.bf16.mxu0 0
        %2481 = vmatmul.mubr.bf16.gmra.mrb[0].mxu0 %v2446
        %v2482 = vpop.f32.mrb[0].mxu0
        %v2483 = vadd.f32 0.0, %v2482
        %v2484 = vpop.f32.mrb[0].mxu0
        %v2485 = vpop.f32.mrb[0].mxu0
        %v2486 = vpop.f32.mrb[0].mxu0
        %2487 = vdwg.mxu0
        %2488 = vrot.lane.b32.xlu0 %v1290, 112
        %v2489 = vpop.permute.xlu0 %2488
        %v2492 = vsel %vm1487, %v2394, 0
        %2494 = vmatprep.subr.bf16.mxu0 0
        %2495 = vmatpush1.bf16.msra.mxu0 %v2489
        %2496 = vmatprep.subr.bf16.mxu0 0
        %2497 = vmatpush1.bf16.msra.mxu0 0
        %2498 = vmatprep.subr.bf16.mxu0 0
        %2499 = vmatpush1.bf16.msra.mxu0 0
        %2500 = vmatprep.subr.bf16.mxu0 0
        %2501 = vmatpush1.bf16.msra.mxu0 0
        %2502 = vmatprep.subr.bf16.mxu0 0
        %2503 = vmatpush1.bf16.msra.mxu0 0
        %2504 = vmatprep.subr.bf16.mxu0 0
        %2505 = vmatpush1.bf16.msra.mxu0 0
        %2506 = vmatprep.subr.bf16.mxu0 0
        %2507 = vmatpush1.bf16.msra.mxu0 0
        %2508 = vmatprep.subr.bf16.mxu0 0
        %2509 = vmatpush1.bf16.msra.mxu0 0
        %2510 = vmatprep.subr.bf16.mxu0 0
        %2511 = vmatpush1.bf16.msra.mxu0 0
        %2512 = vmatprep.subr.bf16.mxu0 0
        %2513 = vmatpush1.bf16.msra.mxu0 0
        %2514 = vmatprep.subr.bf16.mxu0 0
        %2515 = vmatpush1.bf16.msra.mxu0 0
        %2516 = vmatprep.subr.bf16.mxu0 0
        %2517 = vmatpush1.bf16.msra.mxu0 0
        %2518 = vmatprep.subr.bf16.mxu0 0
        %2519 = vmatpush1.bf16.msra.mxu0 0
        %2520 = vmatprep.subr.bf16.mxu0 0
        %2521 = vmatpush1.bf16.msra.mxu0 0
        %2522 = vmatprep.subr.bf16.mxu0 0
        %2523 = vmatpush1.bf16.msra.mxu0 0
        %2524 = vmatprep.subr.bf16.mxu0 0
        %2525 = vmatpush1.bf16.msra.mxu0 0
        %2526 = vmatprep.mubr.bf16.mxu0 0
        %2527 = vmatmul.mubr.bf16.gmra.mrb[0].mxu0 %v2492
        %v2528 = vpop.f32.mrb[0].mxu0
        %v2529 = vadd.f32 0.0, %v2528
        %v2530 = vpop.f32.mrb[0].mxu0
        %v2531 = vpop.f32.mrb[0].mxu0
        %v2532 = vpop.f32.mrb[0].mxu0
        %2533 = vdwg.mxu0
        %2534 = vrot.lane.b32.xlu0 %v1291, 112
        %v2535 = vpop.permute.xlu0 %2534
        %v2538 = vsel %vm1487, %v2395, 0
        %2540 = vmatprep.subr.bf16.mxu0 0
        %2541 = vmatpush1.bf16.msra.mxu0 %v2535
        %2542 = vmatprep.subr.bf16.mxu0 0
        %2543 = vmatpush1.bf16.msra.mxu0 0
        %2544 = vmatprep.subr.bf16.mxu0 0
        %2545 = vmatpush1.bf16.msra.mxu0 0
        %2546 = vmatprep.subr.bf16.mxu0 0
        %2547 = vmatpush1.bf16.msra.mxu0 0
        %2548 = vmatprep.subr.bf16.mxu0 0
        %2549 = vmatpush1.bf16.msra.mxu0 0
        %2550 = vmatprep.subr.bf16.mxu0 0
        %2551 = vmatpush1.bf16.msra.mxu0 0
        %2552 = vmatprep.subr.bf16.mxu0 0
        %2553 = vmatpush1.bf16.msra.mxu0 0
        %2554 = vmatprep.subr.bf16.mxu0 0
        %2555 = vmatpush1.bf16.msra.mxu0 0
        %2556 = vmatprep.subr.bf16.mxu0 0
        %2557 = vmatpush1.bf16.msra.mxu0 0
        %2558 = vmatprep.subr.bf16.mxu0 0
        %2559 = vmatpush1.bf16.msra.mxu0 0
        %2560 = vmatprep.subr.bf16.mxu0 0
        %2561 = vmatpush1.bf16.msra.mxu0 0
        %2562 = vmatprep.subr.bf16.mxu0 0
        %2563 = vmatpush1.bf16.msra.mxu0 0
        %2564 = vmatprep.subr.bf16.mxu0 0
        %2565 = vmatpush1.bf16.msra.mxu0 0
        %2566 = vmatprep.subr.bf16.mxu0 0
        %2567 = vmatpush1.bf16.msra.mxu0 0
        %2568 = vmatprep.subr.bf16.mxu0 0
        %2569 = vmatpush1.bf16.msra.mxu0 0
        %2570 = vmatprep.subr.bf16.mxu0 0
        %2571 = vmatpush1.bf16.msra.mxu0 0
        %2572 = vmatprep.mubr.bf16.mxu0 0
        %2573 = vmatmul.mubr.bf16.gmra.mrb[0].mxu0 %v2538
        %v2574 = vpop.f32.mrb[0].mxu0
        %v2575 = vadd.f32 0.0, %v2574
        %v2576 = vpop.f32.mrb[0].mxu0
        %v2577 = vpop.f32.mrb[0].mxu0
        %v2578 = vpop.f32.mrb[0].mxu0
        %2579 = vdwg.mxu0
        %2580 = vrot.lane.b32.xlu0 %v1298, 104
        %v2581 = vpop.permute.xlu0 %2580
        %2582 = vrot.lane.b32.xlu0 %v1284, 104
        %v2583 = vpop.permute.xlu0 %2582
        %v2585 = vsel %vm1302, %v2581, 0
        %v2588 = vsel %vm1302, %v2583, 0
        %2590 = vmatprep.subr.bf16.mxu0 0
        %2591 = vmatpush1.bf16.xpose.msra.mxu0 %v2588
        %2592 = vmatprep.subr.bf16.mxu0 0
        %2593 = vmatpush1.bf16.xpose.msra.mxu0 0
        %2594 = vmatprep.subr.bf16.mxu0 0
        %2595 = vmatpush1.bf16.xpose.msra.mxu0 0
        %2596 = vmatprep.subr.bf16.mxu0 0
        %2597 = vmatpush1.bf16.xpose.msra.mxu0 0
        %2598 = vmatprep.subr.bf16.mxu0 0
        %2599 = vmatpush1.bf16.xpose.msra.mxu0 0
        %2600 = vmatprep.subr.bf16.mxu0 0
        %2601 = vmatpush1.bf16.xpose.msra.mxu0 0
        %2602 = vmatprep.subr.bf16.mxu0 0
        %2603 = vmatpush1.bf16.xpose.msra.mxu0 0
        %2604 = vmatprep.subr.bf16.mxu0 0
        %2605 = vmatpush1.bf16.xpose.msra.mxu0 0
        %2606 = vmatprep.subr.bf16.mxu0 0
        %2607 = vmatpush1.bf16.xpose.msra.mxu0 0
        %2608 = vmatprep.subr.bf16.mxu0 0
        %2609 = vmatpush1.bf16.xpose.msra.mxu0 0
        %2610 = vmatprep.subr.bf16.mxu0 0
        %2611 = vmatpush1.bf16.xpose.msra.mxu0 0
        %2612 = vmatprep.subr.bf16.mxu0 0
        %2613 = vmatpush1.bf16.xpose.msra.mxu0 0
        %2614 = vmatprep.subr.bf16.mxu0 0
        %2615 = vmatpush1.bf16.xpose.msra.mxu0 0
        %2616 = vmatprep.subr.bf16.mxu0 0
        %2617 = vmatpush1.bf16.xpose.msra.mxu0 0
        %2618 = vmatprep.subr.bf16.mxu0 0
        %2619 = vmatpush1.bf16.xpose.msra.mxu0 0
        %2620 = vmatprep.subr.bf16.mxu0 0
        %2621 = vmatpush1.bf16.xpose.msra.mxu0 0
        %2622 = vmatprep.mubr.bf16.mxu0 0
        %2623 = vmatmul.mubr.bf16.gmra.mrb[0].mxu0 %v2585
        %v2624 = vpop.f32.mrb[0].mxu0
        %v2625 = vadd.f32 0.0, %v2624
        %v2626 = vpop.f32.mrb[0].mxu0
        %v2627 = vpop.f32.mrb[0].mxu0
        %v2628 = vpop.f32.mrb[0].mxu0
        %2629 = vdwg.mxu0
        %2630 = vrot.lane.b32.xlu0 %v1299, 104
        %v2631 = vpop.permute.xlu0 %2630
        %2632 = vrot.lane.b32.xlu0 %v1285, 104
        %v2633 = vpop.permute.xlu0 %2632
        %v2635 = vsel %vm1302, %v2631, 0
        %v2638 = vsel %vm1302, %v2633, 0
        %2640 = vmatprep.subr.bf16.mxu0 0
        %2641 = vmatpush1.bf16.xpose.msra.mxu0 %v2638
        %2642 = vmatprep.subr.bf16.mxu0 0
        %2643 = vmatpush1.bf16.xpose.msra.mxu0 0
        %2644 = vmatprep.subr.bf16.mxu0 0
        %2645 = vmatpush1.bf16.xpose.msra.mxu0 0
        %2646 = vmatprep.subr.bf16.mxu0 0
        %2647 = vmatpush1.bf16.xpose.msra.mxu0 0
        %2648 = vmatprep.subr.bf16.mxu0 0
        %2649 = vmatpush1.bf16.xpose.msra.mxu0 0
        %2650 = vmatprep.subr.bf16.mxu0 0
        %2651 = vmatpush1.bf16.xpose.msra.mxu0 0
        %2652 = vmatprep.subr.bf16.mxu0 0
        %2653 = vmatpush1.bf16.xpose.msra.mxu0 0
        %2654 = vmatprep.subr.bf16.mxu0 0
        %2655 = vmatpush1.bf16.xpose.msra.mxu0 0
        %2656 = vmatprep.subr.bf16.mxu0 0
        %2657 = vmatpush1.bf16.xpose.msra.mxu0 0
        %2658 = vmatprep.subr.bf16.mxu0 0
        %2659 = vmatpush1.bf16.xpose.msra.mxu0 0
        %2660 = vmatprep.subr.bf16.mxu0 0
        %2661 = vmatpush1.bf16.xpose.msra.mxu0 0
        %2662 = vmatprep.subr.bf16.mxu0 0
        %2663 = vmatpush1.bf16.xpose.msra.mxu0 0
        %2664 = vmatprep.subr.bf16.mxu0 0
        %2665 = vmatpush1.bf16.xpose.msra.mxu0 0
        %2666 = vmatprep.subr.bf16.mxu0 0
        %2667 = vmatpush1.bf16.xpose.msra.mxu0 0
        %2668 = vmatprep.subr.bf16.mxu0 0
        %2669 = vmatpush1.bf16.xpose.msra.mxu0 0
        %2670 = vmatprep.subr.bf16.mxu0 0
        %2671 = vmatpush1.bf16.xpose.msra.mxu0 0
        %2672 = vmatprep.mubr.bf16.mxu0 0
        %2673 = vmatmul.mubr.bf16.gmra.mrb[0].mxu0 %v2635
        %v2674 = vpop.f32.mrb[0].mxu0
        %v2675 = vadd.f32 0.0, %v2674
        %v2676 = vpop.f32.mrb[0].mxu0
        %v2677 = vpop.f32.mrb[0].mxu0
        %v2678 = vpop.f32.mrb[0].mxu0
        %2679 = vdwg.mxu0
        %2680 = vrot.lane.b32.xlu0 %v1300, 104
        %v2681 = vpop.permute.xlu0 %2680
        %2682 = vrot.lane.b32.xlu0 %v1286, 104
        %v2683 = vpop.permute.xlu0 %2682
        %v2685 = vsel %vm1302, %v2681, 0
        %v2688 = vsel %vm1302, %v2683, 0
        %2690 = vmatprep.subr.bf16.mxu0 0
        %2691 = vmatpush1.bf16.xpose.msra.mxu0 %v2688
        %2692 = vmatprep.subr.bf16.mxu0 0
        %2693 = vmatpush1.bf16.xpose.msra.mxu0 0
        %2694 = vmatprep.subr.bf16.mxu0 0
        %2695 = vmatpush1.bf16.xpose.msra.mxu0 0
        %2696 = vmatprep.subr.bf16.mxu0 0
        %2697 = vmatpush1.bf16.xpose.msra.mxu0 0
        %2698 = vmatprep.subr.bf16.mxu0 0
        %2699 = vmatpush1.bf16.xpose.msra.mxu0 0
        %2700 = vmatprep.subr.bf16.mxu0 0
        %2701 = vmatpush1.bf16.xpose.msra.mxu0 0
        %2702 = vmatprep.subr.bf16.mxu0 0
        %2703 = vmatpush1.bf16.xpose.msra.mxu0 0
        %2704 = vmatprep.subr.bf16.mxu0 0
        %2705 = vmatpush1.bf16.xpose.msra.mxu0 0
        %2706 = vmatprep.subr.bf16.mxu0 0
        %2707 = vmatpush1.bf16.xpose.msra.mxu0 0
        %2708 = vmatprep.subr.bf16.mxu0 0
        %2709 = vmatpush1.bf16.xpose.msra.mxu0 0
        %2710 = vmatprep.subr.bf16.mxu0 0
        %2711 = vmatpush1.bf16.xpose.msra.mxu0 0
        %2712 = vmatprep.subr.bf16.mxu0 0
        %2713 = vmatpush1.bf16.xpose.msra.mxu0 0
        %2714 = vmatprep.subr.bf16.mxu0 0
        %2715 = vmatpush1.bf16.xpose.msra.mxu0 0
        %2716 = vmatprep.subr.bf16.mxu0 0
        %2717 = vmatpush1.bf16.xpose.msra.mxu0 0
        %2718 = vmatprep.subr.bf16.mxu0 0
        %2719 = vmatpush1.bf16.xpose.msra.mxu0 0
        %2720 = vmatprep.subr.bf16.mxu0 0
        %2721 = vmatpush1.bf16.xpose.msra.mxu0 0
        %2722 = vmatprep.mubr.bf16.mxu0 0
        %2723 = vmatmul.mubr.bf16.gmra.mrb[0].mxu0 %v2685
        %v2724 = vpop.f32.mrb[0].mxu0
        %v2725 = vadd.f32 0.0, %v2724
        %v2726 = vpop.f32.mrb[0].mxu0
        %v2727 = vpop.f32.mrb[0].mxu0
        %v2728 = vpop.f32.mrb[0].mxu0
        %2729 = vdwg.mxu0
        %2730 = vrot.lane.b32.xlu0 %v1301, 104
        %v2731 = vpop.permute.xlu0 %2730
        %2732 = vrot.lane.b32.xlu0 %v1287, 104
        %v2733 = vpop.permute.xlu0 %2732
        %v2735 = vsel %vm1302, %v2731, 0
        %v2738 = vsel %vm1302, %v2733, 0
        %2740 = vmatprep.subr.bf16.mxu0 0
        %2741 = vmatpush1.bf16.xpose.msra.mxu0 %v2738
        %2742 = vmatprep.subr.bf16.mxu0 0
        %2743 = vmatpush1.bf16.xpose.msra.mxu0 0
        %2744 = vmatprep.subr.bf16.mxu0 0
        %2745 = vmatpush1.bf16.xpose.msra.mxu0 0
        %2746 = vmatprep.subr.bf16.mxu0 0
        %2747 = vmatpush1.bf16.xpose.msra.mxu0 0
        %2748 = vmatprep.subr.bf16.mxu0 0
        %2749 = vmatpush1.bf16.xpose.msra.mxu0 0
        %2750 = vmatprep.subr.bf16.mxu0 0
        %2751 = vmatpush1.bf16.xpose.msra.mxu0 0
        %2752 = vmatprep.subr.bf16.mxu0 0
        %2753 = vmatpush1.bf16.xpose.msra.mxu0 0
        %2754 = vmatprep.subr.bf16.mxu0 0
        %2755 = vmatpush1.bf16.xpose.msra.mxu0 0
        %2756 = vmatprep.subr.bf16.mxu0 0
        %2757 = vmatpush1.bf16.xpose.msra.mxu0 0
        %2758 = vmatprep.subr.bf16.mxu0 0
        %2759 = vmatpush1.bf16.xpose.msra.mxu0 0
        %2760 = vmatprep.subr.bf16.mxu0 0
        %2761 = vmatpush1.bf16.xpose.msra.mxu0 0
        %2762 = vmatprep.subr.bf16.mxu0 0
        %2763 = vmatpush1.bf16.xpose.msra.mxu0 0
        %2764 = vmatprep.subr.bf16.mxu0 0
        %2765 = vmatpush1.bf16.xpose.msra.mxu0 0
        %2766 = vmatprep.subr.bf16.mxu0 0
        %2767 = vmatpush1.bf16.xpose.msra.mxu0 0
        %2768 = vmatprep.subr.bf16.mxu0 0
        %2769 = vmatpush1.bf16.xpose.msra.mxu0 0
        %2770 = vmatprep.subr.bf16.mxu0 0
        %2771 = vmatpush1.bf16.xpose.msra.mxu0 0
        %2772 = vmatprep.mubr.bf16.mxu0 0
        %2773 = vmatmul.mubr.bf16.gmra.mrb[0].mxu0 %v2735
        %v2774 = vpop.f32.mrb[0].mxu0
        %v2775 = vadd.f32 0.0, %v2774
        %v2776 = vpop.f32.mrb[0].mxu0
        %v2777 = vpop.f32.mrb[0].mxu0
        %v2778 = vpop.f32.mrb[0].mxu0
        %2779 = vdwg.mxu0
        %v2780 = vsel %vm1487, %v2625, -inf
        %2781 = vmax.xlane.f32.xlu0 %v2780
        %v2782 = vpop.xlane.xlu0 %2781
        %v2783 = vsel %vm1487, %v2675, -inf
        %2784 = vmax.xlane.f32.xlu0 %v2783
        %v2785 = vpop.xlane.xlu0 %2784
        %v2786 = vsel %vm1487, %v2725, -inf
        %2787 = vmax.xlane.f32.xlu0 %v2786
        %v2788 = vpop.xlane.xlu0 %2787
        %v2789 = vsel %vm1487, %v2775, -inf
        %2790 = vmax.xlane.f32.xlu0 %v2789
        %v2791 = vpop.xlane.xlu0 %2790
        %v2792 = vsub.f32 %v2625, %v2782
        %v2793 = vsub.f32 %v2675, %v2785
        %v2794 = vsub.f32 %v2725, %v2788
        %v2795 = vsub.f32 %v2775, %v2791
        %v2796 = vmul.f32 %v2792, 1.442695
        %v2797 = vpow.pop %v2796
        %v2798 = vmul.f32 %v2793, 1.442695
        %v2799 = vpow.pop %v2798
        %v2800 = vmul.f32 %v2794, 1.442695
        %v2801 = vpow.pop %v2800
        %v2802 = vmul.f32 %v2795, 1.442695
        %v2803 = vpow.pop %v2802
        %v2804 = vsel %vm1487, %v2797, 0.0
        %2805 = vadd.xlane.f32.xlu0 %v2804
        %v2806 = vpop.xlane.xlu0 %2805
        %v2807 = vsel %vm1487, %v2799, 0.0
        %2808 = vadd.xlane.f32.xlu0 %v2807
        %v2809 = vpop.xlane.xlu0 %2808
        %v2810 = vsel %vm1487, %v2801, 0.0
        %2811 = vadd.xlane.f32.xlu0 %v2810
        %v2812 = vpop.xlane.xlu0 %2811
        %v2813 = vsel %vm1487, %v2803, 0.0
        %2814 = vadd.xlane.f32.xlu0 %v2813
        %v2815 = vpop.xlane.xlu0 %2814
        %v2816 = vrcp.pop %v2806
        %v2817 = vrcp.pop %v2809
        %v2818 = vrcp.pop %v2812
        %v2819 = vrcp.pop %v2815
        %v2820 = vmul.f32 %v2797, %v2816
        %v2821 = vmul.f32 %v2799, %v2817
        %v2822 = vmul.f32 %v2801, %v2818
        %v2823 = vmul.f32 %v2803, %v2819
        %v2824 = vpack.c.bf16 %v2820, %v2820
        %v2825 = vpack.c.bf16 %v2821, %v2821
        %v2826 = vpack.c.bf16 %v2822, %v2822
        %v2827 = vpack.c.bf16 %v2823, %v2823
        %2828 = vrot.lane.b32.xlu0 %v1288, 104
        %v2829 = vpop.permute.xlu0 %2828
        %v2832 = vsel %vm1487, %v2824, 0
        %2834 = vmatprep.subr.bf16.mxu0 0
        %2835 = vmatpush1.bf16.msra.mxu0 %v2829
        %2836 = vmatprep.subr.bf16.mxu0 0
        %2837 = vmatpush1.bf16.msra.mxu0 0
        %2838 = vmatprep.subr.bf16.mxu0 0
        %2839 = vmatpush1.bf16.msra.mxu0 0
        %2840 = vmatprep.subr.bf16.mxu0 0
        %2841 = vmatpush1.bf16.msra.mxu0 0
        %2842 = vmatprep.subr.bf16.mxu0 0
        %2843 = vmatpush1.bf16.msra.mxu0 0
        %2844 = vmatprep.subr.bf16.mxu0 0
        %2845 = vmatpush1.bf16.msra.mxu0 0
        %2846 = vmatprep.subr.bf16.mxu0 0
        %2847 = vmatpush1.bf16.msra.mxu0 0
        %2848 = vmatprep.subr.bf16.mxu0 0
        %2849 = vmatpush1.bf16.msra.mxu0 0
        %2850 = vmatprep.subr.bf16.mxu0 0
        %2851 = vmatpush1.bf16.msra.mxu0 0
        %2852 = vmatprep.subr.bf16.mxu0 0
        %2853 = vmatpush1.bf16.msra.mxu0 0
        %2854 = vmatprep.subr.bf16.mxu0 0
        %2855 = vmatpush1.bf16.msra.mxu0 0
        %2856 = vmatprep.subr.bf16.mxu0 0
        %2857 = vmatpush1.bf16.msra.mxu0 0
        %2858 = vmatprep.subr.bf16.mxu0 0
        %2859 = vmatpush1.bf16.msra.mxu0 0
        %2860 = vmatprep.subr.bf16.mxu0 0
        %2861 = vmatpush1.bf16.msra.mxu0 0
        %2862 = vmatprep.subr.bf16.mxu0 0
        %2863 = vmatpush1.bf16.msra.mxu0 0
        %2864 = vmatprep.subr.bf16.mxu0 0
        %2865 = vmatpush1.bf16.msra.mxu0 0
        %2866 = vmatprep.mubr.bf16.mxu0 0
        %2867 = vmatmul.mubr.bf16.gmra.mrb[0].mxu0 %v2832
        %v2868 = vpop.f32.mrb[0].mxu0
        %v2869 = vadd.f32 0.0, %v2868
        %v2870 = vpop.f32.mrb[0].mxu0
        %v2871 = vpop.f32.mrb[0].mxu0
        %v2872 = vpop.f32.mrb[0].mxu0
        %2873 = vdwg.mxu0
        %2874 = vrot.lane.b32.xlu0 %v1289, 104
        %v2875 = vpop.permute.xlu0 %2874
        %v2878 = vsel %vm1487, %v2825, 0
        %2880 = vmatprep.subr.bf16.mxu0 0
        %2881 = vmatpush1.bf16.msra.mxu0 %v2875
        %2882 = vmatprep.subr.bf16.mxu0 0
        %2883 = vmatpush1.bf16.msra.mxu0 0
        %2884 = vmatprep.subr.bf16.mxu0 0
        %2885 = vmatpush1.bf16.msra.mxu0 0
        %2886 = vmatprep.subr.bf16.mxu0 0
        %2887 = vmatpush1.bf16.msra.mxu0 0
        %2888 = vmatprep.subr.bf16.mxu0 0
        %2889 = vmatpush1.bf16.msra.mxu0 0
        %2890 = vmatprep.subr.bf16.mxu0 0
        %2891 = vmatpush1.bf16.msra.mxu0 0
        %2892 = vmatprep.subr.bf16.mxu0 0
        %2893 = vmatpush1.bf16.msra.mxu0 0
        %2894 = vmatprep.subr.bf16.mxu0 0
        %2895 = vmatpush1.bf16.msra.mxu0 0
        %2896 = vmatprep.subr.bf16.mxu0 0
        %2897 = vmatpush1.bf16.msra.mxu0 0
        %2898 = vmatprep.subr.bf16.mxu0 0
        %2899 = vmatpush1.bf16.msra.mxu0 0
        %2900 = vmatprep.subr.bf16.mxu0 0
        %2901 = vmatpush1.bf16.msra.mxu0 0
        %2902 = vmatprep.subr.bf16.mxu0 0
        %2903 = vmatpush1.bf16.msra.mxu0 0
        %2904 = vmatprep.subr.bf16.mxu0 0
        %2905 = vmatpush1.bf16.msra.mxu0 0
        %2906 = vmatprep.subr.bf16.mxu0 0
        %2907 = vmatpush1.bf16.msra.mxu0 0
        %2908 = vmatprep.subr.bf16.mxu0 0
        %2909 = vmatpush1.bf16.msra.mxu0 0
        %2910 = vmatprep.subr.bf16.mxu0 0
        %2911 = vmatpush1.bf16.msra.mxu0 0
        %2912 = vmatprep.mubr.bf16.mxu0 0
        %2913 = vmatmul.mubr.bf16.gmra.mrb[0].mxu0 %v2878
        %v2914 = vpop.f32.mrb[0].mxu0
        %v2915 = vadd.f32 0.0, %v2914
        %v2916 = vpop.f32.mrb[0].mxu0
        %v2917 = vpop.f32.mrb[0].mxu0
        %v2918 = vpop.f32.mrb[0].mxu0
        %2919 = vdwg.mxu0
        %2920 = vrot.lane.b32.xlu0 %v1290, 104
        %v2921 = vpop.permute.xlu0 %2920
        %v2924 = vsel %vm1487, %v2826, 0
        %2926 = vmatprep.subr.bf16.mxu0 0
        %2927 = vmatpush1.bf16.msra.mxu0 %v2921
        %2928 = vmatprep.subr.bf16.mxu0 0
        %2929 = vmatpush1.bf16.msra.mxu0 0
        %2930 = vmatprep.subr.bf16.mxu0 0
        %2931 = vmatpush1.bf16.msra.mxu0 0
        %2932 = vmatprep.subr.bf16.mxu0 0
        %2933 = vmatpush1.bf16.msra.mxu0 0
        %2934 = vmatprep.subr.bf16.mxu0 0
        %2935 = vmatpush1.bf16.msra.mxu0 0
        %2936 = vmatprep.subr.bf16.mxu0 0
        %2937 = vmatpush1.bf16.msra.mxu0 0
        %2938 = vmatprep.subr.bf16.mxu0 0
        %2939 = vmatpush1.bf16.msra.mxu0 0
        %2940 = vmatprep.subr.bf16.mxu0 0
        %2941 = vmatpush1.bf16.msra.mxu0 0
        %2942 = vmatprep.subr.bf16.mxu0 0
        %2943 = vmatpush1.bf16.msra.mxu0 0
        %2944 = vmatprep.subr.bf16.mxu0 0
        %2945 = vmatpush1.bf16.msra.mxu0 0
        %2946 = vmatprep.subr.bf16.mxu0 0
        %2947 = vmatpush1.bf16.msra.mxu0 0
        %2948 = vmatprep.subr.bf16.mxu0 0
        %2949 = vmatpush1.bf16.msra.mxu0 0
        %2950 = vmatprep.subr.bf16.mxu0 0
        %2951 = vmatpush1.bf16.msra.mxu0 0
        %2952 = vmatprep.subr.bf16.mxu0 0
        %2953 = vmatpush1.bf16.msra.mxu0 0
        %2954 = vmatprep.subr.bf16.mxu0 0
        %2955 = vmatpush1.bf16.msra.mxu0 0
        %2956 = vmatprep.subr.bf16.mxu0 0
        %2957 = vmatpush1.bf16.msra.mxu0 0
        %2958 = vmatprep.mubr.bf16.mxu0 0
        %2959 = vmatmul.mubr.bf16.gmra.mrb[0].mxu0 %v2924
        %v2960 = vpop.f32.mrb[0].mxu0
        %v2961 = vadd.f32 0.0, %v2960
        %v2962 = vpop.f32.mrb[0].mxu0
        %v2963 = vpop.f32.mrb[0].mxu0
        %v2964 = vpop.f32.mrb[0].mxu0
        %2965 = vdwg.mxu0
        %2966 = vrot.lane.b32.xlu0 %v1291, 104
        %v2967 = vpop.permute.xlu0 %2966
        %v2970 = vsel %vm1487, %v2827, 0
        %2972 = vmatprep.subr.bf16.mxu0 0
        %2973 = vmatpush1.bf16.msra.mxu0 %v2967
        %2974 = vmatprep.subr.bf16.mxu0 0
        %2975 = vmatpush1.bf16.msra.mxu0 0
        %2976 = vmatprep.subr.bf16.mxu0 0
        %2977 = vmatpush1.bf16.msra.mxu0 0
        %2978 = vmatprep.subr.bf16.mxu0 0
        %2979 = vmatpush1.bf16.msra.mxu0 0
        %2980 = vmatprep.subr.bf16.mxu0 0
        %2981 = vmatpush1.bf16.msra.mxu0 0
        %2982 = vmatprep.subr.bf16.mxu0 0
        %2983 = vmatpush1.bf16.msra.mxu0 0
        %2984 = vmatprep.subr.bf16.mxu0 0
        %2985 = vmatpush1.bf16.msra.mxu0 0
        %2986 = vmatprep.subr.bf16.mxu0 0
        %2987 = vmatpush1.bf16.msra.mxu0 0
        %2988 = vmatprep.subr.bf16.mxu0 0
        %2989 = vmatpush1.bf16.msra.mxu0 0
        %2990 = vmatprep.subr.bf16.mxu0 0
        %2991 = vmatpush1.bf16.msra.mxu0 0
        %2992 = vmatprep.subr.bf16.mxu0 0
        %2993 = vmatpush1.bf16.msra.mxu0 0
        %2994 = vmatprep.subr.bf16.mxu0 0
        %2995 = vmatpush1.bf16.msra.mxu0 0
        %2996 = vmatprep.subr.bf16.mxu0 0
        %2997 = vmatpush1.bf16.msra.mxu0 0
        %2998 = vmatprep.subr.bf16.mxu0 0
        %2999 = vmatpush1.bf16.msra.mxu0 0
        %3000 = vmatprep.subr.bf16.mxu0 0
        %3001 = vmatpush1.bf16.msra.mxu0 0
        %3002 = vmatprep.subr.bf16.mxu0 0
        %3003 = vmatpush1.bf16.msra.mxu0 0
        %3004 = vmatprep.mubr.bf16.mxu0 0
        %3005 = vmatmul.mubr.bf16.gmra.mrb[0].mxu0 %v2970
        %v3006 = vpop.f32.mrb[0].mxu0
        %v3007 = vadd.f32 0.0, %v3006
        %v3008 = vpop.f32.mrb[0].mxu0
        %v3009 = vpop.f32.mrb[0].mxu0
        %v3010 = vpop.f32.mrb[0].mxu0
        %3011 = vdwg.mxu0
        %3016 = vrot.lane.b32.xlu0 %v2002, 8
        %v3017 = vpop.permute.xlu0 %3016
        %3018 = vrot.lane.b32.xlu0 %v2049, 8
        %v3019 = vpop.permute.xlu0 %3018
        %3020 = vrot.lane.b32.xlu0 %v2096, 8
        %v3021 = vpop.permute.xlu0 %3020
        %3022 = vrot.lane.b32.xlu0 %v2143, 8
        %v3023 = vpop.permute.xlu0 %3022
        %3032 = vrot.lane.b32.xlu0 %v2437, 16
        %v3033 = vpop.permute.xlu0 %3032
        %3034 = vrot.lane.b32.xlu0 %v2483, 16
        %v3035 = vpop.permute.xlu0 %3034
        %3036 = vrot.lane.b32.xlu0 %v2529, 16
        %v3037 = vpop.permute.xlu0 %3036
        %3038 = vrot.lane.b32.xlu0 %v2575, 16
        %v3039 = vpop.permute.xlu0 %3038
        %3048 = vrot.lane.b32.xlu0 %v2869, 24
        %v3049 = vpop.permute.xlu0 %3048
        %3050 = vrot.lane.b32.xlu0 %v2915, 24
        %v3051 = vpop.permute.xlu0 %3050
        %3052 = vrot.lane.b32.xlu0 %v2961, 24
        %v3053 = vpop.permute.xlu0 %3052
        %3054 = vrot.lane.b32.xlu0 %v3007, 24
        %v3055 = vpop.permute.xlu0 %3054
        %v3060 = vsel %vm1302, %v1574, %v3017
        %v3061 = vsel %vm1302, %v1617, %v3019
        %v3062 = vsel %vm1302, %v1660, %v3021
        %v3063 = vsel %vm1302, %v1703, %v3023
        %v3064 = vsel %vm1487, %v3060, %v3033
        %v3065 = vsel %vm1487, %v3061, %v3035
        %v3066 = vsel %vm1487, %v3062, %v3037
        %v3067 = vsel %vm1487, %v3063, %v3039
        %vm3068 = vcmask 195584
        %v3069 = vsel %vm3068, %v3064, %v3049
        %v3070 = vsel %vm3068, %v3065, %v3051
        %v3071 = vsel %vm3068, %v3066, %v3053
        %v3072 = vsel %vm3068, %v3067, %v3055
        %v3073 = vpack.c.bf16 %v3070, %v3069
        %v3074 = vpack.c.bf16 %v3072, %v3071
        %s3075 = smul.addr %s1002, 4
        %s3076 = scalar_lea.vmem %s14, %s3075
        %v3077 = vld [vmem:[%s3076] sm:$0xf]
        %v3078 = vld [vmem:[%s3076 + $0x4] sm:$0xf]
        %v3079 = vld [vmem:[%s3076 + $0x8] sm:$0xf]
        %v3080 = vld [vmem:[%s3076 + $0xc] sm:$0xf]
        %s3081 = scalar_lea.vmem [#allocation19], %s44
        %v3082 = vld [vmem:[%s3081] sm:$0x1]
        %v3084 = vlaneseq
        %v3085 = vshrl.u32 %v3084, 7
        %v3086 = vsub.s32 0, %v3085
        %v3087 = vrot.slane %v3082, %v3086
        %v3093 = vunpack.c.l.b16 %v3077
        %v3094 = vunpack.c.l.b16 %v3078
        %v3095 = vunpack.c.l.b16 %v3079
        %v3096 = vunpack.c.l.b16 %v3080
        %v3097 = vpack.c.b16 %v3094, %v3093
        %v3098 = vpack.c.b16 %v3096, %v3095
        %v3102 = vsel %vm850, %v3073, 0
        %v3105 = vsel %vm850, %v3074, 0
        %3107 = vmatprep.subr.bf16.mxu0 0
        %3108 = vmatpush1.bf16.msra.mxu0 %v3097
        %3109 = vmatprep.subr.bf16.mxu0 0
        %3110 = vmatpush1.bf16.msra.mxu0 %v3098
        %3111 = vmatprep.subr.bf16.mxu0 0
        %3112 = vmatpush1.bf16.msra.mxu0 0
        %3113 = vmatprep.subr.bf16.mxu0 0
        %3114 = vmatpush1.bf16.msra.mxu0 0
        %3115 = vmatprep.subr.bf16.mxu0 0
        %3116 = vmatpush1.bf16.msra.mxu0 0
        %3117 = vmatprep.subr.bf16.mxu0 0
        %3118 = vmatpush1.bf16.msra.mxu0 0
        %3119 = vmatprep.subr.bf16.mxu0 0
        %3120 = vmatpush1.bf16.msra.mxu0 0
        %3121 = vmatprep.subr.bf16.mxu0 0
        %3122 = vmatpush1.bf16.msra.mxu0 0
        %3123 = vmatprep.subr.bf16.mxu0 0
        %3124 = vmatpush1.bf16.msra.mxu0 0
        %3125 = vmatprep.subr.bf16.mxu0 0
        %3126 = vmatpush1.bf16.msra.mxu0 0
        %3127 = vmatprep.subr.bf16.mxu0 0
        %3128 = vmatpush1.bf16.msra.mxu0 0
        %3129 = vmatprep.subr.bf16.mxu0 0
        %3130 = vmatpush1.bf16.msra.mxu0 0
        %3131 = vmatprep.subr.bf16.mxu0 0
        %3132 = vmatpush1.bf16.msra.mxu0 0
        %3133 = vmatprep.subr.bf16.mxu0 0
        %3134 = vmatpush1.bf16.msra.mxu0 0
        %3135 = vmatprep.subr.bf16.mxu0 0
        %3136 = vmatpush1.bf16.msra.mxu0 0
        %3137 = vmatprep.subr.bf16.mxu0 0
        %3138 = vmatpush1.bf16.msra.mxu0 0
        %3139 = vmatprep.mubr.bf16.mxu0 0
        %3140 = vmatmul.mubr.bf16.gmra.mrb[0].mxu0 %v3102
        %v3141 = vpop.f32.mrb[0].mxu0
        %v3142 = vadd.f32 %v3087, %v3141
        %v3143 = vpop.f32.mrb[0].mxu0
        %v3144 = vpop.f32.mrb[0].mxu0
        %v3145 = vadd.f32 %v3087, %v3144
        %v3146 = vpop.f32.mrb[0].mxu0
        %3147 = vmatprep.mubr.bf16.mxu0 0
        %3148 = vmatmul.mubr.bf16.gmra.mrb[0].mxu0 %v3105
        %v3149 = vpop.f32.mrb[0].mxu0
        %v3150 = vadd.f32 %v3087, %v3149
        %v3151 = vpop.f32.mrb[0].mxu0
        %v3152 = vpop.f32.mrb[0].mxu0
        %v3153 = vadd.f32 %v3087, %v3152
        %v3154 = vpop.f32.mrb[0].mxu0
        %3155 = vdwg.mxu0
        %v3156 = vadd.f32 %v834, %v3142
        %v3157 = vadd.f32 %v835, %v3145
        %v3158 = vadd.f32 %v836, %v3150
        %v3159 = vadd.f32 %v837, %v3153
        %s3160 = scalar_lea.vmem [#allocation11], %s44
        %v3161 = vld [vmem:[%s3160] sm:$0x1]
        %s3162 = scalar_lea.vmem [#allocation13], %s44
        %v3163 = vld [vmem:[%s3162] sm:$0x1]
        %v3164 = vsel %vm850, %v3156, 0.0
        %3165 = vadd.xlane.f32.xlu0 %v3164
        %v3166 = vpop.xlane.xlu0 %3165
        %v3167 = vsel %vm850, %v3157, 0.0
        %3168 = vadd.xlane.f32.xlu0 %v3167
        %v3169 = vpop.xlane.xlu0 %3168
        %v3170 = vsel %vm850, %v3158, 0.0
        %3171 = vadd.xlane.f32.xlu0 %v3170
        %v3172 = vpop.xlane.xlu0 %3171
        %v3173 = vsel %vm850, %v3159, 0.0
        %3174 = vadd.xlane.f32.xlu0 %v3173
        %v3175 = vpop.xlane.xlu0 %3174
        %v3176 = vmul.f32 %v3166, %v863
        %v3177 = vmul.f32 %v3169, %v863
        %v3178 = vmul.f32 %v3172, %v863
        %v3179 = vmul.f32 %v3175, %v863
        %v3180 = vsub.f32 %v3156, %v3176
        %v3181 = vsub.f32 %v3157, %v3177
        %v3182 = vsub.f32 %v3158, %v3178
        %v3183 = vsub.f32 %v3159, %v3179
        %v3184 = vmul.f32 %v3180, %v3180
        %v3185 = vmul.f32 %v3181, %v3181
        %v3186 = vmul.f32 %v3182, %v3182
        %v3187 = vmul.f32 %v3183, %v3183
        %v3188 = vsel %vm850, %v3184, 0.0
        %3189 = vadd.xlane.f32.xlu0 %v3188
        %v3190 = vpop.xlane.xlu0 %3189
        %v3191 = vsel %vm850, %v3185, 0.0
        %3192 = vadd.xlane.f32.xlu0 %v3191
        %v3193 = vpop.xlane.xlu0 %3192
        %v3194 = vsel %vm850, %v3186, 0.0
        %3195 = vadd.xlane.f32.xlu0 %v3194
        %v3196 = vpop.xlane.xlu0 %3195
        %v3197 = vsel %vm850, %v3187, 0.0
        %3198 = vadd.xlane.f32.xlu0 %v3197
        %v3199 = vpop.xlane.xlu0 %3198
        %v3200 = vmul.f32 %v3190, %v863
        %v3201 = vmul.f32 %v3193, %v863
        %v3202 = vmul.f32 %v3196, %v863
        %v3203 = vmul.f32 %v3199, %v863
        %v3204 = vadd.f32 %v3200, 1e-05
        %v3205 = vadd.f32 %v3201, 1e-05
        %v3206 = vadd.f32 %v3202, 1e-05
        %v3207 = vadd.f32 %v3203, 1e-05
        %v3208 = vrsqrt.pop %v3204
        %v3209 = vrsqrt.pop %v3205
        %v3210 = vrsqrt.pop %v3206
        %v3211 = vrsqrt.pop %v3207
        %v3212 = vmul.f32 %v3180, %v3208
        %v3213 = vmul.f32 %v3181, %v3209
        %v3214 = vmul.f32 %v3182, %v3210
        %v3215 = vmul.f32 %v3183, %v3211
        %v3217 = vlaneseq
        %v3218 = vshrl.u32 %v3217, 7
        %v3219 = vsub.s32 0, %v3218
        %v3220 = vrot.slane %v3161, %v3219
        %v3222 = vmul.f32 %v3212, %v3220
        %v3223 = vmul.f32 %v3213, %v3220
        %v3224 = vmul.f32 %v3214, %v3220
        %v3225 = vmul.f32 %v3215, %v3220
        %v3227 = vlaneseq
        %v3228 = vshrl.u32 %v3227, 7
        %v3229 = vsub.s32 0, %v3228
        %v3230 = vrot.slane %v3163, %v3229
        %v3232 = vadd.f32 %v3222, %v3230
        %v3233 = vadd.f32 %v3223, %v3230
        %v3234 = vadd.f32 %v3224, %v3230
        %v3235 = vadd.f32 %v3225, %v3230
        %v3236 = vpack.c.bf16 %v3233, %v3232
        %v3237 = vpack.c.bf16 %v3235, %v3234
        %s3238 = smul.addr %s1002, 4
        %s3239 = scalar_lea.vmem %s16, %s3238
        %v3240 = vld [vmem:[%s3239] sm:$0xf]
        %v3241 = vld [vmem:[%s3239 + $0x4] sm:$0xf]
        %v3242 = vld [vmem:[%s3239 + $0x8] sm:$0xf]
        %v3243 = vld [vmem:[%s3239 + $0xc] sm:$0xf]
        %s3244 = scalar_lea.vmem [#allocation20], %s44
        %v3245 = vld [vmem:[%s3244] sm:$0x1]
        %v3247 = vlaneseq
        %v3248 = vshrl.u32 %v3247, 7
        %v3249 = vsub.s32 0, %v3248
        %v3250 = vrot.slane %v3245, %v3249
        %v3256 = vunpack.c.l.b16 %v3240
        %v3257 = vunpack.c.l.b16 %v3241
        %v3258 = vunpack.c.l.b16 %v3242
        %v3259 = vunpack.c.l.b16 %v3243
        %v3260 = vpack.c.b16 %v3257, %v3256
        %v3261 = vpack.c.b16 %v3259, %v3258
        %v3265 = vsel %vm850, %v3236, 0
        %v3268 = vsel %vm850, %v3237, 0
        %3270 = vmatprep.subr.bf16.mxu0 0
        %3271 = vmatpush1.bf16.msra.mxu0 %v3260
        %3272 = vmatprep.subr.bf16.mxu0 0
        %3273 = vmatpush1.bf16.msra.mxu0 %v3261
        %3274 = vmatprep.subr.bf16.mxu0 0
        %3275 = vmatpush1.bf16.msra.mxu0 0
        %3276 = vmatprep.subr.bf16.mxu0 0
        %3277 = vmatpush1.bf16.msra.mxu0 0
        %3278 = vmatprep.subr.bf16.mxu0 0
        %3279 = vmatpush1.bf16.msra.mxu0 0
        %3280 = vmatprep.subr.bf16.mxu0 0
        %3281 = vmatpush1.bf16.msra.mxu0 0
        %3282 = vmatprep.subr.bf16.mxu0 0
        %3283 = vmatpush1.bf16.msra.mxu0 0
        %3284 = vmatprep.subr.bf16.mxu0 0
        %3285 = vmatpush1.bf16.msra.mxu0 0
        %3286 = vmatprep.subr.bf16.mxu0 0
        %3287 = vmatpush1.bf16.msra.mxu0 0
        %3288 = vmatprep.subr.bf16.mxu0 0
        %3289 = vmatpush1.bf16.msra.mxu0 0
        %3290 = vmatprep.subr.bf16.mxu0 0
        %3291 = vmatpush1.bf16.msra.mxu0 0
        %3292 = vmatprep.subr.bf16.mxu0 0
        %3293 = vmatpush1.bf16.msra.mxu0 0
        %3294 = vmatprep.subr.bf16.mxu0 0
        %3295 = vmatpush1.bf16.msra.mxu0 0
        %3296 = vmatprep.subr.bf16.mxu0 0
        %3297 = vmatpush1.bf16.msra.mxu0 0
        %3298 = vmatprep.subr.bf16.mxu0 0
        %3299 = vmatpush1.bf16.msra.mxu0 0
        %3300 = vmatprep.subr.bf16.mxu0 0
        %3301 = vmatpush1.bf16.msra.mxu0 0
        %3302 = vmatprep.mubr.bf16.mxu0 0
        %3303 = vmatmul.mubr.bf16.gmra.mrb[0].mxu0 %v3265
        %v3304 = vpop.f32.mrb[0].mxu0
        %v3305 = vadd.f32 %v3250, %v3304
        %v3306 = vpop.f32.mrb[0].mxu0
        %v3307 = vpop.f32.mrb[0].mxu0
        %v3308 = vadd.f32 %v3250, %v3307
        %v3309 = vpop.f32.mrb[0].mxu0
        %3310 = vmatprep.mubr.bf16.mxu0 0
        %3311 = vmatmul.mubr.bf16.gmra.mrb[0].mxu0 %v3268
        %v3312 = vpop.f32.mrb[0].mxu0
        %v3313 = vadd.f32 %v3250, %v3312
        %v3314 = vpop.f32.mrb[0].mxu0
        %v3315 = vpop.f32.mrb[0].mxu0
        %v3316 = vadd.f32 %v3250, %v3315
        %v3317 = vpop.f32.mrb[0].mxu0
        %3318 = vdwg.mxu0
        %v3319 = vmax.f32 %v3305, 0.0
        %v3320 = vmax.f32 %v3308, 0.0
        %v3321 = vmax.f32 %v3313, 0.0
        %v3322 = vmax.f32 %v3316, 0.0
        %v3323 = vmul.f32 %v3319, %v3319
        %v3324 = vmul.f32 %v3320, %v3320
        %v3325 = vmul.f32 %v3321, %v3321
        %v3326 = vmul.f32 %v3322, %v3322
        %v3327 = vpack.c.bf16 %v3324, %v3323
        %v3328 = vpack.c.bf16 %v3326, %v3325
        %s3329 = smul.u32 %s44, 16
        %s3330 = smul.addr %s3329, 4
        %s3331 = scalar_lea.vmem %s18, %s3330
        %v3332 = vld [vmem:[%s3331] sm:$0xf]
        %v3333 = vld [vmem:[%s3331 + $0x4] sm:$0xf]
        %v3334 = vld [vmem:[%s3331 + $0x8] sm:$0xf]
        %v3335 = vld [vmem:[%s3331 + $0xc] sm:$0xf]
        %v3336 = vld [vmem:[%s3331 + $0x10] sm:$0xf]
        %v3337 = vld [vmem:[%s3331 + $0x14] sm:$0xf]
        %v3338 = vld [vmem:[%s3331 + $0x18] sm:$0xf]
        %v3339 = vld [vmem:[%s3331 + $0x1c] sm:$0xf]
        %v3340 = vld [vmem:[%s3331 + $0x20] sm:$0xf]
        %v3341 = vld [vmem:[%s3331 + $0x24] sm:$0xf]
        %v3342 = vld [vmem:[%s3331 + $0x28] sm:$0xf]
        %v3343 = vld [vmem:[%s3331 + $0x2c] sm:$0xf]
        %v3344 = vld [vmem:[%s3331 + $0x30] sm:$0xf]
        %v3345 = vld [vmem:[%s3331 + $0x34] sm:$0xf]
        %v3346 = vld [vmem:[%s3331 + $0x38] sm:$0xf]
        %v3347 = vld [vmem:[%s3331 + $0x3c] sm:$0xf]
        %s3348 = scalar_lea.vmem %s19, %s44
        %v3349 = vld [vmem:[%s3348] sm:$0x1]
        %v3351 = vlaneseq
        %v3352 = vshrl.u32 %v3351, 7
        %v3353 = vsub.s32 0, %v3352
        %v3354 = vrot.slane %v3349, %v3353
        %v3372 = vunpack.c.l.b16 %v3332
        %v3373 = vunpack.c.l.b16 %v3333
        %v3374 = vunpack.c.l.b16 %v3334
        %v3375 = vunpack.c.l.b16 %v3335
        %v3376 = vunpack.c.l.b16 %v3336
        %v3377 = vunpack.c.l.b16 %v3337
        %v3378 = vunpack.c.l.b16 %v3338
        %v3379 = vunpack.c.l.b16 %v3339
        %v3380 = vunpack.c.l.b16 %v3340
        %v3381 = vunpack.c.l.b16 %v3341
        %v3382 = vunpack.c.l.b16 %v3342
        %v3383 = vunpack.c.l.b16 %v3343
        %v3384 = vunpack.c.l.b16 %v3344
        %v3385 = vunpack.c.l.b16 %v3345
        %v3386 = vunpack.c.l.b16 %v3346
        %v3387 = vunpack.c.l.b16 %v3347
        %v3388 = vpack.c.b16 %v3373, %v3372
        %v3389 = vpack.c.b16 %v3375, %v3374
        %v3390 = vpack.c.b16 %v3377, %v3376
        %v3391 = vpack.c.b16 %v3379, %v3378
        %v3392 = vpack.c.b16 %v3381, %v3380
        %v3393 = vpack.c.b16 %v3383, %v3382
        %v3394 = vpack.c.b16 %v3385, %v3384
        %v3395 = vpack.c.b16 %v3387, %v3386
        %3404 = vmatprep.subr.bf16.mxu0 0
        %3405 = vmatpush1.bf16.msra.mxu0 %v3388
        %3406 = vmatprep.subr.bf16.mxu0 0
        %3407 = vmatpush1.bf16.msra.mxu0 %v3389
        %3408 = vmatprep.subr.bf16.mxu0 0
        %3409 = vmatpush1.bf16.msra.mxu0 %v3390
        %3410 = vmatprep.subr.bf16.mxu0 0
        %3411 = vmatpush1.bf16.msra.mxu0 %v3391
        %3412 = vmatprep.subr.bf16.mxu0 0
        %3413 = vmatpush1.bf16.msra.mxu0 %v3392
        %3414 = vmatprep.subr.bf16.mxu0 0
        %3415 = vmatpush1.bf16.msra.mxu0 %v3393
        %3416 = vmatprep.subr.bf16.mxu0 0
        %3417 = vmatpush1.bf16.msra.mxu0 %v3394
        %3418 = vmatprep.subr.bf16.mxu0 0
        %3419 = vmatpush1.bf16.msra.mxu0 %v3395
        %3420 = vmatprep.subr.bf16.mxu0 0
        %3421 = vmatpush1.bf16.msra.mxu0 0
        %3422 = vmatprep.subr.bf16.mxu0 0
        %3423 = vmatpush1.bf16.msra.mxu0 0
        %3424 = vmatprep.subr.bf16.mxu0 0
        %3425 = vmatpush1.bf16.msra.mxu0 0
        %3426 = vmatprep.subr.bf16.mxu0 0
        %3427 = vmatpush1.bf16.msra.mxu0 0
        %3428 = vmatprep.subr.bf16.mxu0 0
        %3429 = vmatpush1.bf16.msra.mxu0 0
        %3430 = vmatprep.subr.bf16.mxu0 0
        %3431 = vmatpush1.bf16.msra.mxu0 0
        %3432 = vmatprep.subr.bf16.mxu0 0
        %3433 = vmatpush1.bf16.msra.mxu0 0
        %3434 = vmatprep.subr.bf16.mxu0 0
        %3435 = vmatpush1.bf16.msra.mxu0 0
        %3436 = vmatprep.mubr.bf16.mxu0 0
        %3437 = vmatmul.mubr.bf16.gmra.mrb[0].mxu0 %v3327
        %v3438 = vpop.f32.mrb[0].mxu0
        %v3439 = vadd.f32 %v3354, %v3438
        %v3440 = vpop.f32.mrb[0].mxu0
        %v3441 = vpop.f32.mrb[0].mxu0
        %v3442 = vadd.f32 %v3354, %v3441
        %v3443 = vpop.f32.mrb[0].mxu0
        %3444 = vmatprep.mubr.bf16.mxu0 0
        %3445 = vmatmul.mubr.bf16.gmra.mrb[0].mxu0 %v3328
        %v3446 = vpop.f32.mrb[0].mxu0
        %v3447 = vadd.f32 %v3354, %v3446
        %v3448 = vpop.f32.mrb[0].mxu0
        %v3449 = vpop.f32.mrb[0].mxu0
        %v3450 = vadd.f32 %v3354, %v3449
        %v3451 = vpop.f32.mrb[0].mxu0
        %3452 = vdwg.mxu0
        %v3453 = vadd.f32 %v3156, %v3439
        %v3454 = vadd.f32 %v3157, %v3442
        %v3455 = vadd.f32 %v3158, %v3447
        %v3456 = vadd.f32 %v3159, %v3450
        %3457 = vst.msk [vmem:[#allocation22] sm:$0xff] %vm850, %v3453
        %3458 = vst.msk [vmem:[#allocation22 + $0x8] sm:$0xff] %vm850, %v3454
        %3459 = vst.msk [vmem:[#allocation22 + $0x10] sm:$0xff] %vm850, %v3455
        %3460 = vst.msk [vmem:[#allocation22 + $0x18] sm:$0xff] %vm850, %v3456
        // Predicated region
        $region153: #{tpu_custom_call.1} parent=99 // pred_check
          %p3461 = pneg %p499
        $region154: #{tpu_custom_call.1} parent=99 // pred_check_branch
          %3463 = sbr.rel (%p3461) target = $region156
        $region155: #{tpu_custom_call.1} parent=99 // pred_region
          %s3464 = smul.u32 4, %s43
          %s3466 = ssub.s32 512, 512
          %3467 = vsyncadd [#allocation4], %s3466
          %s3468 = smul.addr %s3464, 128
          %s3469 = scalar_lea.hbm %s20, %s3468
          %s3470 = sshll.u32 [#allocation22], 4
          %s3471 = int_to_ptr.vmem [resolvable:$true] %s3470
          %3476 = dma.vmem_to_hbm [thread:$0]  %s3471, 512, %s3469, [#allocation4], 128, 128, 8
        $region156: #{tpu_custom_call.1} parent=99 // pred_fallthru
          _
        // Predicated region
        $region157: #{tpu_custom_call.1} parent=99 // pred_check
          %p3477 = pneg %p499
        $region158: #{tpu_custom_call.1} parent=99 // pred_check_branch
          %3479 = sbr.rel (%p3477) target = $region160
        $region159: #{tpu_custom_call.1} parent=99 // pred_region
          %3480 = dma.done [#allocation4], 512
        $region160: #{tpu_custom_call.1} parent=99 // pred_fallthru
          _
      $region100: #{tpu_custom_call.1} parent=5 // pred_fallthru
        _
      %p3481 = scmp.le.s32.totalorder 2, %s34
      // Predicated region
      $region161: #{tpu_custom_call.1} parent=5 // pred_check
        %p3482 = pneg %p3481
      $region162: #{tpu_custom_call.1} parent=5 // pred_check_branch
        %3484 = sbr.rel (%p3482) target = $region164
      $region163: #{tpu_custom_call.1} parent=5 // pred_region
        %s3485 = ssub.s32 %s34, 2
      $region164: #{tpu_custom_call.1} parent=5 // pred_fallthru
        _
    $region6: #{tpu_custom_call.1} parent=1 // loop_footer
      %s38 = sadd.s32 1, %s34
    $region7: #{tpu_custom_call.1} parent=1 // loop_footer_branch
      %33 = sbr.rel target = $region3
    $region8: #{tpu_custom_call.1} parent=1 // loop_exit
      _
    %3486 = vsyncpa [#allocation3], 1
    %s3487 = scalar_lea.sflag [#allocation3], 1
    %3488 = vsyncpa %s3487, 1
    %3489 = vsyncpa [#allocation6], 1
    %3490 = vsyncpa [#allocation9], 1
    %3491 = vsyncpa [#allocation12], 1
    %3492 = vsyncpa [#allocation15], 1
    %3493 = vsyncpa [#allocation18], 1
    %3494 = vsyncpa [#allocation21], 1
    %3495 = vsyncpa [#allocation4], 1
    %s3496 = scalar_lea.sflag [#allocation4], 1
    %3497 = vsyncpa %s3496, 1

</llo_original>
